<compile_context>
chip_gen: v7x
topology: tpu7x:2x2x1
jax: 0.10.0
libtpu: 0.0.40
codegen_flags: <defaults>
</compile_context>

<pallas_src>
import functools

import jax
import jax.numpy as jnp
from jax.experimental import pallas as pl
from jax.experimental.pallas import tpu as pltpu


def _gelu_tanh(x):
    # TODO(synk): PyTorch nn.GELU() defaults to the exact erf formulation; the
    # tanh approximation is used here for guaranteed Mosaic lowering (EUP tanh).
    c = 0.7978845608028654  # sqrt(2/pi)
    return 0.5 * x * (1.0 + jnp.tanh(c * (x + 0.044715 * (x * x * x))))


def _linear_cs(a, w_ref, b_ref, *, mxu_bf16):
    """out(Nout, S) = W(Nout, K) @ a(K, S) + b(Nout, 1).

    Channels on sublanes, flattened spatial on lanes. Bias folded into the
    accumulator init. Weight loaded once (hoisted out of the K loop).
    """
    n_out, k_dim = w_ref.shape
    s_dim = a.shape[-1]
    w = w_ref[...].astype(jnp.float32)                      # ONE load
    acc = jnp.broadcast_to(b_ref[...].astype(jnp.float32), (n_out, s_dim))
    if k_dim <= 64:
        # Tiny contraction: the MXU would be <5% utilized and pays result-FIFO
        # pop latency -> unrolled VPU outer-product FMAs instead.
        for k in range(k_dim):
            acc = acc + w[:, k:k + 1] * a[k:k + 1, :]
    else:
        # Large contraction: one 2-D (Nout,K)x(K,S) MXU matmul (operands are
        # already 2-D in this layout). Optional bf16 operands for v6e/v7x MXU,
        # f32 accumulation via preferred_element_type.
        lhs, rhs = w, a
        if mxu_bf16:
            lhs = lhs.astype(jnp.bfloat16)
            rhs = rhs.astype(jnp.bfloat16)
        acc = acc + jax.lax.dot_general(
            lhs, rhs, dimension_numbers=(((1,), (0,)), ((), ())),
            preferred_element_type=jnp.float32)
    return acc


def _convnext_kernel(x_ref, msk_ref, wdw_ref, bdw_ref, lng_ref, lnb_ref,
                     w1_ref, b1_ref, w2_ref, b2_ref, gs_ref, o_ref,
                     *, W, KH, KW, eps, mxu_bf16):
    """Fused ConvNeXt block for one batch element.

    x_ref : (1, C, H*W)    input (free view of NCHW; spatial on lanes)
    msk   : (KH+KW, H*W)   separable {0,1} boundary masks
                           rows [0,KH): h-shift validity, rows [KH,..): w-shift
    wdw   : (C, KH*KW)     depthwise weights (tap-major on lanes)
    bdw/lng/lnb/gs : (C, 1)
    w1/b1 : (4C, C)/(4C,1) pwconv1 (PyTorch Linear layout: (out, in))
    w2/b2 : (C, 4C)/(C,1)  pwconv2
    o_ref : (1, C, H*W)
    """
    _, C, HW = x_ref.shape
    PH, PW = (KH - 1) // 2, (KW - 1) // 2

    x = x_ref[0].astype(jnp.float32)                    # (C, HW)
    wdw = wdw_ref[...].astype(jnp.float32)              # hoisted, one load
    msk = msk_ref[...]                                  # hoisted, one load

    # ---- depthwise KHxKW conv ------------------------------------------
    # Each tap is an aligned lane-roll of the flat (C, H*W) frame (XLU);
    # out-of-image contributions are zeroed by the separable masks, so there
    # is NO padded scratch to allocate or zero-fill.  Two partial
    # accumulators expose ILP; the conv bias seeds one of them.
    acc_a = jnp.broadcast_to(bdw_ref[...].astype(jnp.float32), (C, HW))
    acc_b = jnp.zeros((C, HW), jnp.float32)
    accs = [acc_a, acc_b]
    t = 0
    for kh in range(KH):
        for kw in range(KW):
            delta = (kh - PH) * W + (kw - PW)           # flat source offset
            shift = (-delta) % HW                       # jnp.roll-style shift
            tap = x if shift == 0 else pltpu.roll(x, shift, axis=1)
            m = msk[kh:kh + 1, :] * msk[KH + kw:KH + kw + 1, :]     # (1, HW)
            accs[t & 1] = accs[t & 1] + (tap * m) * wdw[:, t:t + 1]
            t += 1
    dwc = accs[0] + accs[1]                              # (C, HW)

    # ---- LayerNorm over channels, single fused pass (var = E[x^2]-mu^2) --
    inv_c = 1.0 / C
    mu = jnp.sum(dwc, axis=0, keepdims=True) * inv_c               # (1, HW)
    ex2 = jnp.sum(dwc * dwc, axis=0, keepdims=True) * inv_c
    r = jax.lax.rsqrt(ex2 - mu * mu + eps)
    y = (dwc - mu) * r * lng_ref[...].astype(jnp.float32) \
        + lnb_ref[...].astype(jnp.float32)

    # ---- pointwise MLP: C -> 4C -> GELU -> C ------------------------------
    h = _gelu_tanh(_linear_cs(y, w1_ref, b1_ref, mxu_bf16=mxu_bf16))
    z = _linear_cs(h, w2_ref, b2_ref, mxu_bf16=mxu_bf16)

    # ---- layer scale + residual (drop_path = 0.0 -> identity) -------------
    out = x + z * gs_ref[...].astype(jnp.float32)
    o_ref[0] = out.astype(o_ref.dtype)                   # lane-dense store


def convnext_block_pallas(x_nchw, params, *, kernel_size=7, eps=1e-6,
                          mxu_bf16=None):
    """Fused ConvNeXt block on NCHW input (PyTorch layout), no HBM transposes."""
    N, C, H, W = x_nchw.shape
    HW = H * W
    KH = KW = kernel_size
    PH, PW = (KH - 1) // 2, (KW - 1) // 2
    wdw, bdw, lng, lnb, w1, b1, w2, b2, gs = params
    if mxu_bf16 is None:
        mxu_bf16 = C > 64   # bf16 MXU operands only on the matmul (large-C) path

    # Separable {0,1} boundary masks for the KHxKW taps (tiny, built once).
    hh = jnp.arange(HW, dtype=jnp.int32) // W
    ww = jnp.arange(HW, dtype=jnp.int32) % W
    h_m = jnp.stack([(hh + (kh - PH) >= 0) & (hh + (kh - PH) < H)
                     for kh in range(KH)])
    w_m = jnp.stack([(ww + (kw - PW) >= 0) & (ww + (kw - PW) < W)
                     for kw in range(KW)])
    masks = jnp.concatenate([h_m, w_m], axis=0).astype(jnp.float32)  # (KH+KW,HW)

    x = x_nchw.reshape(N, C, HW)                          # free, contiguous view
    small = [masks, wdw, bdw, lng, lnb, w1, b1, w2, b2, gs]

    kern = functools.partial(_convnext_kernel, W=W, KH=KH, KW=KW,
                             eps=eps, mxu_bf16=mxu_bf16)
    out = pl.pallas_call(
        kern,
        out_shape=jax.ShapeDtypeStruct((N, C, HW), x_nchw.dtype),
        grid=(N,),
        in_specs=[pl.BlockSpec((1, C, HW), lambda n: (n, 0, 0))]
                + [pl.BlockSpec(p.shape, lambda n: (0, 0)) for p in small],
        out_specs=pl.BlockSpec((1, C, HW), lambda n: (n, 0, 0)),
        compiler_params=pltpu.CompilerParams(
            dimension_semantics=("parallel",),
            # Raise the scoped-VMEM default (16 MiB on v5e) while staying well
            # under v7x's 64 MiB physical VMEM.
            vmem_limit_bytes=48 * 1024 * 1024),
    )(x, *small)
    return out.reshape(N, C, H, W)


class ConvNeXtBlockPallas:
    """ConvNeXt block. drop_path > 0 (training-time stochastic depth) not supported."""

    def __init__(self, dim, drop_path=0.0, layer_scale_init_value=1e-6, *, key):
        assert drop_path == 0.0, "DropPath > 0 not implemented (eval-time identity)."
        self.dim = dim
        ks = jax.random.split(key, 6)
        k = 7
        # Deterministic synthetic init (PyTorch-style uniform bounds).
        bd = 1.0 / (1 * k * k) ** 0.5                     # depthwise fan_in = 1*7*7
        self.w_dw = jax.random.uniform(ks[0], (dim, 1, k, k), jnp.float32, -bd, bd)
        self.b_dw = jax.random.uniform(ks[1], (dim,), jnp.float32, -bd, bd)
        self.ln_g = jnp.ones((dim,), jnp.float32)
        self.ln_b = jnp.zeros((dim,), jnp.float32)
        b1 = 1.0 / dim ** 0.5
        self.w1 = jax.random.uniform(ks[2], (4 * dim, dim), jnp.float32, -b1, b1)
        self.b1 = jax.random.uniform(ks[3], (4 * dim,), jnp.float32, -b1, b1)
        b2 = 1.0 / (4 * dim) ** 0.5
        self.w2 = jax.random.uniform(ks[4], (dim, 4 * dim), jnp.float32, -b2, b2)
        self.b2 = jax.random.uniform(ks[5], (dim,), jnp.float32, -b2, b2)
        # gamma=None (layer_scale_init_value<=0) is equivalent to all-ones scale.
        self.gamma = (layer_scale_init_value * jnp.ones((dim,), jnp.float32)
                      if layer_scale_init_value > 0
                      else jnp.ones((dim,), jnp.float32))

    def _kernel_params(self):
        d = self.dim
        kk = self.w_dw.shape[-2] * self.w_dw.shape[-1]
        return (self.w_dw.reshape(d, kk),                 # (C, KH*KW)
                self.b_dw.reshape(d, 1),
                self.ln_g.reshape(d, 1), self.ln_b.reshape(d, 1),
                self.w1, self.b1.reshape(4 * d, 1),
                self.w2, self.b2.reshape(d, 1),
                self.gamma.reshape(d, 1))

    def __call__(self, x_nchw):
        return convnext_block_pallas(x_nchw, self._kernel_params(),
                                     kernel_size=self.w_dw.shape[-1])


def _reference(mod, x_nchw, eps=1e-6):
    """Pure-JAX (lax.conv / dot) reference for verification (NCHW in/out)."""
    x = x_nchw.astype(jnp.float32)
    C = x.shape[1]
    k = mod.w_dw.shape[-1]
    pad = (k - 1) // 2
    dw = jax.lax.conv_general_dilated(
        x, mod.w_dw, window_strides=(1, 1),
        padding=[(pad, pad), (pad, pad)],
        dimension_numbers=("NCHW", "OIHW", "NCHW"),
        feature_group_count=C,
        precision=jax.lax.Precision.HIGHEST) + mod.b_dw[None, :, None, None]
    t = jnp.transpose(dw, (0, 2, 3, 1))                   # NHWC for LN / MLP
    mu = t.mean(-1, keepdims=True)
    var = ((t - mu) ** 2).mean(-1, keepdims=True)
    y = (t - mu) * jax.lax.rsqrt(var + eps) * mod.ln_g + mod.ln_b
    h = _gelu_tanh(jnp.dot(y, mod.w1.T, precision=jax.lax.Precision.HIGHEST)
                   + mod.b1)
    z = jnp.dot(h, mod.w2.T, precision=jax.lax.Precision.HIGHEST) + mod.b2
    z = z * mod.gamma
    out = x + jnp.transpose(z, (0, 3, 1, 2))
    return out.astype(x_nchw.dtype)


if __name__ == "__main__":
    key = jax.random.PRNGKey(0)
    kx, kp, kg, kl1, kl2 = jax.random.split(key, 5)

    dim = 4
    module = ConvNeXtBlockPallas(dim=dim, drop_path=0.0,
                                 layer_scale_init_value=1e-6, key=kp)
    # PyTorch init (gamma=1e-6, LN scale=1 / shift=0) makes the MLP branch
    # numerically invisible at the test tolerance; randomize these parameters
    # so the self-test exercises the full branch.
    module.gamma = jax.random.uniform(kg, (dim,), jnp.float32, 0.5, 1.5)
    module.ln_g = jax.random.uniform(kl1, (dim,), jnp.float32, 0.5, 1.5)
    module.ln_b = jax.random.uniform(kl2, (dim,), jnp.float32, -0.5, 0.5)

    # Input: NCHW, batch=2, channels=4, 16x16 spatial.
    x = jax.random.normal(kx, (2, dim, 16, 16), jnp.float32)

    out = jax.block_until_ready(module(x))
    ref = jax.block_until_ready(_reference(module, x))

    assert out.shape == x.shape, out.shape
    err = float(jnp.max(jnp.abs(out - ref)))
    assert err < 1e-3, err
    print("KERNEL_OK")
</pallas_src>

<mosaic_0001>
module attributes {stable_mosaic.version = 11 : i64} {
  func.func @_convnext_kernel(%arg0: i32, %arg1: memref<1x4x256xf32, #tpu.memory_space<vmem>>, %arg2: memref<14x256xf32, #tpu.memory_space<vmem>>, %arg3: memref<4x49xf32, #tpu.memory_space<vmem>>, %arg4: memref<4x1xf32, #tpu.memory_space<vmem>>, %arg5: memref<4x1xf32, #tpu.memory_space<vmem>>, %arg6: memref<4x1xf32, #tpu.memory_space<vmem>>, %arg7: memref<16x4xf32, #tpu.memory_space<vmem>>, %arg8: memref<16x1xf32, #tpu.memory_space<vmem>>, %arg9: memref<4x16xf32, #tpu.memory_space<vmem>>, %arg10: memref<4x1xf32, #tpu.memory_space<vmem>>, %arg11: memref<4x1xf32, #tpu.memory_space<vmem>>, %arg12: memref<1x4x256xf32, #tpu.memory_space<vmem>>) attributes {dimension_semantics = [#tpu.dimension_semantics<parallel>], iteration_bounds = array<i64: 2>, scalar_prefetch = 0 : i64, scratch_operands = 0 : i64, tpu.core_type = #tpu.core_type<tc>, window_params = [{transform_indices = @transform_0, window_bounds = array<i64: 1, 4, 256>}, {pipeline_mode = #tpu.pipeline_mode<synchronous>, transform_indices = @transform_1, window_bounds = array<i64: 14, 256>}, {pipeline_mode = #tpu.pipeline_mode<synchronous>, transform_indices = @transform_2, window_bounds = array<i64: 4, 49>}, {pipeline_mode = #tpu.pipeline_mode<synchronous>, transform_indices = @transform_3, window_bounds = array<i64: 4, 1>}, {pipeline_mode = #tpu.pipeline_mode<synchronous>, transform_indices = @transform_4, window_bounds = array<i64: 4, 1>}, {pipeline_mode = #tpu.pipeline_mode<synchronous>, transform_indices = @transform_5, window_bounds = array<i64: 4, 1>}, {pipeline_mode = #tpu.pipeline_mode<synchronous>, transform_indices = @transform_6, window_bounds = array<i64: 16, 4>}, {pipeline_mode = #tpu.pipeline_mode<synchronous>, transform_indices = @transform_7, window_bounds = array<i64: 16, 1>}, {pipeline_mode = #tpu.pipeline_mode<synchronous>, transform_indices = @transform_8, window_bounds = array<i64: 4, 16>}, {pipeline_mode = #tpu.pipeline_mode<synchronous>, transform_indices = @transform_9, window_bounds = array<i64: 4, 1>}, {pipeline_mode = #tpu.pipeline_mode<synchronous>, transform_indices = @transform_10, window_bounds = array<i64: 4, 1>}, {transform_indices = @transform_11, window_bounds = array<i64: 1, 4, 256>}]} {
    %c0 = arith.constant 0 : index
    %c0_0 = arith.constant 0 : index
    %c0_1 = arith.constant 0 : index
    %0 = vector.load %arg1[%c0, %c0_0, %c0_1] : memref<1x4x256xf32, #tpu.memory_space<vmem>>, vector<1x4x256xf32>
    %1 = vector.shape_cast %0 : vector<1x4x256xf32> to vector<4x256xf32>
    %c0_2 = arith.constant 0 : index
    %c0_3 = arith.constant 0 : index
    %2 = vector.load %arg3[%c0_2, %c0_3] : memref<4x49xf32, #tpu.memory_space<vmem>>, vector<4x49xf32>
    %c0_4 = arith.constant 0 : index
    %c0_5 = arith.constant 0 : index
    %3 = vector.load %arg2[%c0_4, %c0_5] : memref<14x256xf32, #tpu.memory_space<vmem>>, vector<14x256xf32>
    %c0_6 = arith.constant 0 : index
    %c0_7 = arith.constant 0 : index
    %4 = vector.load %arg4[%c0_6, %c0_7] : memref<4x1xf32, #tpu.memory_space<vmem>>, vector<4x1xf32>
    %5 = vector.shape_cast %4 : vector<4x1xf32> to vector<4x1xf32>
    %6 = vector.broadcast %5 : vector<4x1xf32> to vector<4x256xf32>
    %cst = arith.constant 0.000000e+00 : f32
    %7 = vector.broadcast %cst : f32 to vector<4x256xf32>
    %c51_i32 = arith.constant 51 : i32
    %8 = tpu.dynamic_rotate %1 by %c51_i32 dim 1 : vector<4x256xf32>, i32 -> vector<4x256xf32>
    %9 = vector.extract_strided_slice %3 {offsets = [0, 0], sizes = [1, 256], strides = [1, 1]} : vector<14x256xf32> to vector<1x256xf32>
    %10 = vector.extract_strided_slice %3 {offsets = [7, 0], sizes = [1, 256], strides = [1, 1]} : vector<14x256xf32> to vector<1x256xf32>
    %11 = arith.mulf %9, %10 : vector<1x256xf32>
    %12 = vector.broadcast %11 : vector<1x256xf32> to vector<4x256xf32>
    %13 = arith.mulf %8, %12 : vector<4x256xf32>
    %14 = vector.extract_strided_slice %2 {offsets = [0, 0], sizes = [4, 1], strides = [1, 1]} : vector<4x49xf32> to vector<4x1xf32>
    %15 = vector.broadcast %14 : vector<4x1xf32> to vector<4x256xf32>
    %16 = arith.mulf %13, %15 : vector<4x256xf32>
    %17 = arith.addf %6, %16 : vector<4x256xf32>
    %c50_i32 = arith.constant 50 : i32
    %18 = tpu.dynamic_rotate %1 by %c50_i32 dim 1 : vector<4x256xf32>, i32 -> vector<4x256xf32>
    %19 = vector.extract_strided_slice %3 {offsets = [0, 0], sizes = [1, 256], strides = [1, 1]} : vector<14x256xf32> to vector<1x256xf32>
    %20 = vector.extract_strided_slice %3 {offsets = [8, 0], sizes = [1, 256], strides = [1, 1]} : vector<14x256xf32> to vector<1x256xf32>
    %21 = arith.mulf %19, %20 : vector<1x256xf32>
    %22 = vector.broadcast %21 : vector<1x256xf32> to vector<4x256xf32>
    %23 = arith.mulf %18, %22 : vector<4x256xf32>
    %24 = vector.extract_strided_slice %2 {offsets = [0, 1], sizes = [4, 1], strides = [1, 1]} : vector<4x49xf32> to vector<4x1xf32>
    %25 = vector.broadcast %24 : vector<4x1xf32> to vector<4x256xf32>
    %26 = arith.mulf %23, %25 : vector<4x256xf32>
    %27 = arith.addf %7, %26 : vector<4x256xf32>
    %c49_i32 = arith.constant 49 : i32
    %28 = tpu.dynamic_rotate %1 by %c49_i32 dim 1 : vector<4x256xf32>, i32 -> vector<4x256xf32>
    %29 = vector.extract_strided_slice %3 {offsets = [0, 0], sizes = [1, 256], strides = [1, 1]} : vector<14x256xf32> to vector<1x256xf32>
    %30 = vector.extract_strided_slice %3 {offsets = [9, 0], sizes = [1, 256], strides = [1, 1]} : vector<14x256xf32> to vector<1x256xf32>
    %31 = arith.mulf %29, %30 : vector<1x256xf32>
    %32 = vector.broadcast %31 : vector<1x256xf32> to vector<4x256xf32>
    %33 = arith.mulf %28, %32 : vector<4x256xf32>
    %34 = vector.extract_strided_slice %2 {offsets = [0, 2], sizes = [4, 1], strides = [1, 1]} : vector<4x49xf32> to vector<4x1xf32>
    %35 = vector.broadcast %34 : vector<4x1xf32> to vector<4x256xf32>
    %36 = arith.mulf %33, %35 : vector<4x256xf32>
    %37 = arith.addf %17, %36 : vector<4x256xf32>
    %c48_i32 = arith.constant 48 : i32
    %38 = tpu.dynamic_rotate %1 by %c48_i32 dim 1 : vector<4x256xf32>, i32 -> vector<4x256xf32>
    %39 = vector.extract_strided_slice %3 {offsets = [0, 0], sizes = [1, 256], strides = [1, 1]} : vector<14x256xf32> to vector<1x256xf32>
    %40 = vector.extract_strided_slice %3 {offsets = [10, 0], sizes = [1, 256], strides = [1, 1]} : vector<14x256xf32> to vector<1x256xf32>
    %41 = arith.mulf %39, %40 : vector<1x256xf32>
    %42 = vector.broadcast %41 : vector<1x256xf32> to vector<4x256xf32>
    %43 = arith.mulf %38, %42 : vector<4x256xf32>
    %44 = vector.extract_strided_slice %2 {offsets = [0, 3], sizes = [4, 1], strides = [1, 1]} : vector<4x49xf32> to vector<4x1xf32>
    %45 = vector.broadcast %44 : vector<4x1xf32> to vector<4x256xf32>
    %46 = arith.mulf %43, %45 : vector<4x256xf32>
    %47 = arith.addf %27, %46 : vector<4x256xf32>
    %c47_i32 = arith.constant 47 : i32
    %48 = tpu.dynamic_rotate %1 by %c47_i32 dim 1 : vector<4x256xf32>, i32 -> vector<4x256xf32>
    %49 = vector.extract_strided_slice %3 {offsets = [0, 0], sizes = [1, 256], strides = [1, 1]} : vector<14x256xf32> to vector<1x256xf32>
    %50 = vector.extract_strided_slice %3 {offsets = [11, 0], sizes = [1, 256], strides = [1, 1]} : vector<14x256xf32> to vector<1x256xf32>
    %51 = arith.mulf %49, %50 : vector<1x256xf32>
    %52 = vector.broadcast %51 : vector<1x256xf32> to vector<4x256xf32>
    %53 = arith.mulf %48, %52 : vector<4x256xf32>
    %54 = vector.extract_strided_slice %2 {offsets = [0, 4], sizes = [4, 1], strides = [1, 1]} : vector<4x49xf32> to vector<4x1xf32>
    %55 = vector.broadcast %54 : vector<4x1xf32> to vector<4x256xf32>
    %56 = arith.mulf %53, %55 : vector<4x256xf32>
    %57 = arith.addf %37, %56 : vector<4x256xf32>
    %c46_i32 = arith.constant 46 : i32
    %58 = tpu.dynamic_rotate %1 by %c46_i32 dim 1 : vector<4x256xf32>, i32 -> vector<4x256xf32>
    %59 = vector.extract_strided_slice %3 {offsets = [0, 0], sizes = [1, 256], strides = [1, 1]} : vector<14x256xf32> to vector<1x256xf32>
    %60 = vector.extract_strided_slice %3 {offsets = [12, 0], sizes = [1, 256], strides = [1, 1]} : vector<14x256xf32> to vector<1x256xf32>
    %61 = arith.mulf %59, %60 : vector<1x256xf32>
    %62 = vector.broadcast %61 : vector<1x256xf32> to vector<4x256xf32>
    %63 = arith.mulf %58, %62 : vector<4x256xf32>
    %64 = vector.extract_strided_slice %2 {offsets = [0, 5], sizes = [4, 1], strides = [1, 1]} : vector<4x49xf32> to vector<4x1xf32>
    %65 = vector.broadcast %64 : vector<4x1xf32> to vector<4x256xf32>
    %66 = arith.mulf %63, %65 : vector<4x256xf32>
    %67 = arith.addf %47, %66 : vector<4x256xf32>
    %c45_i32 = arith.constant 45 : i32
    %68 = tpu.dynamic_rotate %1 by %c45_i32 dim 1 : vector<4x256xf32>, i32 -> vector<4x256xf32>
    %69 = vector.extract_strided_slice %3 {offsets = [0, 0], sizes = [1, 256], strides = [1, 1]} : vector<14x256xf32> to vector<1x256xf32>
    %70 = vector.extract_strided_slice %3 {offsets = [13, 0], sizes = [1, 256], strides = [1, 1]} : vector<14x256xf32> to vector<1x256xf32>
    %71 = arith.mulf %69, %70 : vector<1x256xf32>
    %72 = vector.broadcast %71 : vector<1x256xf32> to vector<4x256xf32>
    %73 = arith.mulf %68, %72 : vector<4x256xf32>
    %74 = vector.extract_strided_slice %2 {offsets = [0, 6], sizes = [4, 1], strides = [1, 1]} : vector<4x49xf32> to vector<4x1xf32>
    %75 = vector.broadcast %74 : vector<4x1xf32> to vector<4x256xf32>
    %76 = arith.mulf %73, %75 : vector<4x256xf32>
    %77 = arith.addf %57, %76 : vector<4x256xf32>
    %c35_i32 = arith.constant 35 : i32
    %78 = tpu.dynamic_rotate %1 by %c35_i32 dim 1 : vector<4x256xf32>, i32 -> vector<4x256xf32>
    %79 = vector.extract_strided_slice %3 {offsets = [1, 0], sizes = [1, 256], strides = [1, 1]} : vector<14x256xf32> to vector<1x256xf32>
    %80 = vector.extract_strided_slice %3 {offsets = [7, 0], sizes = [1, 256], strides = [1, 1]} : vector<14x256xf32> to vector<1x256xf32>
    %81 = arith.mulf %79, %80 : vector<1x256xf32>
    %82 = vector.broadcast %81 : vector<1x256xf32> to vector<4x256xf32>
    %83 = arith.mulf %78, %82 : vector<4x256xf32>
    %84 = vector.extract_strided_slice %2 {offsets = [0, 7], sizes = [4, 1], strides = [1, 1]} : vector<4x49xf32> to vector<4x1xf32>
    %85 = vector.broadcast %84 : vector<4x1xf32> to vector<4x256xf32>
    %86 = arith.mulf %83, %85 : vector<4x256xf32>
    %87 = arith.addf %67, %86 : vector<4x256xf32>
    %c34_i32 = arith.constant 34 : i32
    %88 = tpu.dynamic_rotate %1 by %c34_i32 dim 1 : vector<4x256xf32>, i32 -> vector<4x256xf32>
    %89 = vector.extract_strided_slice %3 {offsets = [1, 0], sizes = [1, 256], strides = [1, 1]} : vector<14x256xf32> to vector<1x256xf32>
    %90 = vector.extract_strided_slice %3 {offsets = [8, 0], sizes = [1, 256], strides = [1, 1]} : vector<14x256xf32> to vector<1x256xf32>
    %91 = arith.mulf %89, %90 : vector<1x256xf32>
    %92 = vector.broadcast %91 : vector<1x256xf32> to vector<4x256xf32>
    %93 = arith.mulf %88, %92 : vector<4x256xf32>
    %94 = vector.extract_strided_slice %2 {offsets = [0, 8], sizes = [4, 1], strides = [1, 1]} : vector<4x49xf32> to vector<4x1xf32>
    %95 = vector.broadcast %94 : vector<4x1xf32> to vector<4x256xf32>
    %96 = arith.mulf %93, %95 : vector<4x256xf32>
    %97 = arith.addf %77, %96 : vector<4x256xf32>
    %c33_i32 = arith.constant 33 : i32
    %98 = tpu.dynamic_rotate %1 by %c33_i32 dim 1 : vector<4x256xf32>, i32 -> vector<4x256xf32>
    %99 = vector.extract_strided_slice %3 {offsets = [1, 0], sizes = [1, 256], strides = [1, 1]} : vector<14x256xf32> to vector<1x256xf32>
    %100 = vector.extract_strided_slice %3 {offsets = [9, 0], sizes = [1, 256], strides = [1, 1]} : vector<14x256xf32> to vector<1x256xf32>
    %101 = arith.mulf %99, %100 : vector<1x256xf32>
    %102 = vector.broadcast %101 : vector<1x256xf32> to vector<4x256xf32>
    %103 = arith.mulf %98, %102 : vector<4x256xf32>
    %104 = vector.extract_strided_slice %2 {offsets = [0, 9], sizes = [4, 1], strides = [1, 1]} : vector<4x49xf32> to vector<4x1xf32>
    %105 = vector.broadcast %104 : vector<4x1xf32> to vector<4x256xf32>
    %106 = arith.mulf %103, %105 : vector<4x256xf32>
    %107 = arith.addf %87, %106 : vector<4x256xf32>
    %c32_i32 = arith.constant 32 : i32
    %108 = tpu.dynamic_rotate %1 by %c32_i32 dim 1 : vector<4x256xf32>, i32 -> vector<4x256xf32>
    %109 = vector.extract_strided_slice %3 {offsets = [1, 0], sizes = [1, 256], strides = [1, 1]} : vector<14x256xf32> to vector<1x256xf32>
    %110 = vector.extract_strided_slice %3 {offsets = [10, 0], sizes = [1, 256], strides = [1, 1]} : vector<14x256xf32> to vector<1x256xf32>
    %111 = arith.mulf %109, %110 : vector<1x256xf32>
    %112 = vector.broadcast %111 : vector<1x256xf32> to vector<4x256xf32>
    %113 = arith.mulf %108, %112 : vector<4x256xf32>
    %114 = vector.extract_strided_slice %2 {offsets = [0, 10], sizes = [4, 1], strides = [1, 1]} : vector<4x49xf32> to vector<4x1xf32>
    %115 = vector.broadcast %114 : vector<4x1xf32> to vector<4x256xf32>
    %116 = arith.mulf %113, %115 : vector<4x256xf32>
    %117 = arith.addf %97, %116 : vector<4x256xf32>
    %c31_i32 = arith.constant 31 : i32
    %118 = tpu.dynamic_rotate %1 by %c31_i32 dim 1 : vector<4x256xf32>, i32 -> vector<4x256xf32>
    %119 = vector.extract_strided_slice %3 {offsets = [1, 0], sizes = [1, 256], strides = [1, 1]} : vector<14x256xf32> to vector<1x256xf32>
    %120 = vector.extract_strided_slice %3 {offsets = [11, 0], sizes = [1, 256], strides = [1, 1]} : vector<14x256xf32> to vector<1x256xf32>
    %121 = arith.mulf %119, %120 : vector<1x256xf32>
    %122 = vector.broadcast %121 : vector<1x256xf32> to vector<4x256xf32>
    %123 = arith.mulf %118, %122 : vector<4x256xf32>
    %124 = vector.extract_strided_slice %2 {offsets = [0, 11], sizes = [4, 1], strides = [1, 1]} : vector<4x49xf32> to vector<4x1xf32>
    %125 = vector.broadcast %124 : vector<4x1xf32> to vector<4x256xf32>
    %126 = arith.mulf %123, %125 : vector<4x256xf32>
    %127 = arith.addf %107, %126 : vector<4x256xf32>
    %c30_i32 = arith.constant 30 : i32
    %128 = tpu.dynamic_rotate %1 by %c30_i32 dim 1 : vector<4x256xf32>, i32 -> vector<4x256xf32>
    %129 = vector.extract_strided_slice %3 {offsets = [1, 0], sizes = [1, 256], strides = [1, 1]} : vector<14x256xf32> to vector<1x256xf32>
    %130 = vector.extract_strided_slice %3 {offsets = [12, 0], sizes = [1, 256], strides = [1, 1]} : vector<14x256xf32> to vector<1x256xf32>
    %131 = arith.mulf %129, %130 : vector<1x256xf32>
    %132 = vector.broadcast %131 : vector<1x256xf32> to vector<4x256xf32>
    %133 = arith.mulf %128, %132 : vector<4x256xf32>
    %134 = vector.extract_strided_slice %2 {offsets = [0, 12], sizes = [4, 1], strides = [1, 1]} : vector<4x49xf32> to vector<4x1xf32>
    %135 = vector.broadcast %134 : vector<4x1xf32> to vector<4x256xf32>
    %136 = arith.mulf %133, %135 : vector<4x256xf32>
    %137 = arith.addf %117, %136 : vector<4x256xf32>
    %c29_i32 = arith.constant 29 : i32
    %138 = tpu.dynamic_rotate %1 by %c29_i32 dim 1 : vector<4x256xf32>, i32 -> vector<4x256xf32>
    %139 = vector.extract_strided_slice %3 {offsets = [1, 0], sizes = [1, 256], strides = [1, 1]} : vector<14x256xf32> to vector<1x256xf32>
    %140 = vector.extract_strided_slice %3 {offsets = [13, 0], sizes = [1, 256], strides = [1, 1]} : vector<14x256xf32> to vector<1x256xf32>
    %141 = arith.mulf %139, %140 : vector<1x256xf32>
    %142 = vector.broadcast %141 : vector<1x256xf32> to vector<4x256xf32>
    %143 = arith.mulf %138, %142 : vector<4x256xf32>
    %144 = vector.extract_strided_slice %2 {offsets = [0, 13], sizes = [4, 1], strides = [1, 1]} : vector<4x49xf32> to vector<4x1xf32>
    %145 = vector.broadcast %144 : vector<4x1xf32> to vector<4x256xf32>
    %146 = arith.mulf %143, %145 : vector<4x256xf32>
    %147 = arith.addf %127, %146 : vector<4x256xf32>
    %c19_i32 = arith.constant 19 : i32
    %148 = tpu.dynamic_rotate %1 by %c19_i32 dim 1 : vector<4x256xf32>, i32 -> vector<4x256xf32>
    %149 = vector.extract_strided_slice %3 {offsets = [2, 0], sizes = [1, 256], strides = [1, 1]} : vector<14x256xf32> to vector<1x256xf32>
    %150 = vector.extract_strided_slice %3 {offsets = [7, 0], sizes = [1, 256], strides = [1, 1]} : vector<14x256xf32> to vector<1x256xf32>
    %151 = arith.mulf %149, %150 : vector<1x256xf32>
    %152 = vector.broadcast %151 : vector<1x256xf32> to vector<4x256xf32>
    %153 = arith.mulf %148, %152 : vector<4x256xf32>
    %154 = vector.extract_strided_slice %2 {offsets = [0, 14], sizes = [4, 1], strides = [1, 1]} : vector<4x49xf32> to vector<4x1xf32>
    %155 = vector.broadcast %154 : vector<4x1xf32> to vector<4x256xf32>
    %156 = arith.mulf %153, %155 : vector<4x256xf32>
    %157 = arith.addf %137, %156 : vector<4x256xf32>
    %c18_i32 = arith.constant 18 : i32
    %158 = tpu.dynamic_rotate %1 by %c18_i32 dim 1 : vector<4x256xf32>, i32 -> vector<4x256xf32>
    %159 = vector.extract_strided_slice %3 {offsets = [2, 0], sizes = [1, 256], strides = [1, 1]} : vector<14x256xf32> to vector<1x256xf32>
    %160 = vector.extract_strided_slice %3 {offsets = [8, 0], sizes = [1, 256], strides = [1, 1]} : vector<14x256xf32> to vector<1x256xf32>
    %161 = arith.mulf %159, %160 : vector<1x256xf32>
    %162 = vector.broadcast %161 : vector<1x256xf32> to vector<4x256xf32>
    %163 = arith.mulf %158, %162 : vector<4x256xf32>
    %164 = vector.extract_strided_slice %2 {offsets = [0, 15], sizes = [4, 1], strides = [1, 1]} : vector<4x49xf32> to vector<4x1xf32>
    %165 = vector.broadcast %164 : vector<4x1xf32> to vector<4x256xf32>
    %166 = arith.mulf %163, %165 : vector<4x256xf32>
    %167 = arith.addf %147, %166 : vector<4x256xf32>
    %c17_i32 = arith.constant 17 : i32
    %168 = tpu.dynamic_rotate %1 by %c17_i32 dim 1 : vector<4x256xf32>, i32 -> vector<4x256xf32>
    %169 = vector.extract_strided_slice %3 {offsets = [2, 0], sizes = [1, 256], strides = [1, 1]} : vector<14x256xf32> to vector<1x256xf32>
    %170 = vector.extract_strided_slice %3 {offsets = [9, 0], sizes = [1, 256], strides = [1, 1]} : vector<14x256xf32> to vector<1x256xf32>
    %171 = arith.mulf %169, %170 : vector<1x256xf32>
    %172 = vector.broadcast %171 : vector<1x256xf32> to vector<4x256xf32>
    %173 = arith.mulf %168, %172 : vector<4x256xf32>
    %174 = vector.extract_strided_slice %2 {offsets = [0, 16], sizes = [4, 1], strides = [1, 1]} : vector<4x49xf32> to vector<4x1xf32>
    %175 = vector.broadcast %174 : vector<4x1xf32> to vector<4x256xf32>
    %176 = arith.mulf %173, %175 : vector<4x256xf32>
    %177 = arith.addf %157, %176 : vector<4x256xf32>
    %c16_i32 = arith.constant 16 : i32
    %178 = tpu.dynamic_rotate %1 by %c16_i32 dim 1 : vector<4x256xf32>, i32 -> vector<4x256xf32>
    %179 = vector.extract_strided_slice %3 {offsets = [2, 0], sizes = [1, 256], strides = [1, 1]} : vector<14x256xf32> to vector<1x256xf32>
    %180 = vector.extract_strided_slice %3 {offsets = [10, 0], sizes = [1, 256], strides = [1, 1]} : vector<14x256xf32> to vector<1x256xf32>
    %181 = arith.mulf %179, %180 : vector<1x256xf32>
    %182 = vector.broadcast %181 : vector<1x256xf32> to vector<4x256xf32>
    %183 = arith.mulf %178, %182 : vector<4x256xf32>
    %184 = vector.extract_strided_slice %2 {offsets = [0, 17], sizes = [4, 1], strides = [1, 1]} : vector<4x49xf32> to vector<4x1xf32>
    %185 = vector.broadcast %184 : vector<4x1xf32> to vector<4x256xf32>
    %186 = arith.mulf %183, %185 : vector<4x256xf32>
    %187 = arith.addf %167, %186 : vector<4x256xf32>
    %c15_i32 = arith.constant 15 : i32
    %188 = tpu.dynamic_rotate %1 by %c15_i32 dim 1 : vector<4x256xf32>, i32 -> vector<4x256xf32>
    %189 = vector.extract_strided_slice %3 {offsets = [2, 0], sizes = [1, 256], strides = [1, 1]} : vector<14x256xf32> to vector<1x256xf32>
    %190 = vector.extract_strided_slice %3 {offsets = [11, 0], sizes = [1, 256], strides = [1, 1]} : vector<14x256xf32> to vector<1x256xf32>
    %191 = arith.mulf %189, %190 : vector<1x256xf32>
    %192 = vector.broadcast %191 : vector<1x256xf32> to vector<4x256xf32>
    %193 = arith.mulf %188, %192 : vector<4x256xf32>
    %194 = vector.extract_strided_slice %2 {offsets = [0, 18], sizes = [4, 1], strides = [1, 1]} : vector<4x49xf32> to vector<4x1xf32>
    %195 = vector.broadcast %194 : vector<4x1xf32> to vector<4x256xf32>
    %196 = arith.mulf %193, %195 : vector<4x256xf32>
    %197 = arith.addf %177, %196 : vector<4x256xf32>
    %c14_i32 = arith.constant 14 : i32
    %198 = tpu.dynamic_rotate %1 by %c14_i32 dim 1 : vector<4x256xf32>, i32 -> vector<4x256xf32>
    %199 = vector.extract_strided_slice %3 {offsets = [2, 0], sizes = [1, 256], strides = [1, 1]} : vector<14x256xf32> to vector<1x256xf32>
    %200 = vector.extract_strided_slice %3 {offsets = [12, 0], sizes = [1, 256], strides = [1, 1]} : vector<14x256xf32> to vector<1x256xf32>
    %201 = arith.mulf %199, %200 : vector<1x256xf32>
    %202 = vector.broadcast %201 : vector<1x256xf32> to vector<4x256xf32>
    %203 = arith.mulf %198, %202 : vector<4x256xf32>
    %204 = vector.extract_strided_slice %2 {offsets = [0, 19], sizes = [4, 1], strides = [1, 1]} : vector<4x49xf32> to vector<4x1xf32>
    %205 = vector.broadcast %204 : vector<4x1xf32> to vector<4x256xf32>
    %206 = arith.mulf %203, %205 : vector<4x256xf32>
    %207 = arith.addf %187, %206 : vector<4x256xf32>
    %c13_i32 = arith.constant 13 : i32
    %208 = tpu.dynamic_rotate %1 by %c13_i32 dim 1 : vector<4x256xf32>, i32 -> vector<4x256xf32>
    %209 = vector.extract_strided_slice %3 {offsets = [2, 0], sizes = [1, 256], strides = [1, 1]} : vector<14x256xf32> to vector<1x256xf32>
    %210 = vector.extract_strided_slice %3 {offsets = [13, 0], sizes = [1, 256], strides = [1, 1]} : vector<14x256xf32> to vector<1x256xf32>
    %211 = arith.mulf %209, %210 : vector<1x256xf32>
    %212 = vector.broadcast %211 : vector<1x256xf32> to vector<4x256xf32>
    %213 = arith.mulf %208, %212 : vector<4x256xf32>
    %214 = vector.extract_strided_slice %2 {offsets = [0, 20], sizes = [4, 1], strides = [1, 1]} : vector<4x49xf32> to vector<4x1xf32>
    %215 = vector.broadcast %214 : vector<4x1xf32> to vector<4x256xf32>
    %216 = arith.mulf %213, %215 : vector<4x256xf32>
    %217 = arith.addf %197, %216 : vector<4x256xf32>
    %c3_i32 = arith.constant 3 : i32
    %218 = tpu.dynamic_rotate %1 by %c3_i32 dim 1 : vector<4x256xf32>, i32 -> vector<4x256xf32>
    %219 = vector.extract_strided_slice %3 {offsets = [3, 0], sizes = [1, 256], strides = [1, 1]} : vector<14x256xf32> to vector<1x256xf32>
    %220 = vector.extract_strided_slice %3 {offsets = [7, 0], sizes = [1, 256], strides = [1, 1]} : vector<14x256xf32> to vector<1x256xf32>
    %221 = arith.mulf %219, %220 : vector<1x256xf32>
    %222 = vector.broadcast %221 : vector<1x256xf32> to vector<4x256xf32>
    %223 = arith.mulf %218, %222 : vector<4x256xf32>
    %224 = vector.extract_strided_slice %2 {offsets = [0, 21], sizes = [4, 1], strides = [1, 1]} : vector<4x49xf32> to vector<4x1xf32>
    %225 = vector.broadcast %224 : vector<4x1xf32> to vector<4x256xf32>
    %226 = arith.mulf %223, %225 : vector<4x256xf32>
    %227 = arith.addf %207, %226 : vector<4x256xf32>
    %c2_i32 = arith.constant 2 : i32
    %228 = tpu.dynamic_rotate %1 by %c2_i32 dim 1 : vector<4x256xf32>, i32 -> vector<4x256xf32>
    %229 = vector.extract_strided_slice %3 {offsets = [3, 0], sizes = [1, 256], strides = [1, 1]} : vector<14x256xf32> to vector<1x256xf32>
    %230 = vector.extract_strided_slice %3 {offsets = [8, 0], sizes = [1, 256], strides = [1, 1]} : vector<14x256xf32> to vector<1x256xf32>
    %231 = arith.mulf %229, %230 : vector<1x256xf32>
    %232 = vector.broadcast %231 : vector<1x256xf32> to vector<4x256xf32>
    %233 = arith.mulf %228, %232 : vector<4x256xf32>
    %234 = vector.extract_strided_slice %2 {offsets = [0, 22], sizes = [4, 1], strides = [1, 1]} : vector<4x49xf32> to vector<4x1xf32>
    %235 = vector.broadcast %234 : vector<4x1xf32> to vector<4x256xf32>
    %236 = arith.mulf %233, %235 : vector<4x256xf32>
    %237 = arith.addf %217, %236 : vector<4x256xf32>
    %c1_i32 = arith.constant 1 : i32
    %238 = tpu.dynamic_rotate %1 by %c1_i32 dim 1 : vector<4x256xf32>, i32 -> vector<4x256xf32>
    %239 = vector.extract_strided_slice %3 {offsets = [3, 0], sizes = [1, 256], strides = [1, 1]} : vector<14x256xf32> to vector<1x256xf32>
    %240 = vector.extract_strided_slice %3 {offsets = [9, 0], sizes = [1, 256], strides = [1, 1]} : vector<14x256xf32> to vector<1x256xf32>
    %241 = arith.mulf %239, %240 : vector<1x256xf32>
    %242 = vector.broadcast %241 : vector<1x256xf32> to vector<4x256xf32>
    %243 = arith.mulf %238, %242 : vector<4x256xf32>
    %244 = vector.extract_strided_slice %2 {offsets = [0, 23], sizes = [4, 1], strides = [1, 1]} : vector<4x49xf32> to vector<4x1xf32>
    %245 = vector.broadcast %244 : vector<4x1xf32> to vector<4x256xf32>
    %246 = arith.mulf %243, %245 : vector<4x256xf32>
    %247 = arith.addf %227, %246 : vector<4x256xf32>
    %248 = vector.extract_strided_slice %3 {offsets = [3, 0], sizes = [1, 256], strides = [1, 1]} : vector<14x256xf32> to vector<1x256xf32>
    %249 = vector.extract_strided_slice %3 {offsets = [10, 0], sizes = [1, 256], strides = [1, 1]} : vector<14x256xf32> to vector<1x256xf32>
    %250 = arith.mulf %248, %249 : vector<1x256xf32>
    %251 = vector.broadcast %250 : vector<1x256xf32> to vector<4x256xf32>
    %252 = arith.mulf %1, %251 : vector<4x256xf32>
    %253 = vector.extract_strided_slice %2 {offsets = [0, 24], sizes = [4, 1], strides = [1, 1]} : vector<4x49xf32> to vector<4x1xf32>
    %254 = vector.broadcast %253 : vector<4x1xf32> to vector<4x256xf32>
    %255 = arith.mulf %252, %254 : vector<4x256xf32>
    %256 = arith.addf %237, %255 : vector<4x256xf32>
    %c255_i32 = arith.constant 255 : i32
    %257 = tpu.dynamic_rotate %1 by %c255_i32 dim 1 : vector<4x256xf32>, i32 -> vector<4x256xf32>
    %258 = vector.extract_strided_slice %3 {offsets = [3, 0], sizes = [1, 256], strides = [1, 1]} : vector<14x256xf32> to vector<1x256xf32>
    %259 = vector.extract_strided_slice %3 {offsets = [11, 0], sizes = [1, 256], strides = [1, 1]} : vector<14x256xf32> to vector<1x256xf32>
    %260 = arith.mulf %258, %259 : vector<1x256xf32>
    %261 = vector.broadcast %260 : vector<1x256xf32> to vector<4x256xf32>
    %262 = arith.mulf %257, %261 : vector<4x256xf32>
    %263 = vector.extract_strided_slice %2 {offsets = [0, 25], sizes = [4, 1], strides = [1, 1]} : vector<4x49xf32> to vector<4x1xf32>
    %264 = vector.broadcast %263 : vector<4x1xf32> to vector<4x256xf32>
    %265 = arith.mulf %262, %264 : vector<4x256xf32>
    %266 = arith.addf %247, %265 : vector<4x256xf32>
    %c254_i32 = arith.constant 254 : i32
    %267 = tpu.dynamic_rotate %1 by %c254_i32 dim 1 : vector<4x256xf32>, i32 -> vector<4x256xf32>
    %268 = vector.extract_strided_slice %3 {offsets = [3, 0], sizes = [1, 256], strides = [1, 1]} : vector<14x256xf32> to vector<1x256xf32>
    %269 = vector.extract_strided_slice %3 {offsets = [12, 0], sizes = [1, 256], strides = [1, 1]} : vector<14x256xf32> to vector<1x256xf32>
    %270 = arith.mulf %268, %269 : vector<1x256xf32>
    %271 = vector.broadcast %270 : vector<1x256xf32> to vector<4x256xf32>
    %272 = arith.mulf %267, %271 : vector<4x256xf32>
    %273 = vector.extract_strided_slice %2 {offsets = [0, 26], sizes = [4, 1], strides = [1, 1]} : vector<4x49xf32> to vector<4x1xf32>
    %274 = vector.broadcast %273 : vector<4x1xf32> to vector<4x256xf32>
    %275 = arith.mulf %272, %274 : vector<4x256xf32>
    %276 = arith.addf %256, %275 : vector<4x256xf32>
    %c253_i32 = arith.constant 253 : i32
    %277 = tpu.dynamic_rotate %1 by %c253_i32 dim 1 : vector<4x256xf32>, i32 -> vector<4x256xf32>
    %278 = vector.extract_strided_slice %3 {offsets = [3, 0], sizes = [1, 256], strides = [1, 1]} : vector<14x256xf32> to vector<1x256xf32>
    %279 = vector.extract_strided_slice %3 {offsets = [13, 0], sizes = [1, 256], strides = [1, 1]} : vector<14x256xf32> to vector<1x256xf32>
    %280 = arith.mulf %278, %279 : vector<1x256xf32>
    %281 = vector.broadcast %280 : vector<1x256xf32> to vector<4x256xf32>
    %282 = arith.mulf %277, %281 : vector<4x256xf32>
    %283 = vector.extract_strided_slice %2 {offsets = [0, 27], sizes = [4, 1], strides = [1, 1]} : vector<4x49xf32> to vector<4x1xf32>
    %284 = vector.broadcast %283 : vector<4x1xf32> to vector<4x256xf32>
    %285 = arith.mulf %282, %284 : vector<4x256xf32>
    %286 = arith.addf %266, %285 : vector<4x256xf32>
    %c243_i32 = arith.constant 243 : i32
    %287 = tpu.dynamic_rotate %1 by %c243_i32 dim 1 : vector<4x256xf32>, i32 -> vector<4x256xf32>
    %288 = vector.extract_strided_slice %3 {offsets = [4, 0], sizes = [1, 256], strides = [1, 1]} : vector<14x256xf32> to vector<1x256xf32>
    %289 = vector.extract_strided_slice %3 {offsets = [7, 0], sizes = [1, 256], strides = [1, 1]} : vector<14x256xf32> to vector<1x256xf32>
    %290 = arith.mulf %288, %289 : vector<1x256xf32>
    %291 = vector.broadcast %290 : vector<1x256xf32> to vector<4x256xf32>
    %292 = arith.mulf %287, %291 : vector<4x256xf32>
    %293 = vector.extract_strided_slice %2 {offsets = [0, 28], sizes = [4, 1], strides = [1, 1]} : vector<4x49xf32> to vector<4x1xf32>
    %294 = vector.broadcast %293 : vector<4x1xf32> to vector<4x256xf32>
    %295 = arith.mulf %292, %294 : vector<4x256xf32>
    %296 = arith.addf %276, %295 : vector<4x256xf32>
    %c242_i32 = arith.constant 242 : i32
    %297 = tpu.dynamic_rotate %1 by %c242_i32 dim 1 : vector<4x256xf32>, i32 -> vector<4x256xf32>
    %298 = vector.extract_strided_slice %3 {offsets = [4, 0], sizes = [1, 256], strides = [1, 1]} : vector<14x256xf32> to vector<1x256xf32>
    %299 = vector.extract_strided_slice %3 {offsets = [8, 0], sizes = [1, 256], strides = [1, 1]} : vector<14x256xf32> to vector<1x256xf32>
    %300 = arith.mulf %298, %299 : vector<1x256xf32>
    %301 = vector.broadcast %300 : vector<1x256xf32> to vector<4x256xf32>
    %302 = arith.mulf %297, %301 : vector<4x256xf32>
    %303 = vector.extract_strided_slice %2 {offsets = [0, 29], sizes = [4, 1], strides = [1, 1]} : vector<4x49xf32> to vector<4x1xf32>
    %304 = vector.broadcast %303 : vector<4x1xf32> to vector<4x256xf32>
    %305 = arith.mulf %302, %304 : vector<4x256xf32>
    %306 = arith.addf %286, %305 : vector<4x256xf32>
    %c241_i32 = arith.constant 241 : i32
    %307 = tpu.dynamic_rotate %1 by %c241_i32 dim 1 : vector<4x256xf32>, i32 -> vector<4x256xf32>
    %308 = vector.extract_strided_slice %3 {offsets = [4, 0], sizes = [1, 256], strides = [1, 1]} : vector<14x256xf32> to vector<1x256xf32>
    %309 = vector.extract_strided_slice %3 {offsets = [9, 0], sizes = [1, 256], strides = [1, 1]} : vector<14x256xf32> to vector<1x256xf32>
    %310 = arith.mulf %308, %309 : vector<1x256xf32>
    %311 = vector.broadcast %310 : vector<1x256xf32> to vector<4x256xf32>
    %312 = arith.mulf %307, %311 : vector<4x256xf32>
    %313 = vector.extract_strided_slice %2 {offsets = [0, 30], sizes = [4, 1], strides = [1, 1]} : vector<4x49xf32> to vector<4x1xf32>
    %314 = vector.broadcast %313 : vector<4x1xf32> to vector<4x256xf32>
    %315 = arith.mulf %312, %314 : vector<4x256xf32>
    %316 = arith.addf %296, %315 : vector<4x256xf32>
    %c240_i32 = arith.constant 240 : i32
    %317 = tpu.dynamic_rotate %1 by %c240_i32 dim 1 : vector<4x256xf32>, i32 -> vector<4x256xf32>
    %318 = vector.extract_strided_slice %3 {offsets = [4, 0], sizes = [1, 256], strides = [1, 1]} : vector<14x256xf32> to vector<1x256xf32>
    %319 = vector.extract_strided_slice %3 {offsets = [10, 0], sizes = [1, 256], strides = [1, 1]} : vector<14x256xf32> to vector<1x256xf32>
    %320 = arith.mulf %318, %319 : vector<1x256xf32>
    %321 = vector.broadcast %320 : vector<1x256xf32> to vector<4x256xf32>
    %322 = arith.mulf %317, %321 : vector<4x256xf32>
    %323 = vector.extract_strided_slice %2 {offsets = [0, 31], sizes = [4, 1], strides = [1, 1]} : vector<4x49xf32> to vector<4x1xf32>
    %324 = vector.broadcast %323 : vector<4x1xf32> to vector<4x256xf32>
    %325 = arith.mulf %322, %324 : vector<4x256xf32>
    %326 = arith.addf %306, %325 : vector<4x256xf32>
    %c239_i32 = arith.constant 239 : i32
    %327 = tpu.dynamic_rotate %1 by %c239_i32 dim 1 : vector<4x256xf32>, i32 -> vector<4x256xf32>
    %328 = vector.extract_strided_slice %3 {offsets = [4, 0], sizes = [1, 256], strides = [1, 1]} : vector<14x256xf32> to vector<1x256xf32>
    %329 = vector.extract_strided_slice %3 {offsets = [11, 0], sizes = [1, 256], strides = [1, 1]} : vector<14x256xf32> to vector<1x256xf32>
    %330 = arith.mulf %328, %329 : vector<1x256xf32>
    %331 = vector.broadcast %330 : vector<1x256xf32> to vector<4x256xf32>
    %332 = arith.mulf %327, %331 : vector<4x256xf32>
    %333 = vector.extract_strided_slice %2 {offsets = [0, 32], sizes = [4, 1], strides = [1, 1]} : vector<4x49xf32> to vector<4x1xf32>
    %334 = vector.broadcast %333 : vector<4x1xf32> to vector<4x256xf32>
    %335 = arith.mulf %332, %334 : vector<4x256xf32>
    %336 = arith.addf %316, %335 : vector<4x256xf32>
    %c238_i32 = arith.constant 238 : i32
    %337 = tpu.dynamic_rotate %1 by %c238_i32 dim 1 : vector<4x256xf32>, i32 -> vector<4x256xf32>
    %338 = vector.extract_strided_slice %3 {offsets = [4, 0], sizes = [1, 256], strides = [1, 1]} : vector<14x256xf32> to vector<1x256xf32>
    %339 = vector.extract_strided_slice %3 {offsets = [12, 0], sizes = [1, 256], strides = [1, 1]} : vector<14x256xf32> to vector<1x256xf32>
    %340 = arith.mulf %338, %339 : vector<1x256xf32>
    %341 = vector.broadcast %340 : vector<1x256xf32> to vector<4x256xf32>
    %342 = arith.mulf %337, %341 : vector<4x256xf32>
    %343 = vector.extract_strided_slice %2 {offsets = [0, 33], sizes = [4, 1], strides = [1, 1]} : vector<4x49xf32> to vector<4x1xf32>
    %344 = vector.broadcast %343 : vector<4x1xf32> to vector<4x256xf32>
    %345 = arith.mulf %342, %344 : vector<4x256xf32>
    %346 = arith.addf %326, %345 : vector<4x256xf32>
    %c237_i32 = arith.constant 237 : i32
    %347 = tpu.dynamic_rotate %1 by %c237_i32 dim 1 : vector<4x256xf32>, i32 -> vector<4x256xf32>
    %348 = vector.extract_strided_slice %3 {offsets = [4, 0], sizes = [1, 256], strides = [1, 1]} : vector<14x256xf32> to vector<1x256xf32>
    %349 = vector.extract_strided_slice %3 {offsets = [13, 0], sizes = [1, 256], strides = [1, 1]} : vector<14x256xf32> to vector<1x256xf32>
    %350 = arith.mulf %348, %349 : vector<1x256xf32>
    %351 = vector.broadcast %350 : vector<1x256xf32> to vector<4x256xf32>
    %352 = arith.mulf %347, %351 : vector<4x256xf32>
    %353 = vector.extract_strided_slice %2 {offsets = [0, 34], sizes = [4, 1], strides = [1, 1]} : vector<4x49xf32> to vector<4x1xf32>
    %354 = vector.broadcast %353 : vector<4x1xf32> to vector<4x256xf32>
    %355 = arith.mulf %352, %354 : vector<4x256xf32>
    %356 = arith.addf %336, %355 : vector<4x256xf32>
    %c227_i32 = arith.constant 227 : i32
    %357 = tpu.dynamic_rotate %1 by %c227_i32 dim 1 : vector<4x256xf32>, i32 -> vector<4x256xf32>
    %358 = vector.extract_strided_slice %3 {offsets = [5, 0], sizes = [1, 256], strides = [1, 1]} : vector<14x256xf32> to vector<1x256xf32>
    %359 = vector.extract_strided_slice %3 {offsets = [7, 0], sizes = [1, 256], strides = [1, 1]} : vector<14x256xf32> to vector<1x256xf32>
    %360 = arith.mulf %358, %359 : vector<1x256xf32>
    %361 = vector.broadcast %360 : vector<1x256xf32> to vector<4x256xf32>
    %362 = arith.mulf %357, %361 : vector<4x256xf32>
    %363 = vector.extract_strided_slice %2 {offsets = [0, 35], sizes = [4, 1], strides = [1, 1]} : vector<4x49xf32> to vector<4x1xf32>
    %364 = vector.broadcast %363 : vector<4x1xf32> to vector<4x256xf32>
    %365 = arith.mulf %362, %364 : vector<4x256xf32>
    %366 = arith.addf %346, %365 : vector<4x256xf32>
    %c226_i32 = arith.constant 226 : i32
    %367 = tpu.dynamic_rotate %1 by %c226_i32 dim 1 : vector<4x256xf32>, i32 -> vector<4x256xf32>
    %368 = vector.extract_strided_slice %3 {offsets = [5, 0], sizes = [1, 256], strides = [1, 1]} : vector<14x256xf32> to vector<1x256xf32>
    %369 = vector.extract_strided_slice %3 {offsets = [8, 0], sizes = [1, 256], strides = [1, 1]} : vector<14x256xf32> to vector<1x256xf32>
    %370 = arith.mulf %368, %369 : vector<1x256xf32>
    %371 = vector.broadcast %370 : vector<1x256xf32> to vector<4x256xf32>
    %372 = arith.mulf %367, %371 : vector<4x256xf32>
    %373 = vector.extract_strided_slice %2 {offsets = [0, 36], sizes = [4, 1], strides = [1, 1]} : vector<4x49xf32> to vector<4x1xf32>
    %374 = vector.broadcast %373 : vector<4x1xf32> to vector<4x256xf32>
    %375 = arith.mulf %372, %374 : vector<4x256xf32>
    %376 = arith.addf %356, %375 : vector<4x256xf32>
    %c225_i32 = arith.constant 225 : i32
    %377 = tpu.dynamic_rotate %1 by %c225_i32 dim 1 : vector<4x256xf32>, i32 -> vector<4x256xf32>
    %378 = vector.extract_strided_slice %3 {offsets = [5, 0], sizes = [1, 256], strides = [1, 1]} : vector<14x256xf32> to vector<1x256xf32>
    %379 = vector.extract_strided_slice %3 {offsets = [9, 0], sizes = [1, 256], strides = [1, 1]} : vector<14x256xf32> to vector<1x256xf32>
    %380 = arith.mulf %378, %379 : vector<1x256xf32>
    %381 = vector.broadcast %380 : vector<1x256xf32> to vector<4x256xf32>
    %382 = arith.mulf %377, %381 : vector<4x256xf32>
    %383 = vector.extract_strided_slice %2 {offsets = [0, 37], sizes = [4, 1], strides = [1, 1]} : vector<4x49xf32> to vector<4x1xf32>
    %384 = vector.broadcast %383 : vector<4x1xf32> to vector<4x256xf32>
    %385 = arith.mulf %382, %384 : vector<4x256xf32>
    %386 = arith.addf %366, %385 : vector<4x256xf32>
    %c224_i32 = arith.constant 224 : i32
    %387 = tpu.dynamic_rotate %1 by %c224_i32 dim 1 : vector<4x256xf32>, i32 -> vector<4x256xf32>
    %388 = vector.extract_strided_slice %3 {offsets = [5, 0], sizes = [1, 256], strides = [1, 1]} : vector<14x256xf32> to vector<1x256xf32>
    %389 = vector.extract_strided_slice %3 {offsets = [10, 0], sizes = [1, 256], strides = [1, 1]} : vector<14x256xf32> to vector<1x256xf32>
    %390 = arith.mulf %388, %389 : vector<1x256xf32>
    %391 = vector.broadcast %390 : vector<1x256xf32> to vector<4x256xf32>
    %392 = arith.mulf %387, %391 : vector<4x256xf32>
    %393 = vector.extract_strided_slice %2 {offsets = [0, 38], sizes = [4, 1], strides = [1, 1]} : vector<4x49xf32> to vector<4x1xf32>
    %394 = vector.broadcast %393 : vector<4x1xf32> to vector<4x256xf32>
    %395 = arith.mulf %392, %394 : vector<4x256xf32>
    %396 = arith.addf %376, %395 : vector<4x256xf32>
    %c223_i32 = arith.constant 223 : i32
    %397 = tpu.dynamic_rotate %1 by %c223_i32 dim 1 : vector<4x256xf32>, i32 -> vector<4x256xf32>
    %398 = vector.extract_strided_slice %3 {offsets = [5, 0], sizes = [1, 256], strides = [1, 1]} : vector<14x256xf32> to vector<1x256xf32>
    %399 = vector.extract_strided_slice %3 {offsets = [11, 0], sizes = [1, 256], strides = [1, 1]} : vector<14x256xf32> to vector<1x256xf32>
    %400 = arith.mulf %398, %399 : vector<1x256xf32>
    %401 = vector.broadcast %400 : vector<1x256xf32> to vector<4x256xf32>
    %402 = arith.mulf %397, %401 : vector<4x256xf32>
    %403 = vector.extract_strided_slice %2 {offsets = [0, 39], sizes = [4, 1], strides = [1, 1]} : vector<4x49xf32> to vector<4x1xf32>
    %404 = vector.broadcast %403 : vector<4x1xf32> to vector<4x256xf32>
    %405 = arith.mulf %402, %404 : vector<4x256xf32>
    %406 = arith.addf %386, %405 : vector<4x256xf32>
    %c222_i32 = arith.constant 222 : i32
    %407 = tpu.dynamic_rotate %1 by %c222_i32 dim 1 : vector<4x256xf32>, i32 -> vector<4x256xf32>
    %408 = vector.extract_strided_slice %3 {offsets = [5, 0], sizes = [1, 256], strides = [1, 1]} : vector<14x256xf32> to vector<1x256xf32>
    %409 = vector.extract_strided_slice %3 {offsets = [12, 0], sizes = [1, 256], strides = [1, 1]} : vector<14x256xf32> to vector<1x256xf32>
    %410 = arith.mulf %408, %409 : vector<1x256xf32>
    %411 = vector.broadcast %410 : vector<1x256xf32> to vector<4x256xf32>
    %412 = arith.mulf %407, %411 : vector<4x256xf32>
    %413 = vector.extract_strided_slice %2 {offsets = [0, 40], sizes = [4, 1], strides = [1, 1]} : vector<4x49xf32> to vector<4x1xf32>
    %414 = vector.broadcast %413 : vector<4x1xf32> to vector<4x256xf32>
    %415 = arith.mulf %412, %414 : vector<4x256xf32>
    %416 = arith.addf %396, %415 : vector<4x256xf32>
    %c221_i32 = arith.constant 221 : i32
    %417 = tpu.dynamic_rotate %1 by %c221_i32 dim 1 : vector<4x256xf32>, i32 -> vector<4x256xf32>
    %418 = vector.extract_strided_slice %3 {offsets = [5, 0], sizes = [1, 256], strides = [1, 1]} : vector<14x256xf32> to vector<1x256xf32>
    %419 = vector.extract_strided_slice %3 {offsets = [13, 0], sizes = [1, 256], strides = [1, 1]} : vector<14x256xf32> to vector<1x256xf32>
    %420 = arith.mulf %418, %419 : vector<1x256xf32>
    %421 = vector.broadcast %420 : vector<1x256xf32> to vector<4x256xf32>
    %422 = arith.mulf %417, %421 : vector<4x256xf32>
    %423 = vector.extract_strided_slice %2 {offsets = [0, 41], sizes = [4, 1], strides = [1, 1]} : vector<4x49xf32> to vector<4x1xf32>
    %424 = vector.broadcast %423 : vector<4x1xf32> to vector<4x256xf32>
    %425 = arith.mulf %422, %424 : vector<4x256xf32>
    %426 = arith.addf %406, %425 : vector<4x256xf32>
    %c211_i32 = arith.constant 211 : i32
    %427 = tpu.dynamic_rotate %1 by %c211_i32 dim 1 : vector<4x256xf32>, i32 -> vector<4x256xf32>
    %428 = vector.extract_strided_slice %3 {offsets = [6, 0], sizes = [1, 256], strides = [1, 1]} : vector<14x256xf32> to vector<1x256xf32>
    %429 = vector.extract_strided_slice %3 {offsets = [7, 0], sizes = [1, 256], strides = [1, 1]} : vector<14x256xf32> to vector<1x256xf32>
    %430 = arith.mulf %428, %429 : vector<1x256xf32>
    %431 = vector.broadcast %430 : vector<1x256xf32> to vector<4x256xf32>
    %432 = arith.mulf %427, %431 : vector<4x256xf32>
    %433 = vector.extract_strided_slice %2 {offsets = [0, 42], sizes = [4, 1], strides = [1, 1]} : vector<4x49xf32> to vector<4x1xf32>
    %434 = vector.broadcast %433 : vector<4x1xf32> to vector<4x256xf32>
    %435 = arith.mulf %432, %434 : vector<4x256xf32>
    %436 = arith.addf %416, %435 : vector<4x256xf32>
    %c210_i32 = arith.constant 210 : i32
    %437 = tpu.dynamic_rotate %1 by %c210_i32 dim 1 : vector<4x256xf32>, i32 -> vector<4x256xf32>
    %438 = vector.extract_strided_slice %3 {offsets = [6, 0], sizes = [1, 256], strides = [1, 1]} : vector<14x256xf32> to vector<1x256xf32>
    %439 = vector.extract_strided_slice %3 {offsets = [8, 0], sizes = [1, 256], strides = [1, 1]} : vector<14x256xf32> to vector<1x256xf32>
    %440 = arith.mulf %438, %439 : vector<1x256xf32>
    %441 = vector.broadcast %440 : vector<1x256xf32> to vector<4x256xf32>
    %442 = arith.mulf %437, %441 : vector<4x256xf32>
    %443 = vector.extract_strided_slice %2 {offsets = [0, 43], sizes = [4, 1], strides = [1, 1]} : vector<4x49xf32> to vector<4x1xf32>
    %444 = vector.broadcast %443 : vector<4x1xf32> to vector<4x256xf32>
    %445 = arith.mulf %442, %444 : vector<4x256xf32>
    %446 = arith.addf %426, %445 : vector<4x256xf32>
    %c209_i32 = arith.constant 209 : i32
    %447 = tpu.dynamic_rotate %1 by %c209_i32 dim 1 : vector<4x256xf32>, i32 -> vector<4x256xf32>
    %448 = vector.extract_strided_slice %3 {offsets = [6, 0], sizes = [1, 256], strides = [1, 1]} : vector<14x256xf32> to vector<1x256xf32>
    %449 = vector.extract_strided_slice %3 {offsets = [9, 0], sizes = [1, 256], strides = [1, 1]} : vector<14x256xf32> to vector<1x256xf32>
    %450 = arith.mulf %448, %449 : vector<1x256xf32>
    %451 = vector.broadcast %450 : vector<1x256xf32> to vector<4x256xf32>
    %452 = arith.mulf %447, %451 : vector<4x256xf32>
    %453 = vector.extract_strided_slice %2 {offsets = [0, 44], sizes = [4, 1], strides = [1, 1]} : vector<4x49xf32> to vector<4x1xf32>
    %454 = vector.broadcast %453 : vector<4x1xf32> to vector<4x256xf32>
    %455 = arith.mulf %452, %454 : vector<4x256xf32>
    %456 = arith.addf %436, %455 : vector<4x256xf32>
    %c208_i32 = arith.constant 208 : i32
    %457 = tpu.dynamic_rotate %1 by %c208_i32 dim 1 : vector<4x256xf32>, i32 -> vector<4x256xf32>
    %458 = vector.extract_strided_slice %3 {offsets = [6, 0], sizes = [1, 256], strides = [1, 1]} : vector<14x256xf32> to vector<1x256xf32>
    %459 = vector.extract_strided_slice %3 {offsets = [10, 0], sizes = [1, 256], strides = [1, 1]} : vector<14x256xf32> to vector<1x256xf32>
    %460 = arith.mulf %458, %459 : vector<1x256xf32>
    %461 = vector.broadcast %460 : vector<1x256xf32> to vector<4x256xf32>
    %462 = arith.mulf %457, %461 : vector<4x256xf32>
    %463 = vector.extract_strided_slice %2 {offsets = [0, 45], sizes = [4, 1], strides = [1, 1]} : vector<4x49xf32> to vector<4x1xf32>
    %464 = vector.broadcast %463 : vector<4x1xf32> to vector<4x256xf32>
    %465 = arith.mulf %462, %464 : vector<4x256xf32>
    %466 = arith.addf %446, %465 : vector<4x256xf32>
    %c207_i32 = arith.constant 207 : i32
    %467 = tpu.dynamic_rotate %1 by %c207_i32 dim 1 : vector<4x256xf32>, i32 -> vector<4x256xf32>
    %468 = vector.extract_strided_slice %3 {offsets = [6, 0], sizes = [1, 256], strides = [1, 1]} : vector<14x256xf32> to vector<1x256xf32>
    %469 = vector.extract_strided_slice %3 {offsets = [11, 0], sizes = [1, 256], strides = [1, 1]} : vector<14x256xf32> to vector<1x256xf32>
    %470 = arith.mulf %468, %469 : vector<1x256xf32>
    %471 = vector.broadcast %470 : vector<1x256xf32> to vector<4x256xf32>
    %472 = arith.mulf %467, %471 : vector<4x256xf32>
    %473 = vector.extract_strided_slice %2 {offsets = [0, 46], sizes = [4, 1], strides = [1, 1]} : vector<4x49xf32> to vector<4x1xf32>
    %474 = vector.broadcast %473 : vector<4x1xf32> to vector<4x256xf32>
    %475 = arith.mulf %472, %474 : vector<4x256xf32>
    %476 = arith.addf %456, %475 : vector<4x256xf32>
    %c206_i32 = arith.constant 206 : i32
    %477 = tpu.dynamic_rotate %1 by %c206_i32 dim 1 : vector<4x256xf32>, i32 -> vector<4x256xf32>
    %478 = vector.extract_strided_slice %3 {offsets = [6, 0], sizes = [1, 256], strides = [1, 1]} : vector<14x256xf32> to vector<1x256xf32>
    %479 = vector.extract_strided_slice %3 {offsets = [12, 0], sizes = [1, 256], strides = [1, 1]} : vector<14x256xf32> to vector<1x256xf32>
    %480 = arith.mulf %478, %479 : vector<1x256xf32>
    %481 = vector.broadcast %480 : vector<1x256xf32> to vector<4x256xf32>
    %482 = arith.mulf %477, %481 : vector<4x256xf32>
    %483 = vector.extract_strided_slice %2 {offsets = [0, 47], sizes = [4, 1], strides = [1, 1]} : vector<4x49xf32> to vector<4x1xf32>
    %484 = vector.broadcast %483 : vector<4x1xf32> to vector<4x256xf32>
    %485 = arith.mulf %482, %484 : vector<4x256xf32>
    %486 = arith.addf %466, %485 : vector<4x256xf32>
    %c205_i32 = arith.constant 205 : i32
    %487 = tpu.dynamic_rotate %1 by %c205_i32 dim 1 : vector<4x256xf32>, i32 -> vector<4x256xf32>
    %488 = vector.extract_strided_slice %3 {offsets = [6, 0], sizes = [1, 256], strides = [1, 1]} : vector<14x256xf32> to vector<1x256xf32>
    %489 = vector.extract_strided_slice %3 {offsets = [13, 0], sizes = [1, 256], strides = [1, 1]} : vector<14x256xf32> to vector<1x256xf32>
    %490 = arith.mulf %488, %489 : vector<1x256xf32>
    %491 = vector.broadcast %490 : vector<1x256xf32> to vector<4x256xf32>
    %492 = arith.mulf %487, %491 : vector<4x256xf32>
    %493 = vector.extract_strided_slice %2 {offsets = [0, 48], sizes = [4, 1], strides = [1, 1]} : vector<4x49xf32> to vector<4x1xf32>
    %494 = vector.broadcast %493 : vector<4x1xf32> to vector<4x256xf32>
    %495 = arith.mulf %492, %494 : vector<4x256xf32>
    %496 = arith.addf %476, %495 : vector<4x256xf32>
    %497 = arith.addf %496, %486 : vector<4x256xf32>
    %cst_8 = arith.constant dense<0.000000e+00> : vector<256xf32>
    %498 = vector.multi_reduction <add>, %497, %cst_8 [0] : vector<4x256xf32> to vector<256xf32>
    %499 = vector.shape_cast %498 : vector<256xf32> to vector<1x256xf32>
    %cst_9 = arith.constant 2.500000e-01 : f32
    %500 = vector.broadcast %cst_9 : f32 to vector<1x256xf32>
    %501 = arith.mulf %499, %500 : vector<1x256xf32>
    %502 = arith.mulf %497, %497 : vector<4x256xf32>
    %cst_10 = arith.constant dense<0.000000e+00> : vector<256xf32>
    %503 = vector.multi_reduction <add>, %502, %cst_10 [0] : vector<4x256xf32> to vector<256xf32>
    %504 = vector.shape_cast %503 : vector<256xf32> to vector<1x256xf32>
    %cst_11 = arith.constant 2.500000e-01 : f32
    %505 = vector.broadcast %cst_11 : f32 to vector<1x256xf32>
    %506 = arith.mulf %504, %505 : vector<1x256xf32>
    %507 = arith.mulf %501, %501 : vector<1x256xf32>
    %508 = arith.subf %506, %507 : vector<1x256xf32>
    %cst_12 = arith.constant 9.99999997E-7 : f32
    %509 = vector.broadcast %cst_12 : f32 to vector<1x256xf32>
    %510 = arith.addf %508, %509 : vector<1x256xf32>
    %511 = math.rsqrt %510 : vector<1x256xf32>
    %512 = vector.broadcast %501 : vector<1x256xf32> to vector<4x256xf32>
    %513 = arith.subf %497, %512 : vector<4x256xf32>
    %514 = vector.broadcast %511 : vector<1x256xf32> to vector<4x256xf32>
    %515 = arith.mulf %513, %514 : vector<4x256xf32>
    %c0_13 = arith.constant 0 : index
    %c0_14 = arith.constant 0 : index
    %516 = vector.load %arg5[%c0_13, %c0_14] : memref<4x1xf32, #tpu.memory_space<vmem>>, vector<4x1xf32>
    %517 = vector.broadcast %516 : vector<4x1xf32> to vector<4x256xf32>
    %518 = arith.mulf %515, %517 : vector<4x256xf32>
    %c0_15 = arith.constant 0 : index
    %c0_16 = arith.constant 0 : index
    %519 = vector.load %arg6[%c0_15, %c0_16] : memref<4x1xf32, #tpu.memory_space<vmem>>, vector<4x1xf32>
    %520 = vector.broadcast %519 : vector<4x1xf32> to vector<4x256xf32>
    %521 = arith.addf %518, %520 : vector<4x256xf32>
    %c0_17 = arith.constant 0 : index
    %c0_18 = arith.constant 0 : index
    %522 = vector.load %arg7[%c0_17, %c0_18] : memref<16x4xf32, #tpu.memory_space<vmem>>, vector<16x4xf32>
    %c0_19 = arith.constant 0 : index
    %c0_20 = arith.constant 0 : index
    %523 = vector.load %arg8[%c0_19, %c0_20] : memref<16x1xf32, #tpu.memory_space<vmem>>, vector<16x1xf32>
    %524 = vector.shape_cast %523 : vector<16x1xf32> to vector<16x1xf32>
    %525 = vector.broadcast %524 : vector<16x1xf32> to vector<16x256xf32>
    %526 = vector.extract_strided_slice %522 {offsets = [0, 0], sizes = [16, 1], strides = [1, 1]} : vector<16x4xf32> to vector<16x1xf32>
    %527 = vector.extract_strided_slice %521 {offsets = [0, 0], sizes = [1, 256], strides = [1, 1]} : vector<4x256xf32> to vector<1x256xf32>
    %528 = vector.broadcast %526 : vector<16x1xf32> to vector<16x256xf32>
    %529 = vector.broadcast %527 : vector<1x256xf32> to vector<16x256xf32>
    %530 = arith.mulf %528, %529 : vector<16x256xf32>
    %531 = arith.addf %525, %530 : vector<16x256xf32>
    %532 = vector.extract_strided_slice %522 {offsets = [0, 1], sizes = [16, 1], strides = [1, 1]} : vector<16x4xf32> to vector<16x1xf32>
    %533 = vector.extract_strided_slice %521 {offsets = [1, 0], sizes = [1, 256], strides = [1, 1]} : vector<4x256xf32> to vector<1x256xf32>
    %534 = vector.broadcast %532 : vector<16x1xf32> to vector<16x256xf32>
    %535 = vector.broadcast %533 : vector<1x256xf32> to vector<16x256xf32>
    %536 = arith.mulf %534, %535 : vector<16x256xf32>
    %537 = arith.addf %531, %536 : vector<16x256xf32>
    %538 = vector.extract_strided_slice %522 {offsets = [0, 2], sizes = [16, 1], strides = [1, 1]} : vector<16x4xf32> to vector<16x1xf32>
    %539 = vector.extract_strided_slice %521 {offsets = [2, 0], sizes = [1, 256], strides = [1, 1]} : vector<4x256xf32> to vector<1x256xf32>
    %540 = vector.broadcast %538 : vector<16x1xf32> to vector<16x256xf32>
    %541 = vector.broadcast %539 : vector<1x256xf32> to vector<16x256xf32>
    %542 = arith.mulf %540, %541 : vector<16x256xf32>
    %543 = arith.addf %537, %542 : vector<16x256xf32>
    %544 = vector.extract_strided_slice %522 {offsets = [0, 3], sizes = [16, 1], strides = [1, 1]} : vector<16x4xf32> to vector<16x1xf32>
    %545 = vector.extract_strided_slice %521 {offsets = [3, 0], sizes = [1, 256], strides = [1, 1]} : vector<4x256xf32> to vector<1x256xf32>
    %546 = vector.broadcast %544 : vector<16x1xf32> to vector<16x256xf32>
    %547 = vector.broadcast %545 : vector<1x256xf32> to vector<16x256xf32>
    %548 = arith.mulf %546, %547 : vector<16x256xf32>
    %549 = arith.addf %543, %548 : vector<16x256xf32>
    %cst_21 = arith.constant 5.000000e-01 : f32
    %550 = vector.broadcast %cst_21 : f32 to vector<16x256xf32>
    %551 = arith.mulf %550, %549 : vector<16x256xf32>
    %552 = arith.mulf %549, %549 : vector<16x256xf32>
    %553 = arith.mulf %552, %549 : vector<16x256xf32>
    %cst_22 = arith.constant 4.471500e-02 : f32
    %554 = vector.broadcast %cst_22 : f32 to vector<16x256xf32>
    %555 = arith.mulf %554, %553 : vector<16x256xf32>
    %556 = arith.addf %549, %555 : vector<16x256xf32>
    %cst_23 = arith.constant 0.797884583 : f32
    %557 = vector.broadcast %cst_23 : f32 to vector<16x256xf32>
    %558 = arith.mulf %557, %556 : vector<16x256xf32>
    %559 = math.tanh %558 : vector<16x256xf32>
    %cst_24 = arith.constant 1.000000e+00 : f32
    %560 = vector.broadcast %cst_24 : f32 to vector<16x256xf32>
    %561 = arith.addf %560, %559 : vector<16x256xf32>
    %562 = arith.mulf %551, %561 : vector<16x256xf32>
    %c0_25 = arith.constant 0 : index
    %c0_26 = arith.constant 0 : index
    %563 = vector.load %arg9[%c0_25, %c0_26] : memref<4x16xf32, #tpu.memory_space<vmem>>, vector<4x16xf32>
    %c0_27 = arith.constant 0 : index
    %c0_28 = arith.constant 0 : index
    %564 = vector.load %arg10[%c0_27, %c0_28] : memref<4x1xf32, #tpu.memory_space<vmem>>, vector<4x1xf32>
    %565 = vector.shape_cast %564 : vector<4x1xf32> to vector<4x1xf32>
    %566 = vector.broadcast %565 : vector<4x1xf32> to vector<4x256xf32>
    %567 = vector.extract_strided_slice %563 {offsets = [0, 0], sizes = [4, 1], strides = [1, 1]} : vector<4x16xf32> to vector<4x1xf32>
    %568 = vector.extract_strided_slice %562 {offsets = [0, 0], sizes = [1, 256], strides = [1, 1]} : vector<16x256xf32> to vector<1x256xf32>
    %569 = vector.broadcast %567 : vector<4x1xf32> to vector<4x256xf32>
    %570 = vector.broadcast %568 : vector<1x256xf32> to vector<4x256xf32>
    %571 = arith.mulf %569, %570 : vector<4x256xf32>
    %572 = arith.addf %566, %571 : vector<4x256xf32>
    %573 = vector.extract_strided_slice %563 {offsets = [0, 1], sizes = [4, 1], strides = [1, 1]} : vector<4x16xf32> to vector<4x1xf32>
    %574 = vector.extract_strided_slice %562 {offsets = [1, 0], sizes = [1, 256], strides = [1, 1]} : vector<16x256xf32> to vector<1x256xf32>
    %575 = vector.broadcast %573 : vector<4x1xf32> to vector<4x256xf32>
    %576 = vector.broadcast %574 : vector<1x256xf32> to vector<4x256xf32>
    %577 = arith.mulf %575, %576 : vector<4x256xf32>
    %578 = arith.addf %572, %577 : vector<4x256xf32>
    %579 = vector.extract_strided_slice %563 {offsets = [0, 2], sizes = [4, 1], strides = [1, 1]} : vector<4x16xf32> to vector<4x1xf32>
    %580 = vector.extract_strided_slice %562 {offsets = [2, 0], sizes = [1, 256], strides = [1, 1]} : vector<16x256xf32> to vector<1x256xf32>
    %581 = vector.broadcast %579 : vector<4x1xf32> to vector<4x256xf32>
    %582 = vector.broadcast %580 : vector<1x256xf32> to vector<4x256xf32>
    %583 = arith.mulf %581, %582 : vector<4x256xf32>
    %584 = arith.addf %578, %583 : vector<4x256xf32>
    %585 = vector.extract_strided_slice %563 {offsets = [0, 3], sizes = [4, 1], strides = [1, 1]} : vector<4x16xf32> to vector<4x1xf32>
    %586 = vector.extract_strided_slice %562 {offsets = [3, 0], sizes = [1, 256], strides = [1, 1]} : vector<16x256xf32> to vector<1x256xf32>
    %587 = vector.broadcast %585 : vector<4x1xf32> to vector<4x256xf32>
    %588 = vector.broadcast %586 : vector<1x256xf32> to vector<4x256xf32>
    %589 = arith.mulf %587, %588 : vector<4x256xf32>
    %590 = arith.addf %584, %589 : vector<4x256xf32>
    %591 = vector.extract_strided_slice %563 {offsets = [0, 4], sizes = [4, 1], strides = [1, 1]} : vector<4x16xf32> to vector<4x1xf32>
    %592 = vector.extract_strided_slice %562 {offsets = [4, 0], sizes = [1, 256], strides = [1, 1]} : vector<16x256xf32> to vector<1x256xf32>
    %593 = vector.broadcast %591 : vector<4x1xf32> to vector<4x256xf32>
    %594 = vector.broadcast %592 : vector<1x256xf32> to vector<4x256xf32>
    %595 = arith.mulf %593, %594 : vector<4x256xf32>
    %596 = arith.addf %590, %595 : vector<4x256xf32>
    %597 = vector.extract_strided_slice %563 {offsets = [0, 5], sizes = [4, 1], strides = [1, 1]} : vector<4x16xf32> to vector<4x1xf32>
    %598 = vector.extract_strided_slice %562 {offsets = [5, 0], sizes = [1, 256], strides = [1, 1]} : vector<16x256xf32> to vector<1x256xf32>
    %599 = vector.broadcast %597 : vector<4x1xf32> to vector<4x256xf32>
    %600 = vector.broadcast %598 : vector<1x256xf32> to vector<4x256xf32>
    %601 = arith.mulf %599, %600 : vector<4x256xf32>
    %602 = arith.addf %596, %601 : vector<4x256xf32>
    %603 = vector.extract_strided_slice %563 {offsets = [0, 6], sizes = [4, 1], strides = [1, 1]} : vector<4x16xf32> to vector<4x1xf32>
    %604 = vector.extract_strided_slice %562 {offsets = [6, 0], sizes = [1, 256], strides = [1, 1]} : vector<16x256xf32> to vector<1x256xf32>
    %605 = vector.broadcast %603 : vector<4x1xf32> to vector<4x256xf32>
    %606 = vector.broadcast %604 : vector<1x256xf32> to vector<4x256xf32>
    %607 = arith.mulf %605, %606 : vector<4x256xf32>
    %608 = arith.addf %602, %607 : vector<4x256xf32>
    %609 = vector.extract_strided_slice %563 {offsets = [0, 7], sizes = [4, 1], strides = [1, 1]} : vector<4x16xf32> to vector<4x1xf32>
    %610 = vector.extract_strided_slice %562 {offsets = [7, 0], sizes = [1, 256], strides = [1, 1]} : vector<16x256xf32> to vector<1x256xf32>
    %611 = vector.broadcast %609 : vector<4x1xf32> to vector<4x256xf32>
    %612 = vector.broadcast %610 : vector<1x256xf32> to vector<4x256xf32>
    %613 = arith.mulf %611, %612 : vector<4x256xf32>
    %614 = arith.addf %608, %613 : vector<4x256xf32>
    %615 = vector.extract_strided_slice %563 {offsets = [0, 8], sizes = [4, 1], strides = [1, 1]} : vector<4x16xf32> to vector<4x1xf32>
    %616 = vector.extract_strided_slice %562 {offsets = [8, 0], sizes = [1, 256], strides = [1, 1]} : vector<16x256xf32> to vector<1x256xf32>
    %617 = vector.broadcast %615 : vector<4x1xf32> to vector<4x256xf32>
    %618 = vector.broadcast %616 : vector<1x256xf32> to vector<4x256xf32>
    %619 = arith.mulf %617, %618 : vector<4x256xf32>
    %620 = arith.addf %614, %619 : vector<4x256xf32>
    %621 = vector.extract_strided_slice %563 {offsets = [0, 9], sizes = [4, 1], strides = [1, 1]} : vector<4x16xf32> to vector<4x1xf32>
    %622 = vector.extract_strided_slice %562 {offsets = [9, 0], sizes = [1, 256], strides = [1, 1]} : vector<16x256xf32> to vector<1x256xf32>
    %623 = vector.broadcast %621 : vector<4x1xf32> to vector<4x256xf32>
    %624 = vector.broadcast %622 : vector<1x256xf32> to vector<4x256xf32>
    %625 = arith.mulf %623, %624 : vector<4x256xf32>
    %626 = arith.addf %620, %625 : vector<4x256xf32>
    %627 = vector.extract_strided_slice %563 {offsets = [0, 10], sizes = [4, 1], strides = [1, 1]} : vector<4x16xf32> to vector<4x1xf32>
    %628 = vector.extract_strided_slice %562 {offsets = [10, 0], sizes = [1, 256], strides = [1, 1]} : vector<16x256xf32> to vector<1x256xf32>
    %629 = vector.broadcast %627 : vector<4x1xf32> to vector<4x256xf32>
    %630 = vector.broadcast %628 : vector<1x256xf32> to vector<4x256xf32>
    %631 = arith.mulf %629, %630 : vector<4x256xf32>
    %632 = arith.addf %626, %631 : vector<4x256xf32>
    %633 = vector.extract_strided_slice %563 {offsets = [0, 11], sizes = [4, 1], strides = [1, 1]} : vector<4x16xf32> to vector<4x1xf32>
    %634 = vector.extract_strided_slice %562 {offsets = [11, 0], sizes = [1, 256], strides = [1, 1]} : vector<16x256xf32> to vector<1x256xf32>
    %635 = vector.broadcast %633 : vector<4x1xf32> to vector<4x256xf32>
    %636 = vector.broadcast %634 : vector<1x256xf32> to vector<4x256xf32>
    %637 = arith.mulf %635, %636 : vector<4x256xf32>
    %638 = arith.addf %632, %637 : vector<4x256xf32>
    %639 = vector.extract_strided_slice %563 {offsets = [0, 12], sizes = [4, 1], strides = [1, 1]} : vector<4x16xf32> to vector<4x1xf32>
    %640 = vector.extract_strided_slice %562 {offsets = [12, 0], sizes = [1, 256], strides = [1, 1]} : vector<16x256xf32> to vector<1x256xf32>
    %641 = vector.broadcast %639 : vector<4x1xf32> to vector<4x256xf32>
    %642 = vector.broadcast %640 : vector<1x256xf32> to vector<4x256xf32>
    %643 = arith.mulf %641, %642 : vector<4x256xf32>
    %644 = arith.addf %638, %643 : vector<4x256xf32>
    %645 = vector.extract_strided_slice %563 {offsets = [0, 13], sizes = [4, 1], strides = [1, 1]} : vector<4x16xf32> to vector<4x1xf32>
    %646 = vector.extract_strided_slice %562 {offsets = [13, 0], sizes = [1, 256], strides = [1, 1]} : vector<16x256xf32> to vector<1x256xf32>
    %647 = vector.broadcast %645 : vector<4x1xf32> to vector<4x256xf32>
    %648 = vector.broadcast %646 : vector<1x256xf32> to vector<4x256xf32>
    %649 = arith.mulf %647, %648 : vector<4x256xf32>
    %650 = arith.addf %644, %649 : vector<4x256xf32>
    %651 = vector.extract_strided_slice %563 {offsets = [0, 14], sizes = [4, 1], strides = [1, 1]} : vector<4x16xf32> to vector<4x1xf32>
    %652 = vector.extract_strided_slice %562 {offsets = [14, 0], sizes = [1, 256], strides = [1, 1]} : vector<16x256xf32> to vector<1x256xf32>
    %653 = vector.broadcast %651 : vector<4x1xf32> to vector<4x256xf32>
    %654 = vector.broadcast %652 : vector<1x256xf32> to vector<4x256xf32>
    %655 = arith.mulf %653, %654 : vector<4x256xf32>
    %656 = arith.addf %650, %655 : vector<4x256xf32>
    %657 = vector.extract_strided_slice %563 {offsets = [0, 15], sizes = [4, 1], strides = [1, 1]} : vector<4x16xf32> to vector<4x1xf32>
    %658 = vector.extract_strided_slice %562 {offsets = [15, 0], sizes = [1, 256], strides = [1, 1]} : vector<16x256xf32> to vector<1x256xf32>
    %659 = vector.broadcast %657 : vector<4x1xf32> to vector<4x256xf32>
    %660 = vector.broadcast %658 : vector<1x256xf32> to vector<4x256xf32>
    %661 = arith.mulf %659, %660 : vector<4x256xf32>
    %662 = arith.addf %656, %661 : vector<4x256xf32>
    %c0_29 = arith.constant 0 : index
    %c0_30 = arith.constant 0 : index
    %663 = vector.load %arg11[%c0_29, %c0_30] : memref<4x1xf32, #tpu.memory_space<vmem>>, vector<4x1xf32>
    %664 = vector.broadcast %663 : vector<4x1xf32> to vector<4x256xf32>
    %665 = arith.mulf %662, %664 : vector<4x256xf32>
    %666 = arith.addf %1, %665 : vector<4x256xf32>
    %c0_31 = arith.constant 0 : index
    %c0_32 = arith.constant 0 : index
    %c0_33 = arith.constant 0 : index
    %667 = vector.load %arg12[%c0_31, %c0_32, %c0_33] : memref<1x4x256xf32, #tpu.memory_space<vmem>>, vector<1x4x256xf32>
    %668 = vector.shape_cast %667 : vector<1x4x256xf32> to vector<4x256xf32>
    %669 = vector.shape_cast %666 : vector<4x256xf32> to vector<1x4x256xf32>
    tpu.vector_store %arg12[%c0_31, %c0_32, %c0_33], %669 {strides = array<i32>} : memref<1x4x256xf32, #tpu.memory_space<vmem>>, vector<1x4x256xf32>,
    return
  }
  func.func @transform_0(%arg0: i32) -> (i32, i32, i32) {
    %c0_i32 = arith.constant 0 : i32
    %c0_i32_0 = arith.constant 0 : i32
    %c0_i32_1 = arith.constant 0 : i32
    return %arg0, %c0_i32, %c0_i32_0 : i32, i32, i32
  }
  func.func @transform_1(%arg0: i32) -> (i32, i32) {
    %c0_i32 = arith.constant 0 : i32
    %c0_i32_0 = arith.constant 0 : i32
    %c0_i32_1 = arith.constant 0 : i32
    return %c0_i32, %c0_i32_0 : i32, i32
  }
  func.func @transform_2(%arg0: i32) -> (i32, i32) {
    %c0_i32 = arith.constant 0 : i32
    %c0_i32_0 = arith.constant 0 : i32
    %c0_i32_1 = arith.constant 0 : i32
    return %c0_i32, %c0_i32_0 : i32, i32
  }
  func.func @transform_3(%arg0: i32) -> (i32, i32) {
    %c0_i32 = arith.constant 0 : i32
    %c0_i32_0 = arith.constant 0 : i32
    %c0_i32_1 = arith.constant 0 : i32
    return %c0_i32, %c0_i32_0 : i32, i32
  }
  func.func @transform_4(%arg0: i32) -> (i32, i32) {
    %c0_i32 = arith.constant 0 : i32
    %c0_i32_0 = arith.constant 0 : i32
    %c0_i32_1 = arith.constant 0 : i32
    return %c0_i32, %c0_i32_0 : i32, i32
  }
  func.func @transform_5(%arg0: i32) -> (i32, i32) {
    %c0_i32 = arith.constant 0 : i32
    %c0_i32_0 = arith.constant 0 : i32
    %c0_i32_1 = arith.constant 0 : i32
    return %c0_i32, %c0_i32_0 : i32, i32
  }
  func.func @transform_6(%arg0: i32) -> (i32, i32) {
    %c0_i32 = arith.constant 0 : i32
    %c0_i32_0 = arith.constant 0 : i32
    %c0_i32_1 = arith.constant 0 : i32
    return %c0_i32, %c0_i32_0 : i32, i32
  }
  func.func @transform_7(%arg0: i32) -> (i32, i32) {
    %c0_i32 = arith.constant 0 : i32
    %c0_i32_0 = arith.constant 0 : i32
    %c0_i32_1 = arith.constant 0 : i32
    return %c0_i32, %c0_i32_0 : i32, i32
  }
  func.func @transform_8(%arg0: i32) -> (i32, i32) {
    %c0_i32 = arith.constant 0 : i32
    %c0_i32_0 = arith.constant 0 : i32
    %c0_i32_1 = arith.constant 0 : i32
    return %c0_i32, %c0_i32_0 : i32, i32
  }
  func.func @transform_9(%arg0: i32) -> (i32, i32) {
    %c0_i32 = arith.constant 0 : i32
    %c0_i32_0 = arith.constant 0 : i32
    %c0_i32_1 = arith.constant 0 : i32
    return %c0_i32, %c0_i32_0 : i32, i32
  }
  func.func @transform_10(%arg0: i32) -> (i32, i32) {
    %c0_i32 = arith.constant 0 : i32
    %c0_i32_0 = arith.constant 0 : i32
    %c0_i32_1 = arith.constant 0 : i32
    return %c0_i32, %c0_i32_0 : i32, i32
  }
  func.func @transform_11(%arg0: i32) -> (i32, i32, i32) {
    %c0_i32 = arith.constant 0 : i32
    %c0_i32_0 = arith.constant 0 : i32
    %c0_i32_1 = arith.constant 0 : i32
    return %arg0, %c0_i32, %c0_i32_0 : i32, i32, i32
  }
}

</mosaic_0001>

<llo_original>
// kernel: tpu_custom_call.1
$region0: #{tpu_custom_call.1}
  #allocation0 [shape = 'u32[]', space=smem, size = 0x4, offset = 0x4, fixed_abs, tag = 'smem constant byte address 0x4 - core index']
  #allocation1 [shape = 'u32[144,128]{1,0:T(1,128)}', space=vmem, size = 0x12000, scoped, tag = 'internal scratch']
  %s0 = inlined_call_operand.vmem [shape: f32[2,4,256], index: 0, kind: input, shape index: {}]
  %s1 = inlined_call_operand.vmem [shape: f32[14,256], index: 1, kind: input, shape index: {}]
  %s2 = inlined_call_operand.vmem [shape: f32[4,49], index: 2, kind: input, shape index: {}]
  %s3 = inlined_call_operand.vmem [shape: f32[4,1], index: 3, kind: input, shape index: {}]
  %s4 = inlined_call_operand.vmem [shape: f32[4,1], index: 4, kind: input, shape index: {}]
  %s5 = inlined_call_operand.vmem [shape: f32[4,1], index: 5, kind: input, shape index: {}]
  %s6 = inlined_call_operand.vmem [shape: f32[16,4], index: 6, kind: input, shape index: {}]
  %s7 = inlined_call_operand.vmem [shape: f32[16,1], index: 7, kind: input, shape index: {}]
  %s8 = inlined_call_operand.vmem [shape: f32[4,16], index: 8, kind: input, shape index: {}]
  %s9 = inlined_call_operand.vmem [shape: f32[4,1], index: 9, kind: input, shape index: {}]
  %s10 = inlined_call_operand.vmem [shape: f32[4,1], index: 10, kind: input, shape index: {}]
  %s11 = inlined_call_operand.hbm [shape: f32[2,4,256], index: 11, kind: output, shape index: {}]
  %s12 = sld [smem:[#allocation0]]
  $region77: #{tpu_custom_call.1} parent=0
    _
  %s14 = ssub.s32 1, %s12
  %s15 = scalar_select 0, %s14, %s12
  $region1: #{tpu_custom_call.1} parent=0
    #allocation2 [shape = 'u8[8192]{0}', space=vmem, size = 0x2000, scoped, tag = 'output window, operand 0']
    #allocation3 [shape = 's32[2]{0}', space=sflag, size = 0x8, scoped, tag = 'scoped memory for tpu_custom_call.1']
    %16 = vsyncpa [#allocation3], 0
    %s17 = scalar_lea.sflag [#allocation3], 1
    %18 = vsyncpa %s17, 0
    loop: start=0, step=1, limit=4
    $region2: #{tpu_custom_call.1} parent=1 // loop_pre_header
      _
    $region3: #{tpu_custom_call.1} parent=1 // loop_header
      %s20 = sphi 0, %s24
      %p21 = scmp.ge.s32.totalorder %s20, 4
      %s30 = sphi 0, %s32
      %s33 = sphi 0, %s30
      %s34 = sphi 0, %s33
      %s50 = sphi 0, %s34
      %s54 = sphi 0, %s54
      %s56 = sphi 0, %s54
      %s57 = sphi 0, %s56
      %s71 = sphi 0, %s57
      %s75 = sphi 0, %s75
      %s77 = sphi 0, %s75
      %s78 = sphi 0, %s77
      %s92 = sphi 0, %s78
      %s96 = sphi 0, %s96
      %s98 = sphi 0, %s96
      %s99 = sphi 0, %s98
      %s113 = sphi 0, %s99
      %s117 = sphi 0, %s117
      %s119 = sphi 0, %s117
      %s120 = sphi 0, %s119
      %s134 = sphi 0, %s120
      %s138 = sphi 0, %s138
      %s140 = sphi 0, %s138
      %s141 = sphi 0, %s140
      %s155 = sphi 0, %s141
      %s159 = sphi 0, %s159
      %s161 = sphi 0, %s159
      %s162 = sphi 0, %s161
      %s176 = sphi 0, %s162
      %s180 = sphi 0, %s180
      %s182 = sphi 0, %s180
      %s183 = sphi 0, %s182
      %s197 = sphi 0, %s183
      %s201 = sphi 0, %s201
      %s203 = sphi 0, %s201
      %s204 = sphi 0, %s203
      %s218 = sphi 0, %s204
      %s222 = sphi 0, %s222
      %s224 = sphi 0, %s222
      %s225 = sphi 0, %s224
      %s239 = sphi 0, %s225
      %s243 = sphi 0, %s243
      %s245 = sphi 0, %s243
      %s246 = sphi 0, %s245
      %s260 = sphi 0, %s246
      %s266 = sphi 0, %s268
      %s269 = sphi 0, %s266
      %s270 = sphi 0, %s269
      %s286 = sphi 0, %s270
    $region4: #{tpu_custom_call.1} parent=1 // loop_header_branch
      %23 = sbr.rel (%p21) target = $region8
    $region5: #{tpu_custom_call.1} parent=1 // loop_body
      %s25 = ssub.s32 %s20, 1
      %s26 = ssub.s32 %s20, 2
      %s27 = sadd.s32 %s20, 1
      %s28 = ssub.s32 %s20, %s27
      %p29 = scmp.eq.s32.totalorder %s28, 0
      %s31 = sadd.s32 %s30, 1
      %s32 = scalar_select %p29, %s30, %s31
      %p35 = pneg %p29
      %p36 = scmp.eq.s32.totalorder %s20, 1
      %p37 = por %p35, %p36
      %p38 = scmp.ne.s32.totalorder %s30, %s33
      %p39 = scmp.eq.s32.totalorder %s20, 0
      %p40 = por %p38, %p39
      %p41 = scmp.ne.s32.totalorder %s30, %s33
      %p42 = scmp.eq.s32.totalorder %s25, 1
      %p43 = por %p41, %p42
      %p44 = scmp.ne.s32.totalorder %s33, %s34
      %p45 = scmp.eq.s32.totalorder %s25, 0
      %p46 = por %p44, %p45
      %p47 = scmp.ne.s32.totalorder %s33, %s34
      %p48 = scmp.eq.s32.totalorder %s26, 1
      %p49 = por %p47, %p48
      %p51 = scmp.ne.s32.totalorder %s34, %s50
      %p52 = scmp.eq.s32.totalorder %s26, 0
      %p53 = por %p51, %p52
      %s55 = sadd.s32 %s54, 1
      %p58 = scmp.eq.s32.totalorder %s20, 1
      %p59 = scmp.ne.s32.totalorder %s54, %s56
      %p60 = scmp.eq.s32.totalorder %s20, 0
      %p61 = por %p59, %p60
      %p62 = scmp.ne.s32.totalorder %s54, %s56
      %p63 = scmp.eq.s32.totalorder %s25, 1
      %p64 = por %p62, %p63
      %p65 = scmp.ne.s32.totalorder %s56, %s57
      %p66 = scmp.eq.s32.totalorder %s25, 0
      %p67 = por %p65, %p66
      %p68 = scmp.ne.s32.totalorder %s56, %s57
      %p69 = scmp.eq.s32.totalorder %s26, 1
      %p70 = por %p68, %p69
      %p72 = scmp.ne.s32.totalorder %s57, %s71
      %p73 = scmp.eq.s32.totalorder %s26, 0
      %p74 = por %p72, %p73
      %s76 = sadd.s32 %s75, 1
      %p79 = scmp.eq.s32.totalorder %s20, 1
      %p80 = scmp.ne.s32.totalorder %s75, %s77
      %p81 = scmp.eq.s32.totalorder %s20, 0
      %p82 = por %p80, %p81
      %p83 = scmp.ne.s32.totalorder %s75, %s77
      %p84 = scmp.eq.s32.totalorder %s25, 1
      %p85 = por %p83, %p84
      %p86 = scmp.ne.s32.totalorder %s77, %s78
      %p87 = scmp.eq.s32.totalorder %s25, 0
      %p88 = por %p86, %p87
      %p89 = scmp.ne.s32.totalorder %s77, %s78
      %p90 = scmp.eq.s32.totalorder %s26, 1
      %p91 = por %p89, %p90
      %p93 = scmp.ne.s32.totalorder %s78, %s92
      %p94 = scmp.eq.s32.totalorder %s26, 0
      %p95 = por %p93, %p94
      %s97 = sadd.s32 %s96, 1
      %p100 = scmp.eq.s32.totalorder %s20, 1
      %p101 = scmp.ne.s32.totalorder %s96, %s98
      %p102 = scmp.eq.s32.totalorder %s20, 0
      %p103 = por %p101, %p102
      %p104 = scmp.ne.s32.totalorder %s96, %s98
      %p105 = scmp.eq.s32.totalorder %s25, 1
      %p106 = por %p104, %p105
      %p107 = scmp.ne.s32.totalorder %s98, %s99
      %p108 = scmp.eq.s32.totalorder %s25, 0
      %p109 = por %p107, %p108
      %p110 = scmp.ne.s32.totalorder %s98, %s99
      %p111 = scmp.eq.s32.totalorder %s26, 1
      %p112 = por %p110, %p111
      %p114 = scmp.ne.s32.totalorder %s99, %s113
      %p115 = scmp.eq.s32.totalorder %s26, 0
      %p116 = por %p114, %p115
      %s118 = sadd.s32 %s117, 1
      %p121 = scmp.eq.s32.totalorder %s20, 1
      %p122 = scmp.ne.s32.totalorder %s117, %s119
      %p123 = scmp.eq.s32.totalorder %s20, 0
      %p124 = por %p122, %p123
      %p125 = scmp.ne.s32.totalorder %s117, %s119
      %p126 = scmp.eq.s32.totalorder %s25, 1
      %p127 = por %p125, %p126
      %p128 = scmp.ne.s32.totalorder %s119, %s120
      %p129 = scmp.eq.s32.totalorder %s25, 0
      %p130 = por %p128, %p129
      %p131 = scmp.ne.s32.totalorder %s119, %s120
      %p132 = scmp.eq.s32.totalorder %s26, 1
      %p133 = por %p131, %p132
      %p135 = scmp.ne.s32.totalorder %s120, %s134
      %p136 = scmp.eq.s32.totalorder %s26, 0
      %p137 = por %p135, %p136
      %s139 = sadd.s32 %s138, 1
      %p142 = scmp.eq.s32.totalorder %s20, 1
      %p143 = scmp.ne.s32.totalorder %s138, %s140
      %p144 = scmp.eq.s32.totalorder %s20, 0
      %p145 = por %p143, %p144
      %p146 = scmp.ne.s32.totalorder %s138, %s140
      %p147 = scmp.eq.s32.totalorder %s25, 1
      %p148 = por %p146, %p147
      %p149 = scmp.ne.s32.totalorder %s140, %s141
      %p150 = scmp.eq.s32.totalorder %s25, 0
      %p151 = por %p149, %p150
      %p152 = scmp.ne.s32.totalorder %s140, %s141
      %p153 = scmp.eq.s32.totalorder %s26, 1
      %p154 = por %p152, %p153
      %p156 = scmp.ne.s32.totalorder %s141, %s155
      %p157 = scmp.eq.s32.totalorder %s26, 0
      %p158 = por %p156, %p157
      %s160 = sadd.s32 %s159, 1
      %p163 = scmp.eq.s32.totalorder %s20, 1
      %p164 = scmp.ne.s32.totalorder %s159, %s161
      %p165 = scmp.eq.s32.totalorder %s20, 0
      %p166 = por %p164, %p165
      %p167 = scmp.ne.s32.totalorder %s159, %s161
      %p168 = scmp.eq.s32.totalorder %s25, 1
      %p169 = por %p167, %p168
      %p170 = scmp.ne.s32.totalorder %s161, %s162
      %p171 = scmp.eq.s32.totalorder %s25, 0
      %p172 = por %p170, %p171
      %p173 = scmp.ne.s32.totalorder %s161, %s162
      %p174 = scmp.eq.s32.totalorder %s26, 1
      %p175 = por %p173, %p174
      %p177 = scmp.ne.s32.totalorder %s162, %s176
      %p178 = scmp.eq.s32.totalorder %s26, 0
      %p179 = por %p177, %p178
      %s181 = sadd.s32 %s180, 1
      %p184 = scmp.eq.s32.totalorder %s20, 1
      %p185 = scmp.ne.s32.totalorder %s180, %s182
      %p186 = scmp.eq.s32.totalorder %s20, 0
      %p187 = por %p185, %p186
      %p188 = scmp.ne.s32.totalorder %s180, %s182
      %p189 = scmp.eq.s32.totalorder %s25, 1
      %p190 = por %p188, %p189
      %p191 = scmp.ne.s32.totalorder %s182, %s183
      %p192 = scmp.eq.s32.totalorder %s25, 0
      %p193 = por %p191, %p192
      %p194 = scmp.ne.s32.totalorder %s182, %s183
      %p195 = scmp.eq.s32.totalorder %s26, 1
      %p196 = por %p194, %p195
      %p198 = scmp.ne.s32.totalorder %s183, %s197
      %p199 = scmp.eq.s32.totalorder %s26, 0
      %p200 = por %p198, %p199
      %s202 = sadd.s32 %s201, 1
      %p205 = scmp.eq.s32.totalorder %s20, 1
      %p206 = scmp.ne.s32.totalorder %s201, %s203
      %p207 = scmp.eq.s32.totalorder %s20, 0
      %p208 = por %p206, %p207
      %p209 = scmp.ne.s32.totalorder %s201, %s203
      %p210 = scmp.eq.s32.totalorder %s25, 1
      %p211 = por %p209, %p210
      %p212 = scmp.ne.s32.totalorder %s203, %s204
      %p213 = scmp.eq.s32.totalorder %s25, 0
      %p214 = por %p212, %p213
      %p215 = scmp.ne.s32.totalorder %s203, %s204
      %p216 = scmp.eq.s32.totalorder %s26, 1
      %p217 = por %p215, %p216
      %p219 = scmp.ne.s32.totalorder %s204, %s218
      %p220 = scmp.eq.s32.totalorder %s26, 0
      %p221 = por %p219, %p220
      %s223 = sadd.s32 %s222, 1
      %p226 = scmp.eq.s32.totalorder %s20, 1
      %p227 = scmp.ne.s32.totalorder %s222, %s224
      %p228 = scmp.eq.s32.totalorder %s20, 0
      %p229 = por %p227, %p228
      %p230 = scmp.ne.s32.totalorder %s222, %s224
      %p231 = scmp.eq.s32.totalorder %s25, 1
      %p232 = por %p230, %p231
      %p233 = scmp.ne.s32.totalorder %s224, %s225
      %p234 = scmp.eq.s32.totalorder %s25, 0
      %p235 = por %p233, %p234
      %p236 = scmp.ne.s32.totalorder %s224, %s225
      %p237 = scmp.eq.s32.totalorder %s26, 1
      %p238 = por %p236, %p237
      %p240 = scmp.ne.s32.totalorder %s225, %s239
      %p241 = scmp.eq.s32.totalorder %s26, 0
      %p242 = por %p240, %p241
      %s244 = sadd.s32 %s243, 1
      %p247 = scmp.eq.s32.totalorder %s20, 1
      %p248 = scmp.ne.s32.totalorder %s243, %s245
      %p249 = scmp.eq.s32.totalorder %s20, 0
      %p250 = por %p248, %p249
      %p251 = scmp.ne.s32.totalorder %s243, %s245
      %p252 = scmp.eq.s32.totalorder %s25, 1
      %p253 = por %p251, %p252
      %p254 = scmp.ne.s32.totalorder %s245, %s246
      %p255 = scmp.eq.s32.totalorder %s25, 0
      %p256 = por %p254, %p255
      %p257 = scmp.ne.s32.totalorder %s245, %s246
      %p258 = scmp.eq.s32.totalorder %s26, 1
      %p259 = por %p257, %p258
      %p261 = scmp.ne.s32.totalorder %s246, %s260
      %p262 = scmp.eq.s32.totalorder %s26, 0
      %p263 = por %p261, %p262
      %s264 = ssub.s32 %s20, %s27
      %p265 = scmp.eq.s32.totalorder %s264, 0
      %s267 = sadd.s32 %s266, 1
      %s268 = scalar_select %p265, %s266, %s267
      %p271 = pneg %p265
      %p272 = scmp.eq.s32.totalorder %s20, 1
      %p273 = por %p271, %p272
      %p274 = scmp.ne.s32.totalorder %s266, %s269
      %p275 = scmp.eq.s32.totalorder %s20, 0
      %p276 = por %p274, %p275
      %p277 = scmp.ne.s32.totalorder %s266, %s269
      %p278 = scmp.eq.s32.totalorder %s25, 1
      %p279 = por %p277, %p278
      %p280 = scmp.ne.s32.totalorder %s269, %s270
      %p281 = scmp.eq.s32.totalorder %s25, 0
      %p282 = por %p280, %p281
      %p283 = scmp.ne.s32.totalorder %s269, %s270
      %p284 = scmp.eq.s32.totalorder %s26, 1
      %p285 = por %p283, %p284
      %p287 = scmp.ne.s32.totalorder %s270, %s286
      %p288 = scmp.eq.s32.totalorder %s26, 0
      %p289 = por %p287, %p288
      %p290 = scmp.le.s32.totalorder 1, %s20
      %p291 = scmp.lt.s32.totalorder %s20, 3
      %p292 = pnand %p290, %p291
      %p293 = pneg %p292
      // Predicated region
      $region9: #{tpu_custom_call.1} parent=5 // pred_check
        _
      $region10: #{tpu_custom_call.1} parent=5 // pred_check_branch
        %295 = sbr.rel (%p292) target = $region12
      $region11: #{tpu_custom_call.1} parent=5 // pred_region
        %s296 = ssub.s32 %s20, 1
        // Predicated region
        $region13: #{tpu_custom_call.1} parent=11 // pred_check
          %p297 = pneg %p67
        $region14: #{tpu_custom_call.1} parent=11 // pred_check_branch
          %299 = sbr.rel (%p297) target = $region16
        $region15: #{tpu_custom_call.1} parent=11 // pred_region
          _
        $region16: #{tpu_custom_call.1} parent=11 // pred_fallthru
          _
        // Predicated region
        $region17: #{tpu_custom_call.1} parent=11 // pred_check
          %p300 = pneg %p88
        $region18: #{tpu_custom_call.1} parent=11 // pred_check_branch
          %302 = sbr.rel (%p300) target = $region20
        $region19: #{tpu_custom_call.1} parent=11 // pred_region
          _
        $region20: #{tpu_custom_call.1} parent=11 // pred_fallthru
          _
        // Predicated region
        $region21: #{tpu_custom_call.1} parent=11 // pred_check
          %p303 = pneg %p109
        $region22: #{tpu_custom_call.1} parent=11 // pred_check_branch
          %305 = sbr.rel (%p303) target = $region24
        $region23: #{tpu_custom_call.1} parent=11 // pred_region
          _
        $region24: #{tpu_custom_call.1} parent=11 // pred_fallthru
          _
        // Predicated region
        $region25: #{tpu_custom_call.1} parent=11 // pred_check
          %p306 = pneg %p130
        $region26: #{tpu_custom_call.1} parent=11 // pred_check_branch
          %308 = sbr.rel (%p306) target = $region28
        $region27: #{tpu_custom_call.1} parent=11 // pred_region
          _
        $region28: #{tpu_custom_call.1} parent=11 // pred_fallthru
          _
        // Predicated region
        $region29: #{tpu_custom_call.1} parent=11 // pred_check
          %p309 = pneg %p151
        $region30: #{tpu_custom_call.1} parent=11 // pred_check_branch
          %311 = sbr.rel (%p309) target = $region32
        $region31: #{tpu_custom_call.1} parent=11 // pred_region
          _
        $region32: #{tpu_custom_call.1} parent=11 // pred_fallthru
          _
        // Predicated region
        $region33: #{tpu_custom_call.1} parent=11 // pred_check
          %p312 = pneg %p172
        $region34: #{tpu_custom_call.1} parent=11 // pred_check_branch
          %314 = sbr.rel (%p312) target = $region36
        $region35: #{tpu_custom_call.1} parent=11 // pred_region
          _
        $region36: #{tpu_custom_call.1} parent=11 // pred_fallthru
          _
        // Predicated region
        $region37: #{tpu_custom_call.1} parent=11 // pred_check
          %p315 = pneg %p193
        $region38: #{tpu_custom_call.1} parent=11 // pred_check_branch
          %317 = sbr.rel (%p315) target = $region40
        $region39: #{tpu_custom_call.1} parent=11 // pred_region
          _
        $region40: #{tpu_custom_call.1} parent=11 // pred_fallthru
          _
        // Predicated region
        $region41: #{tpu_custom_call.1} parent=11 // pred_check
          %p318 = pneg %p214
        $region42: #{tpu_custom_call.1} parent=11 // pred_check_branch
          %320 = sbr.rel (%p318) target = $region44
        $region43: #{tpu_custom_call.1} parent=11 // pred_region
          _
        $region44: #{tpu_custom_call.1} parent=11 // pred_fallthru
          _
        // Predicated region
        $region45: #{tpu_custom_call.1} parent=11 // pred_check
          %p321 = pneg %p235
        $region46: #{tpu_custom_call.1} parent=11 // pred_check_branch
          %323 = sbr.rel (%p321) target = $region48
        $region47: #{tpu_custom_call.1} parent=11 // pred_region
          _
        $region48: #{tpu_custom_call.1} parent=11 // pred_fallthru
          _
        // Predicated region
        $region49: #{tpu_custom_call.1} parent=11 // pred_check
          %p324 = pneg %p256
        $region50: #{tpu_custom_call.1} parent=11 // pred_check_branch
          %326 = sbr.rel (%p324) target = $region52
        $region51: #{tpu_custom_call.1} parent=11 // pred_region
          _
        $region52: #{tpu_custom_call.1} parent=11 // pred_fallthru
          _
      $region12: #{tpu_custom_call.1} parent=5 // pred_fallthru
        _
      %p327 = scmp.lt.s32.totalorder %s20, 2
      // Predicated region
      $region53: #{tpu_custom_call.1} parent=5 // pred_check
        %p328 = pneg %p327
      $region54: #{tpu_custom_call.1} parent=5 // pred_check_branch
        %330 = sbr.rel (%p328) target = $region56
      $region55: #{tpu_custom_call.1} parent=5 // pred_region
        // Predicated region
        $region57: #{tpu_custom_call.1} parent=55 // pred_check
          %p331 = pneg %p40
        $region58: #{tpu_custom_call.1} parent=55 // pred_check_branch
          %333 = sbr.rel (%p331) target = $region60
        $region59: #{tpu_custom_call.1} parent=55 // pred_region
          %p334 = scmp.lt.s32.totalorder %s20, 1
          %s335 = scalar_select %p334, %s20, 1
          %s336 = smul.addr %s335, 2
          %s337 = smul.addr %s336, 4
          %s338 = scalar_lea.vmem %s0, %s337
        $region60: #{tpu_custom_call.1} parent=55 // pred_fallthru
          _
      $region56: #{tpu_custom_call.1} parent=5 // pred_fallthru
        _
      %p339 = scmp.le.s32.totalorder 1, %s20
      %p340 = scmp.lt.s32.totalorder %s20, 3
      %p341 = pnand %p339, %p340
      %p342 = pneg %p341
      // Predicated region
      $region61: #{tpu_custom_call.1} parent=5 // pred_check
        _
      $region62: #{tpu_custom_call.1} parent=5 // pred_check_branch
        %344 = sbr.rel (%p341) target = $region64
      $region63: #{tpu_custom_call.1} parent=5 // pred_region
        %s345 = ssub.s32 %s20, 1
        %p346 = scmp.lt.s32.totalorder %s25, 1
        %s347 = scalar_select %p346, %s25, 1
        %s348 = smul.addr %s347, 2
        %s349 = smul.addr %s348, 4
        %s350 = scalar_lea.vmem %s0, %s349
        %p351 = pneg %p46
        %p352 = pneg %p43
        %p353 = pneg %p67
        %p354 = pneg %p64
        %p355 = pneg %p88
        %p356 = pneg %p85
        %p357 = pneg %p109
        %p358 = pneg %p106
        %p359 = pneg %p130
        %p360 = pneg %p127
        %p361 = pneg %p151
        %p362 = pneg %p148
        %p363 = pneg %p172
        %p364 = pneg %p169
        %p365 = pneg %p193
        %p366 = pneg %p190
        %p367 = pneg %p214
        %p368 = pneg %p211
        %p369 = pneg %p235
        %p370 = pneg %p232
        %p371 = pneg %p256
        %p372 = pneg %p253
        %p373 = pneg %p282
        %p374 = pneg %p279
        %s375 = sand.u32 %s269, 1
        %s376 = scalar_lea.sflag [#allocation3], %s375
        %s377 = sand.u32 %s269, 1
        %s378 = smul.addr %s377, 8
        %s379 = scalar_lea.vmem [#allocation2], %s378
        %p380 = scmp.lt.s32.totalorder %s25, 1
        %s381 = scalar_select %p380, %s25, 1
        %s382 = smul.addr %s381, 2
        %s383 = smul.addr %s382, 4
        %s384 = scalar_lea.vmem %s0, %s383
        %v385 = vld [vmem:[%s384] sm:$0xff]
        %v386 = vld [vmem:[%s2] sm:$0xf]
        %v387 = vld [vmem:[%s1] sm:$0xff]
        %v388 = vld [vmem:[%s1 + $0x8] sm:$0xff]
        %v389 = vld [vmem:[%s1 + $0x10] sm:$0x3f]
        %v390 = vld [vmem:[%s1 + $0x18] sm:$0x3f]
        %v391 = vld [vmem:[%s3] sm:$0xf]
        %393 = vset.pattern.permute.xlu0 0
        %394 = vperm.xlu0 %393, %v391
        %v395 = vpop.permute.xlu0 %394
        %v398 = vcombine.high %v385, %v385
        %400 = vrot.lane.b32.xlu0 %v385, 51
        %v401 = vpop.permute.xlu0 %400
        %402 = vrot.lane.b32.xlu0 %v398, 51
        %v403 = vpop.permute.xlu0 %402
        %v404 = vlaneseq
        %v405 = vand.u32 %v404, 127
        %vm406 = vcmp.lt.s32.totalorder %v405, 51
        %v407 = vsel %vm406, %v401, %v403
        %v408 = vsel %vm406, %v403, %v401
        %v411 = vrot.slane %v387, 7
        %v412 = vrot.slane %v388, 7
        %v415 = vmul.f32 %v387, %v411
        %v416 = vmul.f32 %v388, %v412
        %v417 = vlaneseq
        %v418 = vshrl.u32 %v417, 7
        %v419 = vsub.s32 0, %v418
        %v420 = vrot.slane %v415, %v419
        %v421 = vlaneseq
        %v422 = vshrl.u32 %v421, 7
        %v423 = vsub.s32 0, %v422
        %v424 = vrot.slane %v416, %v423
        %v425 = vmul.f32 %v408, %v420
        %v426 = vmul.f32 %v407, %v424
        %428 = vset.pattern.permute.xlu0 0
        %429 = vperm.xlu0 %428, %v386
        %v430 = vpop.permute.xlu0 %429
        %v432 = vmul.f32 %v425, %v430
        %v433 = vmul.f32 %v426, %v430
        %v434 = vadd.f32 %v395, %v432
        %v435 = vadd.f32 %v395, %v433
        %436 = vrot.lane.b32.xlu0 %v385, 50
        %v437 = vpop.permute.xlu0 %436
        %438 = vrot.lane.b32.xlu0 %v398, 50
        %v439 = vpop.permute.xlu0 %438
        %vm440 = vcmp.lt.s32.totalorder %v405, 50
        %v441 = vsel %vm440, %v437, %v439
        %v442 = vsel %vm440, %v439, %v437
        %v443 = vmul.f32 %v387, %v389
        %v444 = vmul.f32 %v388, %v390
        %v445 = vlaneseq
        %v446 = vshrl.u32 %v445, 7
        %v447 = vsub.s32 0, %v446
        %v448 = vrot.slane %v443, %v447
        %v449 = vlaneseq
        %v450 = vshrl.u32 %v449, 7
        %v451 = vsub.s32 0, %v450
        %v452 = vrot.slane %v444, %v451
        %v453 = vmul.f32 %v442, %v448
        %v454 = vmul.f32 %v441, %v452
        %455 = vset.pattern.permute.xlu0 1
        %456 = vperm.xlu0 %455, %v386
        %v457 = vpop.permute.xlu0 %456
        %v459 = vmul.f32 %v453, %v457
        %v460 = vmul.f32 %v454, %v457
        %v461 = vadd.f32 %v459, 0.0
        %v462 = vadd.f32 %v460, 0.0
        %463 = vrot.lane.b32.xlu0 %v385, 49
        %v464 = vpop.permute.xlu0 %463
        %465 = vrot.lane.b32.xlu0 %v398, 49
        %v466 = vpop.permute.xlu0 %465
        %vm467 = vcmp.lt.s32.totalorder %v405, 49
        %v468 = vsel %vm467, %v464, %v466
        %v469 = vsel %vm467, %v466, %v464
        %v472 = vrot.slane %v389, 1
        %v473 = vrot.slane %v390, 1
        %v476 = vmul.f32 %v387, %v472
        %v477 = vmul.f32 %v388, %v473
        %v478 = vlaneseq
        %v479 = vshrl.u32 %v478, 7
        %v480 = vsub.s32 0, %v479
        %v481 = vrot.slane %v476, %v480
        %v482 = vlaneseq
        %v483 = vshrl.u32 %v482, 7
        %v484 = vsub.s32 0, %v483
        %v485 = vrot.slane %v477, %v484
        %v486 = vmul.f32 %v469, %v481
        %v487 = vmul.f32 %v468, %v485
        %488 = vset.pattern.permute.xlu0 2
        %489 = vperm.xlu0 %488, %v386
        %v490 = vpop.permute.xlu0 %489
        %v492 = vmul.f32 %v486, %v490
        %v493 = vmul.f32 %v487, %v490
        %v494 = vadd.f32 %v434, %v492
        %v495 = vadd.f32 %v435, %v493
        %496 = vrot.lane.b32.xlu0 %v385, 48
        %v497 = vpop.permute.xlu0 %496
        %498 = vrot.lane.b32.xlu0 %v398, 48
        %v499 = vpop.permute.xlu0 %498
        %vm500 = vcmp.lt.s32.totalorder %v405, 48
        %v501 = vsel %vm500, %v497, %v499
        %v502 = vsel %vm500, %v499, %v497
        %v503 = vrot.slane %v389, 2
        %v504 = vrot.slane %v390, 2
        %v507 = vmul.f32 %v387, %v503
        %v508 = vmul.f32 %v388, %v504
        %v509 = vlaneseq
        %v510 = vshrl.u32 %v509, 7
        %v511 = vsub.s32 0, %v510
        %v512 = vrot.slane %v507, %v511
        %v513 = vlaneseq
        %v514 = vshrl.u32 %v513, 7
        %v515 = vsub.s32 0, %v514
        %v516 = vrot.slane %v508, %v515
        %v517 = vmul.f32 %v502, %v512
        %v518 = vmul.f32 %v501, %v516
        %519 = vset.pattern.permute.xlu0 3
        %520 = vperm.xlu0 %519, %v386
        %v521 = vpop.permute.xlu0 %520
        %v523 = vmul.f32 %v517, %v521
        %v524 = vmul.f32 %v518, %v521
        %v525 = vadd.f32 %v461, %v523
        %v526 = vadd.f32 %v462, %v524
        %527 = vrot.lane.b32.xlu0 %v385, 47
        %v528 = vpop.permute.xlu0 %527
        %529 = vrot.lane.b32.xlu0 %v398, 47
        %v530 = vpop.permute.xlu0 %529
        %vm531 = vcmp.lt.s32.totalorder %v405, 47
        %v532 = vsel %vm531, %v528, %v530
        %v533 = vsel %vm531, %v530, %v528
        %v534 = vrot.slane %v389, 3
        %v535 = vrot.slane %v390, 3
        %v538 = vmul.f32 %v387, %v534
        %v539 = vmul.f32 %v388, %v535
        %v540 = vlaneseq
        %v541 = vshrl.u32 %v540, 7
        %v542 = vsub.s32 0, %v541
        %v543 = vrot.slane %v538, %v542
        %v544 = vlaneseq
        %v545 = vshrl.u32 %v544, 7
        %v546 = vsub.s32 0, %v545
        %v547 = vrot.slane %v539, %v546
        %v548 = vmul.f32 %v533, %v543
        %v549 = vmul.f32 %v532, %v547
        %550 = vset.pattern.permute.xlu0 4
        %551 = vperm.xlu0 %550, %v386
        %v552 = vpop.permute.xlu0 %551
        %v554 = vmul.f32 %v548, %v552
        %v555 = vmul.f32 %v549, %v552
        %v556 = vadd.f32 %v494, %v554
        %v557 = vadd.f32 %v495, %v555
        %558 = vrot.lane.b32.xlu0 %v385, 46
        %v559 = vpop.permute.xlu0 %558
        %560 = vrot.lane.b32.xlu0 %v398, 46
        %v561 = vpop.permute.xlu0 %560
        %vm562 = vcmp.lt.s32.totalorder %v405, 46
        %v563 = vsel %vm562, %v559, %v561
        %v564 = vsel %vm562, %v561, %v559
        %v565 = vrot.slane %v389, 4
        %v566 = vrot.slane %v390, 4
        %v569 = vmul.f32 %v387, %v565
        %v570 = vmul.f32 %v388, %v566
        %v571 = vlaneseq
        %v572 = vshrl.u32 %v571, 7
        %v573 = vsub.s32 0, %v572
        %v574 = vrot.slane %v569, %v573
        %v575 = vlaneseq
        %v576 = vshrl.u32 %v575, 7
        %v577 = vsub.s32 0, %v576
        %v578 = vrot.slane %v570, %v577
        %v579 = vmul.f32 %v564, %v574
        %v580 = vmul.f32 %v563, %v578
        %581 = vset.pattern.permute.xlu0 5
        %582 = vperm.xlu0 %581, %v386
        %v583 = vpop.permute.xlu0 %582
        %v585 = vmul.f32 %v579, %v583
        %v586 = vmul.f32 %v580, %v583
        %v587 = vadd.f32 %v525, %v585
        %v588 = vadd.f32 %v526, %v586
        %589 = vrot.lane.b32.xlu0 %v385, 45
        %v590 = vpop.permute.xlu0 %589
        %591 = vrot.lane.b32.xlu0 %v398, 45
        %v592 = vpop.permute.xlu0 %591
        %vm593 = vcmp.lt.s32.totalorder %v405, 45
        %v594 = vsel %vm593, %v590, %v592
        %v595 = vsel %vm593, %v592, %v590
        %v596 = vrot.slane %v389, 5
        %v597 = vrot.slane %v390, 5
        %v600 = vmul.f32 %v387, %v596
        %v601 = vmul.f32 %v388, %v597
        %v602 = vlaneseq
        %v603 = vshrl.u32 %v602, 7
        %v604 = vsub.s32 0, %v603
        %v605 = vrot.slane %v600, %v604
        %v606 = vlaneseq
        %v607 = vshrl.u32 %v606, 7
        %v608 = vsub.s32 0, %v607
        %v609 = vrot.slane %v601, %v608
        %v610 = vmul.f32 %v595, %v605
        %v611 = vmul.f32 %v594, %v609
        %612 = vset.pattern.permute.xlu0 6
        %613 = vperm.xlu0 %612, %v386
        %v614 = vpop.permute.xlu0 %613
        %v616 = vmul.f32 %v610, %v614
        %v617 = vmul.f32 %v611, %v614
        %v618 = vadd.f32 %v556, %v616
        %v619 = vadd.f32 %v557, %v617
        %620 = vrot.lane.b32.xlu0 %v385, 35
        %v621 = vpop.permute.xlu0 %620
        %622 = vrot.lane.b32.xlu0 %v398, 35
        %v623 = vpop.permute.xlu0 %622
        %vm624 = vcmp.lt.s32.totalorder %v405, 35
        %v625 = vsel %vm624, %v621, %v623
        %v626 = vsel %vm624, %v623, %v621
        %v627 = vrot.slane %v387, 6
        %v628 = vrot.slane %v388, 6
        %v631 = vmul.f32 %v387, %v627
        %v632 = vmul.f32 %v388, %v628
        %v633 = vlaneseq
        %v634 = vshrl.u32 %v633, 7
        %v635 = vsub.s32 1, %v634
        %v636 = vrot.slane %v631, %v635
        %v637 = vlaneseq
        %v638 = vshrl.u32 %v637, 7
        %v639 = vsub.s32 1, %v638
        %v640 = vrot.slane %v632, %v639
        %v641 = vmul.f32 %v626, %v636
        %v642 = vmul.f32 %v625, %v640
        %643 = vset.pattern.permute.xlu0 7
        %644 = vperm.xlu0 %643, %v386
        %v645 = vpop.permute.xlu0 %644
        %v647 = vmul.f32 %v641, %v645
        %v648 = vmul.f32 %v642, %v645
        %v649 = vadd.f32 %v587, %v647
        %v650 = vadd.f32 %v588, %v648
        %651 = vrot.lane.b32.xlu0 %v385, 34
        %v652 = vpop.permute.xlu0 %651
        %653 = vrot.lane.b32.xlu0 %v398, 34
        %v654 = vpop.permute.xlu0 %653
        %vm655 = vcmp.lt.s32.totalorder %v405, 34
        %v656 = vsel %vm655, %v652, %v654
        %v657 = vsel %vm655, %v654, %v652
        %v658 = vrot.slane %v389, 7
        %v659 = vrot.slane %v390, 7
        %v662 = vmul.f32 %v387, %v658
        %v663 = vmul.f32 %v388, %v659
        %v664 = vlaneseq
        %v665 = vshrl.u32 %v664, 7
        %v666 = vsub.s32 1, %v665
        %v667 = vrot.slane %v662, %v666
        %v668 = vlaneseq
        %v669 = vshrl.u32 %v668, 7
        %v670 = vsub.s32 1, %v669
        %v671 = vrot.slane %v663, %v670
        %v672 = vmul.f32 %v657, %v667
        %v673 = vmul.f32 %v656, %v671
        %674 = vset.pattern.permute.xlu0 8
        %675 = vperm.xlu0 %674, %v386
        %v676 = vpop.permute.xlu0 %675
        %v678 = vmul.f32 %v672, %v676
        %v679 = vmul.f32 %v673, %v676
        %v680 = vadd.f32 %v618, %v678
        %v681 = vadd.f32 %v619, %v679
        %682 = vrot.lane.b32.xlu0 %v385, 33
        %v683 = vpop.permute.xlu0 %682
        %684 = vrot.lane.b32.xlu0 %v398, 33
        %v685 = vpop.permute.xlu0 %684
        %vm686 = vcmp.lt.s32.totalorder %v405, 33
        %v687 = vsel %vm686, %v683, %v685
        %v688 = vsel %vm686, %v685, %v683
        %v689 = vlaneseq
        %v690 = vshrl.u32 %v689, 7
        %v691 = vsub.s32 1, %v690
        %v692 = vrot.slane %v443, %v691
        %v693 = vlaneseq
        %v694 = vshrl.u32 %v693, 7
        %v695 = vsub.s32 1, %v694
        %v696 = vrot.slane %v444, %v695
        %v697 = vmul.f32 %v688, %v692
        %v698 = vmul.f32 %v687, %v696
        %699 = vset.pattern.permute.xlu0 9
        %700 = vperm.xlu0 %699, %v386
        %v701 = vpop.permute.xlu0 %700
        %v703 = vmul.f32 %v697, %v701
        %v704 = vmul.f32 %v698, %v701
        %v705 = vadd.f32 %v649, %v703
        %v706 = vadd.f32 %v650, %v704
        %707 = vrot.lane.b32.xlu0 %v385, 32
        %v708 = vpop.permute.xlu0 %707
        %709 = vrot.lane.b32.xlu0 %v398, 32
        %v710 = vpop.permute.xlu0 %709
        %vm711 = vcmp.lt.s32.totalorder %v405, 32
        %v712 = vsel %vm711, %v708, %v710
        %v713 = vsel %vm711, %v710, %v708
        %v714 = vlaneseq
        %v715 = vshrl.u32 %v714, 7
        %v716 = vsub.s32 1, %v715
        %v717 = vrot.slane %v476, %v716
        %v718 = vlaneseq
        %v719 = vshrl.u32 %v718, 7
        %v720 = vsub.s32 1, %v719
        %v721 = vrot.slane %v477, %v720
        %v722 = vmul.f32 %v713, %v717
        %v723 = vmul.f32 %v712, %v721
        %724 = vset.pattern.permute.xlu0 10
        %725 = vperm.xlu0 %724, %v386
        %v726 = vpop.permute.xlu0 %725
        %v728 = vmul.f32 %v722, %v726
        %v729 = vmul.f32 %v723, %v726
        %v730 = vadd.f32 %v680, %v728
        %v731 = vadd.f32 %v681, %v729
        %732 = vrot.lane.b32.xlu0 %v385, 31
        %v733 = vpop.permute.xlu0 %732
        %734 = vrot.lane.b32.xlu0 %v398, 31
        %v735 = vpop.permute.xlu0 %734
        %vm736 = vcmp.lt.s32.totalorder %v405, 31
        %v737 = vsel %vm736, %v733, %v735
        %v738 = vsel %vm736, %v735, %v733
        %v739 = vlaneseq
        %v740 = vshrl.u32 %v739, 7
        %v741 = vsub.s32 1, %v740
        %v742 = vrot.slane %v507, %v741
        %v743 = vlaneseq
        %v744 = vshrl.u32 %v743, 7
        %v745 = vsub.s32 1, %v744
        %v746 = vrot.slane %v508, %v745
        %v747 = vmul.f32 %v738, %v742
        %v748 = vmul.f32 %v737, %v746
        %749 = vset.pattern.permute.xlu0 11
        %750 = vperm.xlu0 %749, %v386
        %v751 = vpop.permute.xlu0 %750
        %v753 = vmul.f32 %v747, %v751
        %v754 = vmul.f32 %v748, %v751
        %v755 = vadd.f32 %v705, %v753
        %v756 = vadd.f32 %v706, %v754
        %757 = vrot.lane.b32.xlu0 %v385, 30
        %v758 = vpop.permute.xlu0 %757
        %759 = vrot.lane.b32.xlu0 %v398, 30
        %v760 = vpop.permute.xlu0 %759
        %vm761 = vcmp.lt.s32.totalorder %v405, 30
        %v762 = vsel %vm761, %v758, %v760
        %v763 = vsel %vm761, %v760, %v758
        %v764 = vlaneseq
        %v765 = vshrl.u32 %v764, 7
        %v766 = vsub.s32 1, %v765
        %v767 = vrot.slane %v538, %v766
        %v768 = vlaneseq
        %v769 = vshrl.u32 %v768, 7
        %v770 = vsub.s32 1, %v769
        %v771 = vrot.slane %v539, %v770
        %v772 = vmul.f32 %v763, %v767
        %v773 = vmul.f32 %v762, %v771
        %774 = vset.pattern.permute.xlu0 12
        %775 = vperm.xlu0 %774, %v386
        %v776 = vpop.permute.xlu0 %775
        %v778 = vmul.f32 %v772, %v776
        %v779 = vmul.f32 %v773, %v776
        %v780 = vadd.f32 %v730, %v778
        %v781 = vadd.f32 %v731, %v779
        %782 = vrot.lane.b32.xlu0 %v385, 29
        %v783 = vpop.permute.xlu0 %782
        %784 = vrot.lane.b32.xlu0 %v398, 29
        %v785 = vpop.permute.xlu0 %784
        %vm786 = vcmp.lt.s32.totalorder %v405, 29
        %v787 = vsel %vm786, %v783, %v785
        %v788 = vsel %vm786, %v785, %v783
        %v789 = vlaneseq
        %v790 = vshrl.u32 %v789, 7
        %v791 = vsub.s32 1, %v790
        %v792 = vrot.slane %v569, %v791
        %v793 = vlaneseq
        %v794 = vshrl.u32 %v793, 7
        %v795 = vsub.s32 1, %v794
        %v796 = vrot.slane %v570, %v795
        %v797 = vmul.f32 %v788, %v792
        %v798 = vmul.f32 %v787, %v796
        %799 = vset.pattern.permute.xlu0 13
        %800 = vperm.xlu0 %799, %v386
        %v801 = vpop.permute.xlu0 %800
        %v803 = vmul.f32 %v797, %v801
        %v804 = vmul.f32 %v798, %v801
        %v805 = vadd.f32 %v755, %v803
        %v806 = vadd.f32 %v756, %v804
        %807 = vrot.lane.b32.xlu0 %v385, 19
        %v808 = vpop.permute.xlu0 %807
        %809 = vrot.lane.b32.xlu0 %v398, 19
        %v810 = vpop.permute.xlu0 %809
        %vm811 = vcmp.lt.s32.totalorder %v405, 19
        %v812 = vsel %vm811, %v808, %v810
        %v813 = vsel %vm811, %v810, %v808
        %v814 = vrot.slane %v387, 5
        %v815 = vrot.slane %v388, 5
        %v818 = vmul.f32 %v387, %v814
        %v819 = vmul.f32 %v388, %v815
        %v820 = vlaneseq
        %v821 = vshrl.u32 %v820, 7
        %v822 = vsub.s32 2, %v821
        %v823 = vrot.slane %v818, %v822
        %v824 = vlaneseq
        %v825 = vshrl.u32 %v824, 7
        %v826 = vsub.s32 2, %v825
        %v827 = vrot.slane %v819, %v826
        %v828 = vmul.f32 %v813, %v823
        %v829 = vmul.f32 %v812, %v827
        %830 = vset.pattern.permute.xlu0 14
        %831 = vperm.xlu0 %830, %v386
        %v832 = vpop.permute.xlu0 %831
        %v834 = vmul.f32 %v828, %v832
        %v835 = vmul.f32 %v829, %v832
        %v836 = vadd.f32 %v780, %v834
        %v837 = vadd.f32 %v781, %v835
        %838 = vrot.lane.b32.xlu0 %v385, 18
        %v839 = vpop.permute.xlu0 %838
        %840 = vrot.lane.b32.xlu0 %v398, 18
        %v841 = vpop.permute.xlu0 %840
        %vm842 = vcmp.lt.s32.totalorder %v405, 18
        %v843 = vsel %vm842, %v839, %v841
        %v844 = vsel %vm842, %v841, %v839
        %v845 = vrot.slane %v389, 6
        %v846 = vrot.slane %v390, 6
        %v849 = vmul.f32 %v387, %v845
        %v850 = vmul.f32 %v388, %v846
        %v851 = vlaneseq
        %v852 = vshrl.u32 %v851, 7
        %v853 = vsub.s32 2, %v852
        %v854 = vrot.slane %v849, %v853
        %v855 = vlaneseq
        %v856 = vshrl.u32 %v855, 7
        %v857 = vsub.s32 2, %v856
        %v858 = vrot.slane %v850, %v857
        %v859 = vmul.f32 %v844, %v854
        %v860 = vmul.f32 %v843, %v858
        %861 = vset.pattern.permute.xlu0 15
        %862 = vperm.xlu0 %861, %v386
        %v863 = vpop.permute.xlu0 %862
        %v865 = vmul.f32 %v859, %v863
        %v866 = vmul.f32 %v860, %v863
        %v867 = vadd.f32 %v805, %v865
        %v868 = vadd.f32 %v806, %v866
        %869 = vrot.lane.b32.xlu0 %v385, 17
        %v870 = vpop.permute.xlu0 %869
        %871 = vrot.lane.b32.xlu0 %v398, 17
        %v872 = vpop.permute.xlu0 %871
        %vm873 = vcmp.lt.s32.totalorder %v405, 17
        %v874 = vsel %vm873, %v870, %v872
        %v875 = vsel %vm873, %v872, %v870
        %v876 = vlaneseq
        %v877 = vshrl.u32 %v876, 7
        %v878 = vsub.s32 2, %v877
        %v879 = vrot.slane %v662, %v878
        %v880 = vlaneseq
        %v881 = vshrl.u32 %v880, 7
        %v882 = vsub.s32 2, %v881
        %v883 = vrot.slane %v663, %v882
        %v884 = vmul.f32 %v875, %v879
        %v885 = vmul.f32 %v874, %v883
        %886 = vset.pattern.permute.xlu0 16
        %887 = vperm.xlu0 %886, %v386
        %v888 = vpop.permute.xlu0 %887
        %v890 = vmul.f32 %v884, %v888
        %v891 = vmul.f32 %v885, %v888
        %v892 = vadd.f32 %v836, %v890
        %v893 = vadd.f32 %v837, %v891
        %894 = vrot.lane.b32.xlu0 %v385, 16
        %v895 = vpop.permute.xlu0 %894
        %896 = vrot.lane.b32.xlu0 %v398, 16
        %v897 = vpop.permute.xlu0 %896
        %vm898 = vcmp.lt.s32.totalorder %v405, 16
        %v899 = vsel %vm898, %v895, %v897
        %v900 = vsel %vm898, %v897, %v895
        %v901 = vlaneseq
        %v902 = vshrl.u32 %v901, 7
        %v903 = vsub.s32 2, %v902
        %v904 = vrot.slane %v443, %v903
        %v905 = vlaneseq
        %v906 = vshrl.u32 %v905, 7
        %v907 = vsub.s32 2, %v906
        %v908 = vrot.slane %v444, %v907
        %v909 = vmul.f32 %v900, %v904
        %v910 = vmul.f32 %v899, %v908
        %911 = vset.pattern.permute.xlu0 17
        %912 = vperm.xlu0 %911, %v386
        %v913 = vpop.permute.xlu0 %912
        %v915 = vmul.f32 %v909, %v913
        %v916 = vmul.f32 %v910, %v913
        %v917 = vadd.f32 %v867, %v915
        %v918 = vadd.f32 %v868, %v916
        %919 = vrot.lane.b32.xlu0 %v385, 15
        %v920 = vpop.permute.xlu0 %919
        %921 = vrot.lane.b32.xlu0 %v398, 15
        %v922 = vpop.permute.xlu0 %921
        %vm923 = vcmp.lt.s32.totalorder %v405, 15
        %v924 = vsel %vm923, %v920, %v922
        %v925 = vsel %vm923, %v922, %v920
        %v926 = vlaneseq
        %v927 = vshrl.u32 %v926, 7
        %v928 = vsub.s32 2, %v927
        %v929 = vrot.slane %v476, %v928
        %v930 = vlaneseq
        %v931 = vshrl.u32 %v930, 7
        %v932 = vsub.s32 2, %v931
        %v933 = vrot.slane %v477, %v932
        %v934 = vmul.f32 %v925, %v929
        %v935 = vmul.f32 %v924, %v933
        %936 = vset.pattern.permute.xlu0 18
        %937 = vperm.xlu0 %936, %v386
        %v938 = vpop.permute.xlu0 %937
        %v940 = vmul.f32 %v934, %v938
        %v941 = vmul.f32 %v935, %v938
        %v942 = vadd.f32 %v892, %v940
        %v943 = vadd.f32 %v893, %v941
        %944 = vrot.lane.b32.xlu0 %v385, 14
        %v945 = vpop.permute.xlu0 %944
        %946 = vrot.lane.b32.xlu0 %v398, 14
        %v947 = vpop.permute.xlu0 %946
        %vm948 = vcmp.lt.s32.totalorder %v405, 14
        %v949 = vsel %vm948, %v945, %v947
        %v950 = vsel %vm948, %v947, %v945
        %v951 = vlaneseq
        %v952 = vshrl.u32 %v951, 7
        %v953 = vsub.s32 2, %v952
        %v954 = vrot.slane %v507, %v953
        %v955 = vlaneseq
        %v956 = vshrl.u32 %v955, 7
        %v957 = vsub.s32 2, %v956
        %v958 = vrot.slane %v508, %v957
        %v959 = vmul.f32 %v950, %v954
        %v960 = vmul.f32 %v949, %v958
        %961 = vset.pattern.permute.xlu0 19
        %962 = vperm.xlu0 %961, %v386
        %v963 = vpop.permute.xlu0 %962
        %v965 = vmul.f32 %v959, %v963
        %v966 = vmul.f32 %v960, %v963
        %v967 = vadd.f32 %v917, %v965
        %v968 = vadd.f32 %v918, %v966
        %969 = vrot.lane.b32.xlu0 %v385, 13
        %v970 = vpop.permute.xlu0 %969
        %971 = vrot.lane.b32.xlu0 %v398, 13
        %v972 = vpop.permute.xlu0 %971
        %vm973 = vcmp.lt.s32.totalorder %v405, 13
        %v974 = vsel %vm973, %v970, %v972
        %v975 = vsel %vm973, %v972, %v970
        %v976 = vlaneseq
        %v977 = vshrl.u32 %v976, 7
        %v978 = vsub.s32 2, %v977
        %v979 = vrot.slane %v538, %v978
        %v980 = vlaneseq
        %v981 = vshrl.u32 %v980, 7
        %v982 = vsub.s32 2, %v981
        %v983 = vrot.slane %v539, %v982
        %v984 = vmul.f32 %v975, %v979
        %v985 = vmul.f32 %v974, %v983
        %986 = vset.pattern.permute.xlu0 20
        %987 = vperm.xlu0 %986, %v386
        %v988 = vpop.permute.xlu0 %987
        %v990 = vmul.f32 %v984, %v988
        %v991 = vmul.f32 %v985, %v988
        %v992 = vadd.f32 %v942, %v990
        %v993 = vadd.f32 %v943, %v991
        %994 = vrot.lane.b32.xlu0 %v385, 3
        %v995 = vpop.permute.xlu0 %994
        %996 = vrot.lane.b32.xlu0 %v398, 3
        %v997 = vpop.permute.xlu0 %996
        %vm998 = vcmp.lt.s32.totalorder %v405, 3
        %v999 = vsel %vm998, %v995, %v997
        %v1000 = vsel %vm998, %v997, %v995
        %v1001 = vrot.slane %v387, 4
        %v1002 = vrot.slane %v388, 4
        %v1005 = vmul.f32 %v387, %v1001
        %v1006 = vmul.f32 %v388, %v1002
        %v1007 = vlaneseq
        %v1008 = vshrl.u32 %v1007, 7
        %v1009 = vsub.s32 3, %v1008
        %v1010 = vrot.slane %v1005, %v1009
        %v1011 = vlaneseq
        %v1012 = vshrl.u32 %v1011, 7
        %v1013 = vsub.s32 3, %v1012
        %v1014 = vrot.slane %v1006, %v1013
        %v1015 = vmul.f32 %v1000, %v1010
        %v1016 = vmul.f32 %v999, %v1014
        %1017 = vset.pattern.permute.xlu0 21
        %1018 = vperm.xlu0 %1017, %v386
        %v1019 = vpop.permute.xlu0 %1018
        %v1021 = vmul.f32 %v1015, %v1019
        %v1022 = vmul.f32 %v1016, %v1019
        %v1023 = vadd.f32 %v967, %v1021
        %v1024 = vadd.f32 %v968, %v1022
        %1025 = vrot.lane.b32.xlu0 %v385, 2
        %v1026 = vpop.permute.xlu0 %1025
        %1027 = vrot.lane.b32.xlu0 %v398, 2
        %v1028 = vpop.permute.xlu0 %1027
        %vm1029 = vcmp.lt.s32.totalorder %v405, 2
        %v1030 = vsel %vm1029, %v1026, %v1028
        %v1031 = vsel %vm1029, %v1028, %v1026
        %v1032 = vlaneseq
        %v1033 = vshrl.u32 %v1032, 7
        %v1034 = vsub.s32 3, %v1033
        %v1035 = vrot.slane %v600, %v1034
        %v1036 = vlaneseq
        %v1037 = vshrl.u32 %v1036, 7
        %v1038 = vsub.s32 3, %v1037
        %v1039 = vrot.slane %v601, %v1038
        %v1040 = vmul.f32 %v1031, %v1035
        %v1041 = vmul.f32 %v1030, %v1039
        %1042 = vset.pattern.permute.xlu0 22
        %1043 = vperm.xlu0 %1042, %v386
        %v1044 = vpop.permute.xlu0 %1043
        %v1046 = vmul.f32 %v1040, %v1044
        %v1047 = vmul.f32 %v1041, %v1044
        %v1048 = vadd.f32 %v992, %v1046
        %v1049 = vadd.f32 %v993, %v1047
        %1050 = vrot.lane.b32.xlu0 %v385, 1
        %v1051 = vpop.permute.xlu0 %1050
        %1052 = vrot.lane.b32.xlu0 %v398, 1
        %v1053 = vpop.permute.xlu0 %1052
        %vm1054 = vcmp.lt.s32.totalorder %v405, 1
        %v1055 = vsel %vm1054, %v1051, %v1053
        %v1056 = vsel %vm1054, %v1053, %v1051
        %v1057 = vlaneseq
        %v1058 = vshrl.u32 %v1057, 7
        %v1059 = vsub.s32 3, %v1058
        %v1060 = vrot.slane %v849, %v1059
        %v1061 = vlaneseq
        %v1062 = vshrl.u32 %v1061, 7
        %v1063 = vsub.s32 3, %v1062
        %v1064 = vrot.slane %v850, %v1063
        %v1065 = vmul.f32 %v1056, %v1060
        %v1066 = vmul.f32 %v1055, %v1064
        %1067 = vset.pattern.permute.xlu0 23
        %1068 = vperm.xlu0 %1067, %v386
        %v1069 = vpop.permute.xlu0 %1068
        %v1071 = vmul.f32 %v1065, %v1069
        %v1072 = vmul.f32 %v1066, %v1069
        %v1073 = vadd.f32 %v1023, %v1071
        %v1074 = vadd.f32 %v1024, %v1072
        %v1075 = vlaneseq
        %v1076 = vshrl.u32 %v1075, 7
        %v1077 = vsub.s32 3, %v1076
        %v1078 = vrot.slane %v662, %v1077
        %v1079 = vlaneseq
        %v1080 = vshrl.u32 %v1079, 7
        %v1081 = vsub.s32 3, %v1080
        %v1082 = vrot.slane %v663, %v1081
        %v1085 = vcombine.low %v1078, %v1082
        %v1087 = vmul.f32 %v385, %v1085
        %1088 = vset.pattern.permute.xlu0 24
        %1089 = vperm.xlu0 %1088, %v386
        %v1090 = vpop.permute.xlu0 %1089
        %v1092 = vunpack.c.l.s4 839922192
        %v1093 = vunpack.c.0.s8 %v1092
        %v1094 = vlaneseq
        %v1095 = vshrl.u32 %v1094, 7
        %v1096 = vsub.s32 %v1093, %v1095
        %v1097 = vrot.slane %v1090, %v1096
        %v1099 = vmul.f32 %v1087, %v1097
        %v1101 = vcombine.high %v1099, %v1099
        %v1103 = vadd.f32 %v1048, %v1099
        %v1104 = vadd.f32 %v1049, %v1101
        %1105 = vrot.lane.b32.xlu0 %v385, 127
        %v1106 = vpop.permute.xlu0 %1105
        %1107 = vrot.lane.b32.xlu0 %v398, 127
        %v1108 = vpop.permute.xlu0 %1107
        %vm1109 = vcmp.lt.s32.totalorder %v405, 127
        %v1110 = vsel %vm1109, %v1106, %v1108
        %v1111 = vsel %vm1109, %v1108, %v1106
        %v1112 = vlaneseq
        %v1113 = vshrl.u32 %v1112, 7
        %v1114 = vsub.s32 3, %v1113
        %v1115 = vrot.slane %v443, %v1114
        %v1116 = vlaneseq
        %v1117 = vshrl.u32 %v1116, 7
        %v1118 = vsub.s32 3, %v1117
        %v1119 = vrot.slane %v444, %v1118
        %v1120 = vmul.f32 %v1110, %v1115
        %v1121 = vmul.f32 %v1111, %v1119
        %1122 = vset.pattern.permute.xlu0 25
        %1123 = vperm.xlu0 %1122, %v386
        %v1124 = vpop.permute.xlu0 %1123
        %v1126 = vmul.f32 %v1120, %v1124
        %v1127 = vmul.f32 %v1121, %v1124
        %v1128 = vadd.f32 %v1073, %v1126
        %v1129 = vadd.f32 %v1074, %v1127
        %1130 = vrot.lane.b32.xlu0 %v385, 126
        %v1131 = vpop.permute.xlu0 %1130
        %1132 = vrot.lane.b32.xlu0 %v398, 126
        %v1133 = vpop.permute.xlu0 %1132
        %vm1134 = vcmp.lt.s32.totalorder %v405, 126
        %v1135 = vsel %vm1134, %v1131, %v1133
        %v1136 = vsel %vm1134, %v1133, %v1131
        %v1137 = vlaneseq
        %v1138 = vshrl.u32 %v1137, 7
        %v1139 = vsub.s32 3, %v1138
        %v1140 = vrot.slane %v476, %v1139
        %v1141 = vlaneseq
        %v1142 = vshrl.u32 %v1141, 7
        %v1143 = vsub.s32 3, %v1142
        %v1144 = vrot.slane %v477, %v1143
        %v1145 = vmul.f32 %v1135, %v1140
        %v1146 = vmul.f32 %v1136, %v1144
        %1147 = vset.pattern.permute.xlu0 26
        %1148 = vperm.xlu0 %1147, %v386
        %v1149 = vpop.permute.xlu0 %1148
        %v1151 = vmul.f32 %v1145, %v1149
        %v1152 = vmul.f32 %v1146, %v1149
        %v1153 = vadd.f32 %v1103, %v1151
        %v1154 = vadd.f32 %v1104, %v1152
        %1155 = vrot.lane.b32.xlu0 %v385, 125
        %v1156 = vpop.permute.xlu0 %1155
        %1157 = vrot.lane.b32.xlu0 %v398, 125
        %v1158 = vpop.permute.xlu0 %1157
        %vm1159 = vcmp.lt.s32.totalorder %v405, 125
        %v1160 = vsel %vm1159, %v1156, %v1158
        %v1161 = vsel %vm1159, %v1158, %v1156
        %v1162 = vlaneseq
        %v1163 = vshrl.u32 %v1162, 7
        %v1164 = vsub.s32 3, %v1163
        %v1165 = vrot.slane %v507, %v1164
        %v1166 = vlaneseq
        %v1167 = vshrl.u32 %v1166, 7
        %v1168 = vsub.s32 3, %v1167
        %v1169 = vrot.slane %v508, %v1168
        %v1170 = vmul.f32 %v1160, %v1165
        %v1171 = vmul.f32 %v1161, %v1169
        %1172 = vset.pattern.permute.xlu0 27
        %1173 = vperm.xlu0 %1172, %v386
        %v1174 = vpop.permute.xlu0 %1173
        %v1176 = vmul.f32 %v1170, %v1174
        %v1177 = vmul.f32 %v1171, %v1174
        %v1178 = vadd.f32 %v1128, %v1176
        %v1179 = vadd.f32 %v1129, %v1177
        %1180 = vrot.lane.b32.xlu0 %v385, 115
        %v1181 = vpop.permute.xlu0 %1180
        %1182 = vrot.lane.b32.xlu0 %v398, 115
        %v1183 = vpop.permute.xlu0 %1182
        %vm1184 = vcmp.lt.s32.totalorder %v405, 115
        %v1185 = vsel %vm1184, %v1181, %v1183
        %v1186 = vsel %vm1184, %v1183, %v1181
        %v1187 = vrot.slane %v387, 3
        %v1188 = vrot.slane %v388, 3
        %v1191 = vmul.f32 %v387, %v1187
        %v1192 = vmul.f32 %v388, %v1188
        %v1193 = vlaneseq
        %v1194 = vshrl.u32 %v1193, 7
        %v1195 = vsub.s32 4, %v1194
        %v1196 = vrot.slane %v1191, %v1195
        %v1197 = vlaneseq
        %v1198 = vshrl.u32 %v1197, 7
        %v1199 = vsub.s32 4, %v1198
        %v1200 = vrot.slane %v1192, %v1199
        %v1201 = vmul.f32 %v1185, %v1196
        %v1202 = vmul.f32 %v1186, %v1200
        %1203 = vset.pattern.permute.xlu0 28
        %1204 = vperm.xlu0 %1203, %v386
        %v1205 = vpop.permute.xlu0 %1204
        %v1207 = vmul.f32 %v1201, %v1205
        %v1208 = vmul.f32 %v1202, %v1205
        %v1209 = vadd.f32 %v1153, %v1207
        %v1210 = vadd.f32 %v1154, %v1208
        %1211 = vrot.lane.b32.xlu0 %v385, 114
        %v1212 = vpop.permute.xlu0 %1211
        %1213 = vrot.lane.b32.xlu0 %v398, 114
        %v1214 = vpop.permute.xlu0 %1213
        %vm1215 = vcmp.lt.s32.totalorder %v405, 114
        %v1216 = vsel %vm1215, %v1212, %v1214
        %v1217 = vsel %vm1215, %v1214, %v1212
        %v1218 = vlaneseq
        %v1219 = vshrl.u32 %v1218, 7
        %v1220 = vsub.s32 4, %v1219
        %v1221 = vrot.slane %v569, %v1220
        %v1222 = vlaneseq
        %v1223 = vshrl.u32 %v1222, 7
        %v1224 = vsub.s32 4, %v1223
        %v1225 = vrot.slane %v570, %v1224
        %v1226 = vmul.f32 %v1216, %v1221
        %v1227 = vmul.f32 %v1217, %v1225
        %1228 = vset.pattern.permute.xlu0 29
        %1229 = vperm.xlu0 %1228, %v386
        %v1230 = vpop.permute.xlu0 %1229
        %v1232 = vmul.f32 %v1226, %v1230
        %v1233 = vmul.f32 %v1227, %v1230
        %v1234 = vadd.f32 %v1178, %v1232
        %v1235 = vadd.f32 %v1179, %v1233
        %1236 = vrot.lane.b32.xlu0 %v385, 113
        %v1237 = vpop.permute.xlu0 %1236
        %1238 = vrot.lane.b32.xlu0 %v398, 113
        %v1239 = vpop.permute.xlu0 %1238
        %vm1240 = vcmp.lt.s32.totalorder %v405, 113
        %v1241 = vsel %vm1240, %v1237, %v1239
        %v1242 = vsel %vm1240, %v1239, %v1237
        %v1243 = vlaneseq
        %v1244 = vshrl.u32 %v1243, 7
        %v1245 = vsub.s32 4, %v1244
        %v1246 = vrot.slane %v600, %v1245
        %v1247 = vlaneseq
        %v1248 = vshrl.u32 %v1247, 7
        %v1249 = vsub.s32 4, %v1248
        %v1250 = vrot.slane %v601, %v1249
        %v1251 = vmul.f32 %v1241, %v1246
        %v1252 = vmul.f32 %v1242, %v1250
        %1253 = vset.pattern.permute.xlu0 30
        %1254 = vperm.xlu0 %1253, %v386
        %v1255 = vpop.permute.xlu0 %1254
        %v1257 = vmul.f32 %v1251, %v1255
        %v1258 = vmul.f32 %v1252, %v1255
        %v1259 = vadd.f32 %v1209, %v1257
        %v1260 = vadd.f32 %v1210, %v1258
        %1261 = vrot.lane.b32.xlu0 %v385, 112
        %v1262 = vpop.permute.xlu0 %1261
        %1263 = vrot.lane.b32.xlu0 %v398, 112
        %v1264 = vpop.permute.xlu0 %1263
        %vm1265 = vcmp.lt.s32.totalorder %v405, 112
        %v1266 = vsel %vm1265, %v1262, %v1264
        %v1267 = vsel %vm1265, %v1264, %v1262
        %v1268 = vlaneseq
        %v1269 = vshrl.u32 %v1268, 7
        %v1270 = vsub.s32 4, %v1269
        %v1271 = vrot.slane %v849, %v1270
        %v1272 = vlaneseq
        %v1273 = vshrl.u32 %v1272, 7
        %v1274 = vsub.s32 4, %v1273
        %v1275 = vrot.slane %v850, %v1274
        %v1276 = vmul.f32 %v1266, %v1271
        %v1277 = vmul.f32 %v1267, %v1275
        %1278 = vset.pattern.permute.xlu0 31
        %1279 = vperm.xlu0 %1278, %v386
        %v1280 = vpop.permute.xlu0 %1279
        %v1282 = vmul.f32 %v1276, %v1280
        %v1283 = vmul.f32 %v1277, %v1280
        %v1284 = vadd.f32 %v1234, %v1282
        %v1285 = vadd.f32 %v1235, %v1283
        %1286 = vrot.lane.b32.xlu0 %v385, 111
        %v1287 = vpop.permute.xlu0 %1286
        %1288 = vrot.lane.b32.xlu0 %v398, 111
        %v1289 = vpop.permute.xlu0 %1288
        %vm1290 = vcmp.lt.s32.totalorder %v405, 111
        %v1291 = vsel %vm1290, %v1287, %v1289
        %v1292 = vsel %vm1290, %v1289, %v1287
        %v1293 = vlaneseq
        %v1294 = vshrl.u32 %v1293, 7
        %v1295 = vsub.s32 4, %v1294
        %v1296 = vrot.slane %v662, %v1295
        %v1297 = vlaneseq
        %v1298 = vshrl.u32 %v1297, 7
        %v1299 = vsub.s32 4, %v1298
        %v1300 = vrot.slane %v663, %v1299
        %v1301 = vmul.f32 %v1291, %v1296
        %v1302 = vmul.f32 %v1292, %v1300
        %1303 = vset.pattern.permute.xlu0 32
        %1304 = vperm.xlu0 %1303, %v386
        %v1305 = vpop.permute.xlu0 %1304
        %v1307 = vmul.f32 %v1301, %v1305
        %v1308 = vmul.f32 %v1302, %v1305
        %v1309 = vadd.f32 %v1259, %v1307
        %v1310 = vadd.f32 %v1260, %v1308
        %1311 = vrot.lane.b32.xlu0 %v385, 110
        %v1312 = vpop.permute.xlu0 %1311
        %1313 = vrot.lane.b32.xlu0 %v398, 110
        %v1314 = vpop.permute.xlu0 %1313
        %vm1315 = vcmp.lt.s32.totalorder %v405, 110
        %v1316 = vsel %vm1315, %v1312, %v1314
        %v1317 = vsel %vm1315, %v1314, %v1312
        %v1318 = vlaneseq
        %v1319 = vshrl.u32 %v1318, 7
        %v1320 = vsub.s32 4, %v1319
        %v1321 = vrot.slane %v443, %v1320
        %v1322 = vlaneseq
        %v1323 = vshrl.u32 %v1322, 7
        %v1324 = vsub.s32 4, %v1323
        %v1325 = vrot.slane %v444, %v1324
        %v1326 = vmul.f32 %v1316, %v1321
        %v1327 = vmul.f32 %v1317, %v1325
        %1328 = vset.pattern.permute.xlu0 33
        %1329 = vperm.xlu0 %1328, %v386
        %v1330 = vpop.permute.xlu0 %1329
        %v1332 = vmul.f32 %v1326, %v1330
        %v1333 = vmul.f32 %v1327, %v1330
        %v1334 = vadd.f32 %v1284, %v1332
        %v1335 = vadd.f32 %v1285, %v1333
        %1336 = vrot.lane.b32.xlu0 %v385, 109
        %v1337 = vpop.permute.xlu0 %1336
        %1338 = vrot.lane.b32.xlu0 %v398, 109
        %v1339 = vpop.permute.xlu0 %1338
        %vm1340 = vcmp.lt.s32.totalorder %v405, 109
        %v1341 = vsel %vm1340, %v1337, %v1339
        %v1342 = vsel %vm1340, %v1339, %v1337
        %v1343 = vlaneseq
        %v1344 = vshrl.u32 %v1343, 7
        %v1345 = vsub.s32 4, %v1344
        %v1346 = vrot.slane %v476, %v1345
        %v1347 = vlaneseq
        %v1348 = vshrl.u32 %v1347, 7
        %v1349 = vsub.s32 4, %v1348
        %v1350 = vrot.slane %v477, %v1349
        %v1351 = vmul.f32 %v1341, %v1346
        %v1352 = vmul.f32 %v1342, %v1350
        %1353 = vset.pattern.permute.xlu0 34
        %1354 = vperm.xlu0 %1353, %v386
        %v1355 = vpop.permute.xlu0 %1354
        %v1357 = vmul.f32 %v1351, %v1355
        %v1358 = vmul.f32 %v1352, %v1355
        %v1359 = vadd.f32 %v1309, %v1357
        %v1360 = vadd.f32 %v1310, %v1358
        %1361 = vrot.lane.b32.xlu0 %v385, 99
        %v1362 = vpop.permute.xlu0 %1361
        %1363 = vrot.lane.b32.xlu0 %v398, 99
        %v1364 = vpop.permute.xlu0 %1363
        %vm1365 = vcmp.lt.s32.totalorder %v405, 99
        %v1366 = vsel %vm1365, %v1362, %v1364
        %v1367 = vsel %vm1365, %v1364, %v1362
        %v1368 = vrot.slane %v387, 2
        %v1369 = vrot.slane %v388, 2
        %v1372 = vmul.f32 %v387, %v1368
        %v1373 = vmul.f32 %v388, %v1369
        %v1374 = vlaneseq
        %v1375 = vshrl.u32 %v1374, 7
        %v1376 = vsub.s32 5, %v1375
        %v1377 = vrot.slane %v1372, %v1376
        %v1378 = vlaneseq
        %v1379 = vshrl.u32 %v1378, 7
        %v1380 = vsub.s32 5, %v1379
        %v1381 = vrot.slane %v1373, %v1380
        %v1382 = vmul.f32 %v1366, %v1377
        %v1383 = vmul.f32 %v1367, %v1381
        %1384 = vset.pattern.permute.xlu0 35
        %1385 = vperm.xlu0 %1384, %v386
        %v1386 = vpop.permute.xlu0 %1385
        %v1388 = vmul.f32 %v1382, %v1386
        %v1389 = vmul.f32 %v1383, %v1386
        %v1390 = vadd.f32 %v1334, %v1388
        %v1391 = vadd.f32 %v1335, %v1389
        %1392 = vrot.lane.b32.xlu0 %v385, 98
        %v1393 = vpop.permute.xlu0 %1392
        %1394 = vrot.lane.b32.xlu0 %v398, 98
        %v1395 = vpop.permute.xlu0 %1394
        %vm1396 = vcmp.lt.s32.totalorder %v405, 98
        %v1397 = vsel %vm1396, %v1393, %v1395
        %v1398 = vsel %vm1396, %v1395, %v1393
        %v1399 = vlaneseq
        %v1400 = vshrl.u32 %v1399, 7
        %v1401 = vsub.s32 5, %v1400
        %v1402 = vrot.slane %v538, %v1401
        %v1403 = vlaneseq
        %v1404 = vshrl.u32 %v1403, 7
        %v1405 = vsub.s32 5, %v1404
        %v1406 = vrot.slane %v539, %v1405
        %v1407 = vmul.f32 %v1397, %v1402
        %v1408 = vmul.f32 %v1398, %v1406
        %1409 = vset.pattern.permute.xlu0 36
        %1410 = vperm.xlu0 %1409, %v386
        %v1411 = vpop.permute.xlu0 %1410
        %v1413 = vmul.f32 %v1407, %v1411
        %v1414 = vmul.f32 %v1408, %v1411
        %v1415 = vadd.f32 %v1359, %v1413
        %v1416 = vadd.f32 %v1360, %v1414
        %1417 = vrot.lane.b32.xlu0 %v385, 97
        %v1418 = vpop.permute.xlu0 %1417
        %1419 = vrot.lane.b32.xlu0 %v398, 97
        %v1420 = vpop.permute.xlu0 %1419
        %vm1421 = vcmp.lt.s32.totalorder %v405, 97
        %v1422 = vsel %vm1421, %v1418, %v1420
        %v1423 = vsel %vm1421, %v1420, %v1418
        %v1424 = vlaneseq
        %v1425 = vshrl.u32 %v1424, 7
        %v1426 = vsub.s32 5, %v1425
        %v1427 = vrot.slane %v569, %v1426
        %v1428 = vlaneseq
        %v1429 = vshrl.u32 %v1428, 7
        %v1430 = vsub.s32 5, %v1429
        %v1431 = vrot.slane %v570, %v1430
        %v1432 = vmul.f32 %v1422, %v1427
        %v1433 = vmul.f32 %v1423, %v1431
        %1434 = vset.pattern.permute.xlu0 37
        %1435 = vperm.xlu0 %1434, %v386
        %v1436 = vpop.permute.xlu0 %1435
        %v1438 = vmul.f32 %v1432, %v1436
        %v1439 = vmul.f32 %v1433, %v1436
        %v1440 = vadd.f32 %v1390, %v1438
        %v1441 = vadd.f32 %v1391, %v1439
        %1442 = vrot.lane.b32.xlu0 %v385, 96
        %v1443 = vpop.permute.xlu0 %1442
        %1444 = vrot.lane.b32.xlu0 %v398, 96
        %v1445 = vpop.permute.xlu0 %1444
        %vm1446 = vcmp.lt.s32.totalorder %v405, 96
        %v1447 = vsel %vm1446, %v1443, %v1445
        %v1448 = vsel %vm1446, %v1445, %v1443
        %v1449 = vlaneseq
        %v1450 = vshrl.u32 %v1449, 7
        %v1451 = vsub.s32 5, %v1450
        %v1452 = vrot.slane %v600, %v1451
        %v1453 = vlaneseq
        %v1454 = vshrl.u32 %v1453, 7
        %v1455 = vsub.s32 5, %v1454
        %v1456 = vrot.slane %v601, %v1455
        %v1457 = vmul.f32 %v1447, %v1452
        %v1458 = vmul.f32 %v1448, %v1456
        %1459 = vset.pattern.permute.xlu0 38
        %1460 = vperm.xlu0 %1459, %v386
        %v1461 = vpop.permute.xlu0 %1460
        %v1463 = vmul.f32 %v1457, %v1461
        %v1464 = vmul.f32 %v1458, %v1461
        %v1465 = vadd.f32 %v1415, %v1463
        %v1466 = vadd.f32 %v1416, %v1464
        %1467 = vrot.lane.b32.xlu0 %v385, 95
        %v1468 = vpop.permute.xlu0 %1467
        %1469 = vrot.lane.b32.xlu0 %v398, 95
        %v1470 = vpop.permute.xlu0 %1469
        %vm1471 = vcmp.lt.s32.totalorder %v405, 95
        %v1472 = vsel %vm1471, %v1468, %v1470
        %v1473 = vsel %vm1471, %v1470, %v1468
        %v1474 = vlaneseq
        %v1475 = vshrl.u32 %v1474, 7
        %v1476 = vsub.s32 5, %v1475
        %v1477 = vrot.slane %v849, %v1476
        %v1478 = vlaneseq
        %v1479 = vshrl.u32 %v1478, 7
        %v1480 = vsub.s32 5, %v1479
        %v1481 = vrot.slane %v850, %v1480
        %v1482 = vmul.f32 %v1472, %v1477
        %v1483 = vmul.f32 %v1473, %v1481
        %1484 = vset.pattern.permute.xlu0 39
        %1485 = vperm.xlu0 %1484, %v386
        %v1486 = vpop.permute.xlu0 %1485
        %v1488 = vmul.f32 %v1482, %v1486
        %v1489 = vmul.f32 %v1483, %v1486
        %v1490 = vadd.f32 %v1440, %v1488
        %v1491 = vadd.f32 %v1441, %v1489
        %1492 = vrot.lane.b32.xlu0 %v385, 94
        %v1493 = vpop.permute.xlu0 %1492
        %1494 = vrot.lane.b32.xlu0 %v398, 94
        %v1495 = vpop.permute.xlu0 %1494
        %vm1496 = vcmp.lt.s32.totalorder %v405, 94
        %v1497 = vsel %vm1496, %v1493, %v1495
        %v1498 = vsel %vm1496, %v1495, %v1493
        %v1499 = vlaneseq
        %v1500 = vshrl.u32 %v1499, 7
        %v1501 = vsub.s32 5, %v1500
        %v1502 = vrot.slane %v662, %v1501
        %v1503 = vlaneseq
        %v1504 = vshrl.u32 %v1503, 7
        %v1505 = vsub.s32 5, %v1504
        %v1506 = vrot.slane %v663, %v1505
        %v1507 = vmul.f32 %v1497, %v1502
        %v1508 = vmul.f32 %v1498, %v1506
        %1509 = vset.pattern.permute.xlu0 40
        %1510 = vperm.xlu0 %1509, %v386
        %v1511 = vpop.permute.xlu0 %1510
        %v1513 = vmul.f32 %v1507, %v1511
        %v1514 = vmul.f32 %v1508, %v1511
        %v1515 = vadd.f32 %v1465, %v1513
        %v1516 = vadd.f32 %v1466, %v1514
        %1517 = vrot.lane.b32.xlu0 %v385, 93
        %v1518 = vpop.permute.xlu0 %1517
        %1519 = vrot.lane.b32.xlu0 %v398, 93
        %v1520 = vpop.permute.xlu0 %1519
        %vm1521 = vcmp.lt.s32.totalorder %v405, 93
        %v1522 = vsel %vm1521, %v1518, %v1520
        %v1523 = vsel %vm1521, %v1520, %v1518
        %v1524 = vlaneseq
        %v1525 = vshrl.u32 %v1524, 7
        %v1526 = vsub.s32 5, %v1525
        %v1527 = vrot.slane %v443, %v1526
        %v1528 = vlaneseq
        %v1529 = vshrl.u32 %v1528, 7
        %v1530 = vsub.s32 5, %v1529
        %v1531 = vrot.slane %v444, %v1530
        %v1532 = vmul.f32 %v1522, %v1527
        %v1533 = vmul.f32 %v1523, %v1531
        %1534 = vset.pattern.permute.xlu0 41
        %1535 = vperm.xlu0 %1534, %v386
        %v1536 = vpop.permute.xlu0 %1535
        %v1538 = vmul.f32 %v1532, %v1536
        %v1539 = vmul.f32 %v1533, %v1536
        %v1540 = vadd.f32 %v1490, %v1538
        %v1541 = vadd.f32 %v1491, %v1539
        %1542 = vrot.lane.b32.xlu0 %v385, 83
        %v1543 = vpop.permute.xlu0 %1542
        %1544 = vrot.lane.b32.xlu0 %v398, 83
        %v1545 = vpop.permute.xlu0 %1544
        %vm1546 = vcmp.lt.s32.totalorder %v405, 83
        %v1547 = vsel %vm1546, %v1543, %v1545
        %v1548 = vsel %vm1546, %v1545, %v1543
        %v1549 = vrot.slane %v387, 1
        %v1550 = vrot.slane %v388, 1
        %v1553 = vmul.f32 %v387, %v1549
        %v1554 = vmul.f32 %v388, %v1550
        %v1555 = vlaneseq
        %v1556 = vshrl.u32 %v1555, 7
        %v1557 = vsub.s32 6, %v1556
        %v1558 = vrot.slane %v1553, %v1557
        %v1559 = vlaneseq
        %v1560 = vshrl.u32 %v1559, 7
        %v1561 = vsub.s32 6, %v1560
        %v1562 = vrot.slane %v1554, %v1561
        %v1563 = vmul.f32 %v1547, %v1558
        %v1564 = vmul.f32 %v1548, %v1562
        %1565 = vset.pattern.permute.xlu0 42
        %1566 = vperm.xlu0 %1565, %v386
        %v1567 = vpop.permute.xlu0 %1566
        %v1569 = vmul.f32 %v1563, %v1567
        %v1570 = vmul.f32 %v1564, %v1567
        %v1571 = vadd.f32 %v1515, %v1569
        %v1572 = vadd.f32 %v1516, %v1570
        %1573 = vrot.lane.b32.xlu0 %v385, 82
        %v1574 = vpop.permute.xlu0 %1573
        %1575 = vrot.lane.b32.xlu0 %v398, 82
        %v1576 = vpop.permute.xlu0 %1575
        %vm1577 = vcmp.lt.s32.totalorder %v405, 82
        %v1578 = vsel %vm1577, %v1574, %v1576
        %v1579 = vsel %vm1577, %v1576, %v1574
        %v1580 = vlaneseq
        %v1581 = vshrl.u32 %v1580, 7
        %v1582 = vsub.s32 6, %v1581
        %v1583 = vrot.slane %v507, %v1582
        %v1584 = vlaneseq
        %v1585 = vshrl.u32 %v1584, 7
        %v1586 = vsub.s32 6, %v1585
        %v1587 = vrot.slane %v508, %v1586
        %v1588 = vmul.f32 %v1578, %v1583
        %v1589 = vmul.f32 %v1579, %v1587
        %1590 = vset.pattern.permute.xlu0 43
        %1591 = vperm.xlu0 %1590, %v386
        %v1592 = vpop.permute.xlu0 %1591
        %v1594 = vmul.f32 %v1588, %v1592
        %v1595 = vmul.f32 %v1589, %v1592
        %v1596 = vadd.f32 %v1540, %v1594
        %v1597 = vadd.f32 %v1541, %v1595
        %1598 = vrot.lane.b32.xlu0 %v385, 81
        %v1599 = vpop.permute.xlu0 %1598
        %1600 = vrot.lane.b32.xlu0 %v398, 81
        %v1601 = vpop.permute.xlu0 %1600
        %vm1602 = vcmp.lt.s32.totalorder %v405, 81
        %v1603 = vsel %vm1602, %v1599, %v1601
        %v1604 = vsel %vm1602, %v1601, %v1599
        %v1605 = vlaneseq
        %v1606 = vshrl.u32 %v1605, 7
        %v1607 = vsub.s32 6, %v1606
        %v1608 = vrot.slane %v538, %v1607
        %v1609 = vlaneseq
        %v1610 = vshrl.u32 %v1609, 7
        %v1611 = vsub.s32 6, %v1610
        %v1612 = vrot.slane %v539, %v1611
        %v1613 = vmul.f32 %v1603, %v1608
        %v1614 = vmul.f32 %v1604, %v1612
        %1615 = vset.pattern.permute.xlu0 44
        %1616 = vperm.xlu0 %1615, %v386
        %v1617 = vpop.permute.xlu0 %1616
        %v1619 = vmul.f32 %v1613, %v1617
        %v1620 = vmul.f32 %v1614, %v1617
        %v1621 = vadd.f32 %v1571, %v1619
        %v1622 = vadd.f32 %v1572, %v1620
        %1623 = vrot.lane.b32.xlu0 %v385, 80
        %v1624 = vpop.permute.xlu0 %1623
        %1625 = vrot.lane.b32.xlu0 %v398, 80
        %v1626 = vpop.permute.xlu0 %1625
        %vm1627 = vcmp.lt.s32.totalorder %v405, 80
        %v1628 = vsel %vm1627, %v1624, %v1626
        %v1629 = vsel %vm1627, %v1626, %v1624
        %v1630 = vlaneseq
        %v1631 = vshrl.u32 %v1630, 7
        %v1632 = vsub.s32 6, %v1631
        %v1633 = vrot.slane %v569, %v1632
        %v1634 = vlaneseq
        %v1635 = vshrl.u32 %v1634, 7
        %v1636 = vsub.s32 6, %v1635
        %v1637 = vrot.slane %v570, %v1636
        %v1638 = vmul.f32 %v1628, %v1633
        %v1639 = vmul.f32 %v1629, %v1637
        %1640 = vset.pattern.permute.xlu0 45
        %1641 = vperm.xlu0 %1640, %v386
        %v1642 = vpop.permute.xlu0 %1641
        %v1644 = vmul.f32 %v1638, %v1642
        %v1645 = vmul.f32 %v1639, %v1642
        %v1646 = vadd.f32 %v1596, %v1644
        %v1647 = vadd.f32 %v1597, %v1645
        %1648 = vrot.lane.b32.xlu0 %v385, 79
        %v1649 = vpop.permute.xlu0 %1648
        %1650 = vrot.lane.b32.xlu0 %v398, 79
        %v1651 = vpop.permute.xlu0 %1650
        %vm1652 = vcmp.lt.s32.totalorder %v405, 79
        %v1653 = vsel %vm1652, %v1649, %v1651
        %v1654 = vsel %vm1652, %v1651, %v1649
        %v1655 = vlaneseq
        %v1656 = vshrl.u32 %v1655, 7
        %v1657 = vsub.s32 6, %v1656
        %v1658 = vrot.slane %v600, %v1657
        %v1659 = vlaneseq
        %v1660 = vshrl.u32 %v1659, 7
        %v1661 = vsub.s32 6, %v1660
        %v1662 = vrot.slane %v601, %v1661
        %v1663 = vmul.f32 %v1653, %v1658
        %v1664 = vmul.f32 %v1654, %v1662
        %1665 = vset.pattern.permute.xlu0 46
        %1666 = vperm.xlu0 %1665, %v386
        %v1667 = vpop.permute.xlu0 %1666
        %v1669 = vmul.f32 %v1663, %v1667
        %v1670 = vmul.f32 %v1664, %v1667
        %v1671 = vadd.f32 %v1621, %v1669
        %v1672 = vadd.f32 %v1622, %v1670
        %1673 = vrot.lane.b32.xlu0 %v385, 78
        %v1674 = vpop.permute.xlu0 %1673
        %1675 = vrot.lane.b32.xlu0 %v398, 78
        %v1676 = vpop.permute.xlu0 %1675
        %vm1677 = vcmp.lt.s32.totalorder %v405, 78
        %v1678 = vsel %vm1677, %v1674, %v1676
        %v1679 = vsel %vm1677, %v1676, %v1674
        %v1680 = vlaneseq
        %v1681 = vshrl.u32 %v1680, 7
        %v1682 = vsub.s32 6, %v1681
        %v1683 = vrot.slane %v849, %v1682
        %v1684 = vlaneseq
        %v1685 = vshrl.u32 %v1684, 7
        %v1686 = vsub.s32 6, %v1685
        %v1687 = vrot.slane %v850, %v1686
        %v1688 = vmul.f32 %v1678, %v1683
        %v1689 = vmul.f32 %v1679, %v1687
        %1690 = vset.pattern.permute.xlu0 47
        %1691 = vperm.xlu0 %1690, %v386
        %v1692 = vpop.permute.xlu0 %1691
        %v1694 = vmul.f32 %v1688, %v1692
        %v1695 = vmul.f32 %v1689, %v1692
        %v1696 = vadd.f32 %v1646, %v1694
        %v1697 = vadd.f32 %v1647, %v1695
        %1698 = vrot.lane.b32.xlu0 %v385, 77
        %v1699 = vpop.permute.xlu0 %1698
        %1700 = vrot.lane.b32.xlu0 %v398, 77
        %v1701 = vpop.permute.xlu0 %1700
        %vm1702 = vcmp.lt.s32.totalorder %v405, 77
        %v1703 = vsel %vm1702, %v1699, %v1701
        %v1704 = vsel %vm1702, %v1701, %v1699
        %v1705 = vlaneseq
        %v1706 = vshrl.u32 %v1705, 7
        %v1707 = vsub.s32 6, %v1706
        %v1708 = vrot.slane %v662, %v1707
        %v1709 = vlaneseq
        %v1710 = vshrl.u32 %v1709, 7
        %v1711 = vsub.s32 6, %v1710
        %v1712 = vrot.slane %v663, %v1711
        %v1713 = vmul.f32 %v1703, %v1708
        %v1714 = vmul.f32 %v1704, %v1712
        %1715 = vset.pattern.permute.xlu0 48
        %1716 = vperm.xlu0 %1715, %v386
        %v1717 = vpop.permute.xlu0 %1716
        %v1719 = vmul.f32 %v1713, %v1717
        %v1720 = vmul.f32 %v1714, %v1717
        %v1721 = vadd.f32 %v1671, %v1719
        %v1722 = vadd.f32 %v1672, %v1720
        %v1723 = vadd.f32 %v1721, %v1696
        %v1724 = vadd.f32 %v1722, %v1697
        %vm1725 = vcmask 1043456
        %v1726 = vsel %vm1725, %v1723, 0.0
        %v1727 = vrot.slane %v1726, 4
        %v1728 = vadd.f32 %v1726, %v1727
        %v1729 = vrot.slane %v1728, 2
        %v1730 = vadd.f32 %v1728, %v1729
        %v1731 = vrot.slane %v1730, 1
        %v1732 = vadd.f32 %v1730, %v1731
        %v1733 = vsel %vm1725, %v1724, 0.0
        %v1734 = vrot.slane %v1733, 4
        %v1735 = vadd.f32 %v1733, %v1734
        %v1736 = vrot.slane %v1735, 2
        %v1737 = vadd.f32 %v1735, %v1736
        %v1738 = vrot.slane %v1737, 1
        %v1739 = vadd.f32 %v1737, %v1738
        %v1740 = vmul.f32 %v1732, 0.25
        %v1741 = vmul.f32 %v1739, 0.25
        %v1742 = vmul.f32 %v1723, %v1723
        %v1743 = vmul.f32 %v1724, %v1724
        %v1744 = vsel %vm1725, %v1742, 0.0
        %v1745 = vrot.slane %v1744, 4
        %v1746 = vadd.f32 %v1744, %v1745
        %v1747 = vrot.slane %v1746, 2
        %v1748 = vadd.f32 %v1746, %v1747
        %v1749 = vrot.slane %v1748, 1
        %v1750 = vadd.f32 %v1748, %v1749
        %v1751 = vsel %vm1725, %v1743, 0.0
        %v1752 = vrot.slane %v1751, 4
        %v1753 = vadd.f32 %v1751, %v1752
        %v1754 = vrot.slane %v1753, 2
        %v1755 = vadd.f32 %v1753, %v1754
        %v1756 = vrot.slane %v1755, 1
        %v1757 = vadd.f32 %v1755, %v1756
        %v1758 = vmul.f32 %v1750, 0.25
        %v1759 = vmul.f32 %v1757, 0.25
        %v1760 = vmul.f32 %v1740, %v1740
        %v1761 = vmul.f32 %v1741, %v1741
        %v1762 = vsub.f32 %v1758, %v1760
        %v1763 = vsub.f32 %v1759, %v1761
        %v1764 = vadd.f32 %v1762, 1e-06
        %v1765 = vadd.f32 %v1763, 1e-06
        %v1766 = vrsqrt.pop %v1764
        %v1767 = vrsqrt.pop %v1765
        %v1768 = vsub.f32 %v1723, %v1740
        %v1769 = vsub.f32 %v1724, %v1741
        %v1770 = vmul.f32 %v1768, %v1766
        %v1771 = vmul.f32 %v1769, %v1767
        %v1772 = vld [vmem:[%s4] sm:$0xf]
        %1774 = vset.pattern.permute.xlu0 0
        %1775 = vperm.xlu0 %1774, %v1772
        %v1776 = vpop.permute.xlu0 %1775
        %v1778 = vmul.f32 %v1770, %v1776
        %v1779 = vmul.f32 %v1771, %v1776
        %v1780 = vld [vmem:[%s5] sm:$0xf]
        %1782 = vset.pattern.permute.xlu0 0
        %1783 = vperm.xlu0 %1782, %v1780
        %v1784 = vpop.permute.xlu0 %1783
        %v1786 = vadd.f32 %v1778, %v1784
        %v1787 = vadd.f32 %v1779, %v1784
        %v1788 = vld [vmem:[%s6] sm:$0xff]
        %v1789 = vld [vmem:[%s6 + $0x8] sm:$0xff]
        %v1790 = vld [vmem:[%s7] sm:$0xff]
        %v1791 = vld [vmem:[%s7 + $0x8] sm:$0xff]
        %1793 = vset.pattern.permute.xlu0 0
        %1794 = vperm.xlu0 %1793, %v1790
        %v1795 = vpop.permute.xlu0 %1794
        %1798 = vset.pattern.permute.xlu0 0
        %1799 = vperm.xlu0 %1798, %v1791
        %v1800 = vpop.permute.xlu0 %1799
        %1803 = vset.pattern.permute.xlu0 0
        %1804 = vperm.xlu0 %1803, %v1788
        %v1805 = vpop.permute.xlu0 %1804
        %1808 = vset.pattern.permute.xlu0 0
        %1809 = vperm.xlu0 %1808, %v1789
        %v1810 = vpop.permute.xlu0 %1809
        %v1812 = vlaneseq
        %v1813 = vshrl.u32 %v1812, 7
        %v1814 = vsub.s32 0, %v1813
        %v1815 = vrot.slane %v1786, %v1814
        %v1816 = vlaneseq
        %v1817 = vshrl.u32 %v1816, 7
        %v1818 = vsub.s32 0, %v1817
        %v1819 = vrot.slane %v1787, %v1818
        %v1820 = vmul.f32 %v1805, %v1815
        %v1821 = vmul.f32 %v1805, %v1819
        %v1822 = vmul.f32 %v1810, %v1815
        %v1823 = vmul.f32 %v1810, %v1819
        %v1824 = vadd.f32 %v1795, %v1820
        %v1825 = vadd.f32 %v1795, %v1821
        %v1826 = vadd.f32 %v1800, %v1822
        %v1827 = vadd.f32 %v1800, %v1823
        %1828 = vset.pattern.permute.xlu0 1
        %1829 = vperm.xlu0 %1828, %v1788
        %v1830 = vpop.permute.xlu0 %1829
        %1832 = vset.pattern.permute.xlu0 1
        %1833 = vperm.xlu0 %1832, %v1789
        %v1834 = vpop.permute.xlu0 %1833
        %v1836 = vlaneseq
        %v1837 = vshrl.u32 %v1836, 7
        %v1838 = vsub.s32 1, %v1837
        %v1839 = vrot.slane %v1786, %v1838
        %v1840 = vlaneseq
        %v1841 = vshrl.u32 %v1840, 7
        %v1842 = vsub.s32 1, %v1841
        %v1843 = vrot.slane %v1787, %v1842
        %v1844 = vmul.f32 %v1830, %v1839
        %v1845 = vmul.f32 %v1830, %v1843
        %v1846 = vmul.f32 %v1834, %v1839
        %v1847 = vmul.f32 %v1834, %v1843
        %v1848 = vadd.f32 %v1824, %v1844
        %v1849 = vadd.f32 %v1825, %v1845
        %v1850 = vadd.f32 %v1826, %v1846
        %v1851 = vadd.f32 %v1827, %v1847
        %1852 = vset.pattern.permute.xlu0 2
        %1853 = vperm.xlu0 %1852, %v1788
        %v1854 = vpop.permute.xlu0 %1853
        %1856 = vset.pattern.permute.xlu0 2
        %1857 = vperm.xlu0 %1856, %v1789
        %v1858 = vpop.permute.xlu0 %1857
        %v1860 = vlaneseq
        %v1861 = vshrl.u32 %v1860, 7
        %v1862 = vsub.s32 2, %v1861
        %v1863 = vrot.slane %v1786, %v1862
        %v1864 = vlaneseq
        %v1865 = vshrl.u32 %v1864, 7
        %v1866 = vsub.s32 2, %v1865
        %v1867 = vrot.slane %v1787, %v1866
        %v1868 = vmul.f32 %v1854, %v1863
        %v1869 = vmul.f32 %v1854, %v1867
        %v1870 = vmul.f32 %v1858, %v1863
        %v1871 = vmul.f32 %v1858, %v1867
        %v1872 = vadd.f32 %v1848, %v1868
        %v1873 = vadd.f32 %v1849, %v1869
        %v1874 = vadd.f32 %v1850, %v1870
        %v1875 = vadd.f32 %v1851, %v1871
        %1876 = vset.pattern.permute.xlu0 3
        %1877 = vperm.xlu0 %1876, %v1788
        %v1878 = vpop.permute.xlu0 %1877
        %1880 = vset.pattern.permute.xlu0 3
        %1881 = vperm.xlu0 %1880, %v1789
        %v1882 = vpop.permute.xlu0 %1881
        %v1884 = vlaneseq
        %v1885 = vshrl.u32 %v1884, 7
        %v1886 = vsub.s32 3, %v1885
        %v1887 = vrot.slane %v1786, %v1886
        %v1888 = vlaneseq
        %v1889 = vshrl.u32 %v1888, 7
        %v1890 = vsub.s32 3, %v1889
        %v1891 = vrot.slane %v1787, %v1890
        %v1892 = vmul.f32 %v1878, %v1887
        %v1893 = vmul.f32 %v1878, %v1891
        %v1894 = vmul.f32 %v1882, %v1887
        %v1895 = vmul.f32 %v1882, %v1891
        %v1896 = vadd.f32 %v1872, %v1892
        %v1897 = vadd.f32 %v1873, %v1893
        %v1898 = vadd.f32 %v1874, %v1894
        %v1899 = vadd.f32 %v1875, %v1895
        %v1900 = vmul.f32 %v1896, 0.5
        %v1901 = vmul.f32 %v1897, 0.5
        %v1902 = vmul.f32 %v1898, 0.5
        %v1903 = vmul.f32 %v1899, 0.5
        %v1904 = vmul.f32 %v1896, %v1896
        %v1905 = vmul.f32 %v1897, %v1897
        %v1906 = vmul.f32 %v1898, %v1898
        %v1907 = vmul.f32 %v1899, %v1899
        %v1908 = vmul.f32 %v1904, %v1896
        %v1909 = vmul.f32 %v1905, %v1897
        %v1910 = vmul.f32 %v1906, %v1898
        %v1911 = vmul.f32 %v1907, %v1899
        %v1912 = vmul.f32 %v1908, 0.044715
        %v1913 = vmul.f32 %v1909, 0.044715
        %v1914 = vmul.f32 %v1910, 0.044715
        %v1915 = vmul.f32 %v1911, 0.044715
        %v1916 = vadd.f32 %v1896, %v1912
        %v1917 = vadd.f32 %v1897, %v1913
        %v1918 = vadd.f32 %v1898, %v1914
        %v1919 = vadd.f32 %v1899, %v1915
        %v1920 = vmul.f32 %v1916, 0.7978846
        %v1921 = vmul.f32 %v1917, 0.7978846
        %v1922 = vmul.f32 %v1918, 0.7978846
        %v1923 = vmul.f32 %v1919, 0.7978846
        %v1924 = vtanh.pop %v1920
        %v1925 = vtanh.pop %v1921
        %v1926 = vtanh.pop %v1922
        %v1927 = vtanh.pop %v1923
        %v1928 = vadd.f32 %v1924, 1.0
        %v1929 = vadd.f32 %v1925, 1.0
        %v1930 = vadd.f32 %v1926, 1.0
        %v1931 = vadd.f32 %v1927, 1.0
        %v1932 = vmul.f32 %v1900, %v1928
        %v1933 = vmul.f32 %v1901, %v1929
        %v1934 = vmul.f32 %v1902, %v1930
        %v1935 = vmul.f32 %v1903, %v1931
        %v1936 = vld [vmem:[%s8] sm:$0xf]
        %v1937 = vld [vmem:[%s9] sm:$0xf]
        %1939 = vset.pattern.permute.xlu0 0
        %1940 = vperm.xlu0 %1939, %v1937
        %v1941 = vpop.permute.xlu0 %1940
        %1944 = vset.pattern.permute.xlu0 0
        %1945 = vperm.xlu0 %1944, %v1936
        %v1946 = vpop.permute.xlu0 %1945
        %v1948 = vlaneseq
        %v1949 = vshrl.u32 %v1948, 7
        %v1950 = vsub.s32 0, %v1949
        %v1951 = vrot.slane %v1932, %v1950
        %v1952 = vlaneseq
        %v1953 = vshrl.u32 %v1952, 7
        %v1954 = vsub.s32 0, %v1953
        %v1955 = vrot.slane %v1933, %v1954
        %v1956 = vmul.f32 %v1946, %v1951
        %v1957 = vmul.f32 %v1946, %v1955
        %v1958 = vadd.f32 %v1941, %v1956
        %v1959 = vadd.f32 %v1941, %v1957
        %1960 = vset.pattern.permute.xlu0 1
        %1961 = vperm.xlu0 %1960, %v1936
        %v1962 = vpop.permute.xlu0 %1961
        %v1964 = vlaneseq
        %v1965 = vshrl.u32 %v1964, 7
        %v1966 = vsub.s32 1, %v1965
        %v1967 = vrot.slane %v1932, %v1966
        %v1968 = vlaneseq
        %v1969 = vshrl.u32 %v1968, 7
        %v1970 = vsub.s32 1, %v1969
        %v1971 = vrot.slane %v1933, %v1970
        %v1972 = vmul.f32 %v1962, %v1967
        %v1973 = vmul.f32 %v1962, %v1971
        %v1974 = vadd.f32 %v1958, %v1972
        %v1975 = vadd.f32 %v1959, %v1973
        %1976 = vset.pattern.permute.xlu0 2
        %1977 = vperm.xlu0 %1976, %v1936
        %v1978 = vpop.permute.xlu0 %1977
        %v1980 = vlaneseq
        %v1981 = vshrl.u32 %v1980, 7
        %v1982 = vsub.s32 2, %v1981
        %v1983 = vrot.slane %v1932, %v1982
        %v1984 = vlaneseq
        %v1985 = vshrl.u32 %v1984, 7
        %v1986 = vsub.s32 2, %v1985
        %v1987 = vrot.slane %v1933, %v1986
        %v1988 = vmul.f32 %v1978, %v1983
        %v1989 = vmul.f32 %v1978, %v1987
        %v1990 = vadd.f32 %v1974, %v1988
        %v1991 = vadd.f32 %v1975, %v1989
        %1992 = vset.pattern.permute.xlu0 3
        %1993 = vperm.xlu0 %1992, %v1936
        %v1994 = vpop.permute.xlu0 %1993
        %v1996 = vlaneseq
        %v1997 = vshrl.u32 %v1996, 7
        %v1998 = vsub.s32 3, %v1997
        %v1999 = vrot.slane %v1932, %v1998
        %v2000 = vlaneseq
        %v2001 = vshrl.u32 %v2000, 7
        %v2002 = vsub.s32 3, %v2001
        %v2003 = vrot.slane %v1933, %v2002
        %v2004 = vmul.f32 %v1994, %v1999
        %v2005 = vmul.f32 %v1994, %v2003
        %v2006 = vadd.f32 %v1990, %v2004
        %v2007 = vadd.f32 %v1991, %v2005
        %2008 = vset.pattern.permute.xlu0 4
        %2009 = vperm.xlu0 %2008, %v1936
        %v2010 = vpop.permute.xlu0 %2009
        %v2012 = vlaneseq
        %v2013 = vshrl.u32 %v2012, 7
        %v2014 = vsub.s32 4, %v2013
        %v2015 = vrot.slane %v1932, %v2014
        %v2016 = vlaneseq
        %v2017 = vshrl.u32 %v2016, 7
        %v2018 = vsub.s32 4, %v2017
        %v2019 = vrot.slane %v1933, %v2018
        %v2020 = vmul.f32 %v2010, %v2015
        %v2021 = vmul.f32 %v2010, %v2019
        %v2022 = vadd.f32 %v2006, %v2020
        %v2023 = vadd.f32 %v2007, %v2021
        %2024 = vset.pattern.permute.xlu0 5
        %2025 = vperm.xlu0 %2024, %v1936
        %v2026 = vpop.permute.xlu0 %2025
        %v2028 = vlaneseq
        %v2029 = vshrl.u32 %v2028, 7
        %v2030 = vsub.s32 5, %v2029
        %v2031 = vrot.slane %v1932, %v2030
        %v2032 = vlaneseq
        %v2033 = vshrl.u32 %v2032, 7
        %v2034 = vsub.s32 5, %v2033
        %v2035 = vrot.slane %v1933, %v2034
        %v2036 = vmul.f32 %v2026, %v2031
        %v2037 = vmul.f32 %v2026, %v2035
        %v2038 = vadd.f32 %v2022, %v2036
        %v2039 = vadd.f32 %v2023, %v2037
        %2040 = vset.pattern.permute.xlu0 6
        %2041 = vperm.xlu0 %2040, %v1936
        %v2042 = vpop.permute.xlu0 %2041
        %v2044 = vlaneseq
        %v2045 = vshrl.u32 %v2044, 7
        %v2046 = vsub.s32 6, %v2045
        %v2047 = vrot.slane %v1932, %v2046
        %v2048 = vlaneseq
        %v2049 = vshrl.u32 %v2048, 7
        %v2050 = vsub.s32 6, %v2049
        %v2051 = vrot.slane %v1933, %v2050
        %v2052 = vmul.f32 %v2042, %v2047
        %v2053 = vmul.f32 %v2042, %v2051
        %v2054 = vadd.f32 %v2038, %v2052
        %v2055 = vadd.f32 %v2039, %v2053
        %2056 = vset.pattern.permute.xlu0 7
        %2057 = vperm.xlu0 %2056, %v1936
        %v2058 = vpop.permute.xlu0 %2057
        %v2060 = vlaneseq
        %v2061 = vshrl.u32 %v2060, 7
        %v2062 = vsub.s32 7, %v2061
        %v2063 = vrot.slane %v1932, %v2062
        %v2064 = vlaneseq
        %v2065 = vshrl.u32 %v2064, 7
        %v2066 = vsub.s32 7, %v2065
        %v2067 = vrot.slane %v1933, %v2066
        %v2068 = vmul.f32 %v2058, %v2063
        %v2069 = vmul.f32 %v2058, %v2067
        %v2070 = vadd.f32 %v2054, %v2068
        %v2071 = vadd.f32 %v2055, %v2069
        %2072 = vset.pattern.permute.xlu0 8
        %2073 = vperm.xlu0 %2072, %v1936
        %v2074 = vpop.permute.xlu0 %2073
        %v2076 = vlaneseq
        %v2077 = vshrl.u32 %v2076, 7
        %v2078 = vsub.s32 0, %v2077
        %v2079 = vrot.slane %v1934, %v2078
        %v2080 = vlaneseq
        %v2081 = vshrl.u32 %v2080, 7
        %v2082 = vsub.s32 0, %v2081
        %v2083 = vrot.slane %v1935, %v2082
        %v2084 = vmul.f32 %v2074, %v2079
        %v2085 = vmul.f32 %v2074, %v2083
        %v2086 = vadd.f32 %v2070, %v2084
        %v2087 = vadd.f32 %v2071, %v2085
        %2088 = vset.pattern.permute.xlu0 9
        %2089 = vperm.xlu0 %2088, %v1936
        %v2090 = vpop.permute.xlu0 %2089
        %v2092 = vlaneseq
        %v2093 = vshrl.u32 %v2092, 7
        %v2094 = vsub.s32 1, %v2093
        %v2095 = vrot.slane %v1934, %v2094
        %v2096 = vlaneseq
        %v2097 = vshrl.u32 %v2096, 7
        %v2098 = vsub.s32 1, %v2097
        %v2099 = vrot.slane %v1935, %v2098
        %v2100 = vmul.f32 %v2090, %v2095
        %v2101 = vmul.f32 %v2090, %v2099
        %v2102 = vadd.f32 %v2086, %v2100
        %v2103 = vadd.f32 %v2087, %v2101
        %2104 = vset.pattern.permute.xlu0 10
        %2105 = vperm.xlu0 %2104, %v1936
        %v2106 = vpop.permute.xlu0 %2105
        %v2108 = vlaneseq
        %v2109 = vshrl.u32 %v2108, 7
        %v2110 = vsub.s32 2, %v2109
        %v2111 = vrot.slane %v1934, %v2110
        %v2112 = vlaneseq
        %v2113 = vshrl.u32 %v2112, 7
        %v2114 = vsub.s32 2, %v2113
        %v2115 = vrot.slane %v1935, %v2114
        %v2116 = vmul.f32 %v2106, %v2111
        %v2117 = vmul.f32 %v2106, %v2115
        %v2118 = vadd.f32 %v2102, %v2116
        %v2119 = vadd.f32 %v2103, %v2117
        %2120 = vset.pattern.permute.xlu0 11
        %2121 = vperm.xlu0 %2120, %v1936
        %v2122 = vpop.permute.xlu0 %2121
        %v2124 = vlaneseq
        %v2125 = vshrl.u32 %v2124, 7
        %v2126 = vsub.s32 3, %v2125
        %v2127 = vrot.slane %v1934, %v2126
        %v2128 = vlaneseq
        %v2129 = vshrl.u32 %v2128, 7
        %v2130 = vsub.s32 3, %v2129
        %v2131 = vrot.slane %v1935, %v2130
        %v2132 = vmul.f32 %v2122, %v2127
        %v2133 = vmul.f32 %v2122, %v2131
        %v2134 = vadd.f32 %v2118, %v2132
        %v2135 = vadd.f32 %v2119, %v2133
        %2136 = vset.pattern.permute.xlu0 12
        %2137 = vperm.xlu0 %2136, %v1936
        %v2138 = vpop.permute.xlu0 %2137
        %v2140 = vlaneseq
        %v2141 = vshrl.u32 %v2140, 7
        %v2142 = vsub.s32 4, %v2141
        %v2143 = vrot.slane %v1934, %v2142
        %v2144 = vlaneseq
        %v2145 = vshrl.u32 %v2144, 7
        %v2146 = vsub.s32 4, %v2145
        %v2147 = vrot.slane %v1935, %v2146
        %v2148 = vmul.f32 %v2138, %v2143
        %v2149 = vmul.f32 %v2138, %v2147
        %v2150 = vadd.f32 %v2134, %v2148
        %v2151 = vadd.f32 %v2135, %v2149
        %2152 = vset.pattern.permute.xlu0 13
        %2153 = vperm.xlu0 %2152, %v1936
        %v2154 = vpop.permute.xlu0 %2153
        %v2156 = vlaneseq
        %v2157 = vshrl.u32 %v2156, 7
        %v2158 = vsub.s32 5, %v2157
        %v2159 = vrot.slane %v1934, %v2158
        %v2160 = vlaneseq
        %v2161 = vshrl.u32 %v2160, 7
        %v2162 = vsub.s32 5, %v2161
        %v2163 = vrot.slane %v1935, %v2162
        %v2164 = vmul.f32 %v2154, %v2159
        %v2165 = vmul.f32 %v2154, %v2163
        %v2166 = vadd.f32 %v2150, %v2164
        %v2167 = vadd.f32 %v2151, %v2165
        %2168 = vset.pattern.permute.xlu0 14
        %2169 = vperm.xlu0 %2168, %v1936
        %v2170 = vpop.permute.xlu0 %2169
        %v2172 = vlaneseq
        %v2173 = vshrl.u32 %v2172, 7
        %v2174 = vsub.s32 6, %v2173
        %v2175 = vrot.slane %v1934, %v2174
        %v2176 = vlaneseq
        %v2177 = vshrl.u32 %v2176, 7
        %v2178 = vsub.s32 6, %v2177
        %v2179 = vrot.slane %v1935, %v2178
        %v2180 = vmul.f32 %v2170, %v2175
        %v2181 = vmul.f32 %v2170, %v2179
        %v2182 = vadd.f32 %v2166, %v2180
        %v2183 = vadd.f32 %v2167, %v2181
        %2184 = vset.pattern.permute.xlu0 15
        %2185 = vperm.xlu0 %2184, %v1936
        %v2186 = vpop.permute.xlu0 %2185
        %v2188 = vlaneseq
        %v2189 = vshrl.u32 %v2188, 7
        %v2190 = vsub.s32 7, %v2189
        %v2191 = vrot.slane %v1934, %v2190
        %v2192 = vlaneseq
        %v2193 = vshrl.u32 %v2192, 7
        %v2194 = vsub.s32 7, %v2193
        %v2195 = vrot.slane %v1935, %v2194
        %v2196 = vmul.f32 %v2186, %v2191
        %v2197 = vmul.f32 %v2186, %v2195
        %v2198 = vadd.f32 %v2182, %v2196
        %v2199 = vadd.f32 %v2183, %v2197
        %v2200 = vld [vmem:[%s10] sm:$0xf]
        %2202 = vset.pattern.permute.xlu0 0
        %2203 = vperm.xlu0 %2202, %v2200
        %v2204 = vpop.permute.xlu0 %2203
        %v2206 = vmul.f32 %v2198, %v2204
        %v2207 = vmul.f32 %v2199, %v2204
        %v2210 = vcombine.low %v2206, %v2207
        %v2212 = vadd.f32 %v385, %v2210
        %2213 = vst [vmem:[%s379] sm:$0xff] %v2212
        %s2214 = sand.u32 %s269, 1
        %s2215 = scalar_lea.sflag [#allocation3], %s2214
        %s2216 = sand.u32 %s269, 1
        %s2217 = smul.addr %s2216, 8
        %s2218 = scalar_lea.vmem [#allocation2], %s2217
        // Predicated region
        $region65: #{tpu_custom_call.1} parent=63 // pred_check
          %p2219 = pneg %p279
        $region66: #{tpu_custom_call.1} parent=63 // pred_check_branch
          %2221 = sbr.rel (%p2219) target = $region68
        $region67: #{tpu_custom_call.1} parent=63 // pred_region
          %s2223 = ssub.s32 128, 128
          %2224 = vsyncadd %s2215, %s2223
          %s2225 = smul.addr %s25, 2
          %s2226 = smul.addr %s2225, 64
          %s2227 = scalar_lea.hbm %s11, %s2226
          %s2229 = sshll.u32 %s2218, 4
          %s2230 = int_to_ptr.vmem [resolvable:$true] %s2229
          %2232 = dma.vmem_to_hbm [thread:$0]  %s2230, 128, %s2227, %s2215
        $region68: #{tpu_custom_call.1} parent=63 // pred_fallthru
          _
      $region64: #{tpu_custom_call.1} parent=5 // pred_fallthru
        _
      %p2233 = scmp.le.s32.totalorder 2, %s20
      // Predicated region
      $region69: #{tpu_custom_call.1} parent=5 // pred_check
        %p2234 = pneg %p2233
      $region70: #{tpu_custom_call.1} parent=5 // pred_check_branch
        %2236 = sbr.rel (%p2234) target = $region72
      $region71: #{tpu_custom_call.1} parent=5 // pred_region
        %s2237 = ssub.s32 %s20, 2
        // Predicated region
        $region73: #{tpu_custom_call.1} parent=71 // pred_check
          %p2238 = pneg %p285
        $region74: #{tpu_custom_call.1} parent=71 // pred_check_branch
          %2240 = sbr.rel (%p2238) target = $region76
        $region75: #{tpu_custom_call.1} parent=71 // pred_region
          %s2241 = sand.u32 %s270, 1
          %s2242 = scalar_lea.sflag [#allocation3], %s2241
          %s2243 = sand.u32 %s270, 1
          %s2244 = smul.addr %s2243, 8
          %s2245 = scalar_lea.vmem [#allocation2], %s2244
          %2246 = dma.done %s2242, 128
        $region76: #{tpu_custom_call.1} parent=71 // pred_fallthru
          _
      $region72: #{tpu_custom_call.1} parent=5 // pred_fallthru
        _
    $region6: #{tpu_custom_call.1} parent=1 // loop_footer
      %s24 = sadd.s32 1, %s20
    $region7: #{tpu_custom_call.1} parent=1 // loop_footer_branch
      %19 = sbr.rel target = $region3
    $region8: #{tpu_custom_call.1} parent=1 // loop_exit
      _
    %2247 = vsyncpa [#allocation3], 1
    %s2248 = scalar_lea.sflag [#allocation3], 1
    %2249 = vsyncpa %s2248, 1

</llo_original>
